<compile_context>
chip_gen: v7x
topology: tpu7x:2x2x1
jax: 0.10.0
libtpu: 0.0.40
codegen_flags: <defaults>
</compile_context>

<pallas_src>
import functools

import jax
import jax.numpy as jnp
import numpy as np
from jax import lax
from jax.experimental import pallas as pl
from jax.experimental.pallas import tpu as pltpu


# ----------------------------------------------------------------------------
# Fused Pallas kernel: whole LeNet forward for BB batch elements per grid step.
# Activation layout inside the kernel: 2-D [row = h, lane = w*C + c].
# ----------------------------------------------------------------------------
def _lenet_kernel(BB, x_ref, w1_ref, b1_ref, r1_ref, w2_ref, b2_ref,
                  wf1_ref, bf1_ref, wf2_ref, bf2_ref, wf3_ref, bf3_ref,
                  o_ref, feat_ref):
    f32 = jnp.float32
    bf16 = jnp.bfloat16

    # Hoisted once per grid step (reused for every image in the block).
    b1b = jnp.broadcast_to(b1_ref[...], (28, 168))        # conv1 bias, [28, 168]
    b2b = jnp.broadcast_to(b2_ref[...], (10, 160))        # conv2 bias, [10, 160]
    r1m = r1_ref[...]                                      # pool1 even-row selector

    # ---- per-image conv/pool stages (unrolled over the batch block) ----
    for b in range(BB):
        x2d = x_ref[b]                                     # [32, 96]  (h, w*3+c), f32

        # conv1 + bias + ReLU: 5 banded matmuls (bf16 MXU, f32 acc)
        acc = b1b
        for di in range(5):
            acc = acc + jnp.dot(x2d[di:di + 28, :].astype(bf16), w1_ref[di],
                                preferred_element_type=f32)
        h1 = jnp.maximum(acc, 0.0)                         # [28, 168]  (h, w*6+oc)

        # 2x2 max-pool #1: shifted max + 0/1 even-row selection matmul
        rows = jnp.maximum(h1[0:27, :], h1[1:28, :])
        rowp = jnp.dot(r1m, rows, preferred_element_type=f32)      # [14, 168]
        colc = jnp.maximum(rowp[:, 0:162], rowp[:, 6:168])         # [14, 162]

        # conv2 + bias + ReLU (pool-column selection folded into the packed weights)
        acc2 = b2b
        for di in range(5):
            acc2 = acc2 + jnp.dot(colc[di:di + 10, :].astype(bf16), w2_ref[di],
                                  preferred_element_type=f32)
        h2 = jnp.maximum(acc2, 0.0)                        # [10, 160]  (h, w*16+oc)

        # 2x2 max-pool #2 (row/col selection folded into fc1 weight slabs)
        rows2 = jnp.maximum(h2[0:9, :], h2[1:10, :])       # [9, 160]
        colc2 = jnp.maximum(rows2[:, 0:144], rows2[:, 16:160])     # [9, 144]

        # Stage the 5 pooled rows of this image into the VMEM scratch so the
        # FC layers below can run batched over the whole block.
        for h in range(5):
            feat_ref[h, b:b + 1, :] = colc2[2 * h:2 * h + 1, :]

    # ---- fc1 + ReLU: batched over the block, contracted per pooled row ----
    z = jnp.broadcast_to(bf1_ref[...], (BB, 120))          # [BB, 120]
    for h in range(5):
        z = z + jnp.dot(feat_ref[h].astype(bf16), wf1_ref[h],
                        preferred_element_type=f32)
    z = jnp.maximum(z, 0.0)

    # ---- fc2 + ReLU (batched) ----
    z = jnp.dot(z.astype(bf16), wf2_ref[...], preferred_element_type=f32) + bf2_ref[...]
    z = jnp.maximum(z, 0.0)                                # [BB, 84]

    # ---- fc3 (columns padded to 128 for a lane-dense store) ----
    z = jnp.dot(z.astype(bf16), wf3_ref[...], preferred_element_type=f32) + bf3_ref[...]
    o_ref[...] = z                                         # [BB, 128]


# ----------------------------------------------------------------------------
# One-time host-side weight packing (PyTorch layout -> kernel layout).
# ----------------------------------------------------------------------------
def prepare_lenet_params(params):
    w1 = np.asarray(params["conv1_w"], np.float32)         # [6, 3, 5, 5]
    b1 = np.asarray(params["conv1_b"], np.float32)
    w2 = np.asarray(params["conv2_w"], np.float32)         # [16, 6, 5, 5]
    b2 = np.asarray(params["conv2_b"], np.float32)
    f1 = np.asarray(params["fc1_w"], np.float32)           # [120, 400]
    f2 = np.asarray(params["fc2_w"], np.float32)           # [84, 120]
    f3 = np.asarray(params["fc3_w"], np.float32)           # [10, 84]

    # conv1: banded matrices, one per kernel-row offset di.
    # W1[di, (j+dj)*3 + c, j*6 + oc] = w1[oc, c, di, dj]
    W1 = np.zeros((5, 32 * 3, 28 * 6), np.float32)
    for di in range(5):
        for dj in range(5):
            blk = w1[:, :, di, dj].T                       # [3, 6]
            for j in range(28):
                W1[di, (j + dj) * 3:(j + dj) * 3 + 3, j * 6:j * 6 + 6] += blk

    # conv2: banded + pool1 even-column selection folded in.
    # W2[di, 12*(j+dj) + c, j*16 + oc] = w2[oc, c, di, dj]
    W2 = np.zeros((5, 162, 160), np.float32)
    for di in range(5):
        for dj in range(5):
            blk = w2[:, :, di, dj].T                       # [6, 16]
            for j in range(10):
                W2[di, 12 * (j + dj):12 * (j + dj) + 6, j * 16:j * 16 + 16] += blk

    # pool1 even-row selection (0/1).
    R1 = np.zeros((14, 27), np.float32)
    R1[np.arange(14), 2 * np.arange(14)] = 1.0

    # fc1: per-pooled-row slabs, with pool2 column selection and the PyTorch
    # NCHW flatten order (index = c*25 + h*5 + w) folded in.
    f1r = f1.reshape(120, 16, 5, 5)                        # [m, c, h, w]
    WF1 = np.zeros((5, 144, 120), np.float32)
    for h in range(5):
        for w in range(5):
            WF1[h, 32 * w:32 * w + 16, :] = f1r[:, :, h, w].T      # [16, 120]

    # fc3: pad output columns 10 -> 128 for a lane-dense store.
    WF3 = np.zeros((84, 128), np.float32)
    WF3[:, :10] = f3.T
    BF3 = np.zeros((1, 128), np.float32)
    BF3[0, :10] = np.asarray(params["fc3_b"], np.float32)

    bf16 = jnp.bfloat16
    return {
        "W1": jnp.asarray(W1, bf16),
        "b1": jnp.asarray(np.tile(b1, 28)[None, :], jnp.float32),   # [1, 168]
        "R1": jnp.asarray(R1, jnp.float32),                         # [14, 27]
        "W2": jnp.asarray(W2, bf16),
        "b2": jnp.asarray(np.tile(b2, 10)[None, :], jnp.float32),   # [1, 160]
        "WF1": jnp.asarray(WF1, bf16),
        "bf1": jnp.asarray(np.asarray(params["fc1_b"], np.float32)[None, :]),  # [1, 120]
        "WF2": jnp.asarray(f2.T, bf16),                             # [120, 84]
        "bf2": jnp.asarray(np.asarray(params["fc2_b"], np.float32)[None, :]),  # [1, 84]
        "WF3": jnp.asarray(WF3, bf16),                              # [84, 128]
        "BF3": jnp.asarray(BF3, jnp.float32),                       # [1, 128]
    }


# ----------------------------------------------------------------------------
# Forward wrapper: one fused pallas_call, grid over batch blocks ("parallel").
# ----------------------------------------------------------------------------
@jax.jit
def lenet_forward(x, prep):
    # x: [B, 3, 32, 32] NCHW (like the PyTorch module)
    B = x.shape[0]
    BB = min(8, B)                                         # images per grid step
    Bp = ((B + BB - 1) // BB) * BB                         # padded batch
    x2 = jnp.transpose(x, (0, 2, 3, 1)).reshape(B, 32, 32 * 3)     # [B, 32, 96]
    if Bp != B:
        x2 = jnp.concatenate(
            [x2, jnp.zeros((Bp - B, 32, 96), x2.dtype)], axis=0)

    kernel = functools.partial(_lenet_kernel, BB)
    out = pl.pallas_call(
        kernel,
        out_shape=jax.ShapeDtypeStruct((Bp, 128), jnp.float32),
        grid=(Bp // BB,),
        in_specs=[
            pl.BlockSpec((BB, 32, 96), lambda b: (b, 0, 0)),     # x (batch block)
            pl.BlockSpec((5, 96, 168), lambda b: (0, 0, 0)),     # conv1 banded weights
            pl.BlockSpec((1, 168), lambda b: (0, 0)),            # conv1 bias row
            pl.BlockSpec((14, 27), lambda b: (0, 0)),            # pool1 row selection
            pl.BlockSpec((5, 162, 160), lambda b: (0, 0, 0)),    # conv2 banded weights
            pl.BlockSpec((1, 160), lambda b: (0, 0)),            # conv2 bias row
            pl.BlockSpec((5, 144, 120), lambda b: (0, 0, 0)),    # fc1 packed slabs
            pl.BlockSpec((1, 120), lambda b: (0, 0)),            # fc1 bias
            pl.BlockSpec((120, 84), lambda b: (0, 0)),           # fc2 weights
            pl.BlockSpec((1, 84), lambda b: (0, 0)),             # fc2 bias
            pl.BlockSpec((84, 128), lambda b: (0, 0)),           # fc3 weights (padded)
            pl.BlockSpec((1, 128), lambda b: (0, 0)),            # fc3 bias (padded)
        ],
        out_specs=pl.BlockSpec((BB, 128), lambda b: (b, 0)),
        scratch_shapes=[pltpu.VMEM((5, BB, 144), jnp.float32)],  # staged fc1 features
        compiler_params=pltpu.CompilerParams(
            dimension_semantics=("parallel",)),                  # v7x: batch split over 2 TCs
    )(x2, prep["W1"], prep["b1"], prep["R1"], prep["W2"], prep["b2"],
      prep["WF1"], prep["bf1"], prep["WF2"], prep["bf2"], prep["WF3"], prep["BF3"])

    return out[:B, :10]                                          # [B, 10]


# ----------------------------------------------------------------------------
# Parameters (PyTorch layout) + pure-JAX reference for a sanity check.
# ----------------------------------------------------------------------------
def init_lenet_params(key):
    def u(k, shape, fan_in):
        bound = 1.0 / jnp.sqrt(float(fan_in))
        return jax.random.uniform(k, shape, jnp.float32, -bound, bound)

    ks = jax.random.split(key, 10)
    return {
        "conv1_w": u(ks[0], (6, 3, 5, 5), 3 * 5 * 5),
        "conv1_b": u(ks[1], (6,), 3 * 5 * 5),
        "conv2_w": u(ks[2], (16, 6, 5, 5), 6 * 5 * 5),
        "conv2_b": u(ks[3], (16,), 6 * 5 * 5),
        "fc1_w": u(ks[4], (120, 16 * 5 * 5), 16 * 5 * 5),
        "fc1_b": u(ks[5], (120,), 16 * 5 * 5),
        "fc2_w": u(ks[6], (84, 120), 120),
        "fc2_b": u(ks[7], (84,), 120),
        "fc3_w": u(ks[8], (10, 84), 84),
        "fc3_b": u(ks[9], (10,), 84),
    }


def lenet_reference(x, p):
    dn = ("NCHW", "OIHW", "NCHW")
    y = lax.conv_general_dilated(x, p["conv1_w"], (1, 1), "VALID", dimension_numbers=dn)
    y = jnp.maximum(y + p["conv1_b"][None, :, None, None], 0.0)
    y = lax.reduce_window(y, -jnp.inf, lax.max, (1, 1, 2, 2), (1, 1, 2, 2), "VALID")
    y = lax.conv_general_dilated(y, p["conv2_w"], (1, 1), "VALID", dimension_numbers=dn)
    y = jnp.maximum(y + p["conv2_b"][None, :, None, None], 0.0)
    y = lax.reduce_window(y, -jnp.inf, lax.max, (1, 1, 2, 2), (1, 1, 2, 2), "VALID")
    y = y.reshape(y.shape[0], -1)                    # same (C, H, W) flatten as torch .view
    y = jnp.maximum(y @ p["fc1_w"].T + p["fc1_b"], 0.0)
    y = jnp.maximum(y @ p["fc2_w"].T + p["fc2_b"], 0.0)
    return y @ p["fc3_w"].T + p["fc3_b"]


if __name__ == "__main__":
    key = jax.random.PRNGKey(0)
    k_x, k_p = jax.random.split(key)
    # LeNet's fc1 (16*5*5) implies 32x32 spatial input; batch kept small.
    x = jax.random.normal(k_x, (2, 3, 32, 32), dtype=jnp.float32)
    params = init_lenet_params(k_p)
    prep = prepare_lenet_params(params)

    logits = lenet_forward(x, prep)
    jax.block_until_ready(logits)
    assert logits.shape == (2, 10) and logits.dtype == jnp.float32

    ref = lenet_reference(x, params)
    err = float(jnp.max(jnp.abs(logits - ref)))
    assert err < 5e-2, f"max abs error vs reference: {err}"

    print("KERNEL_OK")
</pallas_src>

<mosaic_0001>
module attributes {stable_mosaic.version = 11 : i64} {
  func.func @_lenet_kernel(%arg0: i32, %arg1: memref<2x32x96xf32, #tpu.memory_space<vmem>>, %arg2: memref<5x96x168xbf16, #tpu.memory_space<vmem>>, %arg3: memref<1x168xf32, #tpu.memory_space<vmem>>, %arg4: memref<14x27xf32, #tpu.memory_space<vmem>>, %arg5: memref<5x162x160xbf16, #tpu.memory_space<vmem>>, %arg6: memref<1x160xf32, #tpu.memory_space<vmem>>, %arg7: memref<5x144x120xbf16, #tpu.memory_space<vmem>>, %arg8: memref<1x120xf32, #tpu.memory_space<vmem>>, %arg9: memref<120x84xbf16, #tpu.memory_space<vmem>>, %arg10: memref<1x84xf32, #tpu.memory_space<vmem>>, %arg11: memref<84x128xbf16, #tpu.memory_space<vmem>>, %arg12: memref<1x128xf32, #tpu.memory_space<vmem>>, %arg13: memref<2x128xf32, #tpu.memory_space<vmem>>, %arg14: memref<5x2x144xf32, #tpu.memory_space<vmem>>) attributes {dimension_semantics = [#tpu.dimension_semantics<parallel>], iteration_bounds = array<i64: 1>, scalar_prefetch = 0 : i64, scratch_operands = 1 : i64, tpu.core_type = #tpu.core_type<tc>, window_params = [{transform_indices = @transform_0, window_bounds = array<i64: 2, 32, 96>}, {pipeline_mode = #tpu.pipeline_mode<synchronous>, transform_indices = @transform_1, window_bounds = array<i64: 5, 96, 168>}, {pipeline_mode = #tpu.pipeline_mode<synchronous>, transform_indices = @transform_2, window_bounds = array<i64: 1, 168>}, {pipeline_mode = #tpu.pipeline_mode<synchronous>, transform_indices = @transform_3, window_bounds = array<i64: 14, 27>}, {pipeline_mode = #tpu.pipeline_mode<synchronous>, transform_indices = @transform_4, window_bounds = array<i64: 5, 162, 160>}, {pipeline_mode = #tpu.pipeline_mode<synchronous>, transform_indices = @transform_5, window_bounds = array<i64: 1, 160>}, {pipeline_mode = #tpu.pipeline_mode<synchronous>, transform_indices = @transform_6, window_bounds = array<i64: 5, 144, 120>}, {pipeline_mode = #tpu.pipeline_mode<synchronous>, transform_indices = @transform_7, window_bounds = array<i64: 1, 120>}, {pipeline_mode = #tpu.pipeline_mode<synchronous>, transform_indices = @transform_8, window_bounds = array<i64: 120, 84>}, {pipeline_mode = #tpu.pipeline_mode<synchronous>, transform_indices = @transform_9, window_bounds = array<i64: 1, 84>}, {pipeline_mode = #tpu.pipeline_mode<synchronous>, transform_indices = @transform_10, window_bounds = array<i64: 84, 128>}, {pipeline_mode = #tpu.pipeline_mode<synchronous>, transform_indices = @transform_11, window_bounds = array<i64: 1, 128>}, {transform_indices = @transform_12, window_bounds = array<i64: 2, 128>}]} {
    %c0 = arith.constant 0 : index
    %c0_0 = arith.constant 0 : index
    %0 = vector.load %arg3[%c0, %c0_0] : memref<1x168xf32, #tpu.memory_space<vmem>>, vector<1x168xf32>
    %1 = vector.shape_cast %0 : vector<1x168xf32> to vector<1x168xf32>
    %2 = vector.broadcast %1 : vector<1x168xf32> to vector<28x168xf32>
    %c0_1 = arith.constant 0 : index
    %c0_2 = arith.constant 0 : index
    %3 = vector.load %arg6[%c0_1, %c0_2] : memref<1x160xf32, #tpu.memory_space<vmem>>, vector<1x160xf32>
    %4 = vector.shape_cast %3 : vector<1x160xf32> to vector<1x160xf32>
    %5 = vector.broadcast %4 : vector<1x160xf32> to vector<10x160xf32>
    %c0_3 = arith.constant 0 : index
    %c0_4 = arith.constant 0 : index
    %6 = vector.load %arg4[%c0_3, %c0_4] : memref<14x27xf32, #tpu.memory_space<vmem>>, vector<14x27xf32>
    %c0_5 = arith.constant 0 : index
    %c0_6 = arith.constant 0 : index
    %c0_7 = arith.constant 0 : index
    %7 = vector.load %arg1[%c0_5, %c0_6, %c0_7] : memref<2x32x96xf32, #tpu.memory_space<vmem>>, vector<1x32x96xf32>
    %8 = vector.shape_cast %7 : vector<1x32x96xf32> to vector<32x96xf32>
    %9 = vector.extract_strided_slice %8 {offsets = [0, 0], sizes = [28, 96], strides = [1, 1]} : vector<32x96xf32> to vector<28x96xf32>
    %10 = arith.truncf %9 : vector<28x96xf32> to vector<28x96xbf16>
    %c0_8 = arith.constant 0 : index
    %c0_9 = arith.constant 0 : index
    %c0_10 = arith.constant 0 : index
    %11 = vector.load %arg2[%c0_8, %c0_9, %c0_10] : memref<5x96x168xbf16, #tpu.memory_space<vmem>>, vector<1x96x168xbf16>
    %12 = vector.shape_cast %11 : vector<1x96x168xbf16> to vector<96x168xbf16>
    %cst = arith.constant dense<0.000000e+00> : vector<28x168xf32>
    %13 = tpu.matmul %10, %12, %cst {dimension_numbers = #tpu.dot_dimension_numbers<[1], [0], [0], [1], [0, 0, 1, 1], [], []>} : vector<28x96xbf16>, vector<96x168xbf16>, vector<28x168xf32> -> vector<28x168xf32>
    %14 = arith.addf %2, %13 : vector<28x168xf32>
    %15 = vector.extract_strided_slice %8 {offsets = [1, 0], sizes = [28, 96], strides = [1, 1]} : vector<32x96xf32> to vector<28x96xf32>
    %16 = arith.truncf %15 : vector<28x96xf32> to vector<28x96xbf16>
    %c1 = arith.constant 1 : index
    %c0_11 = arith.constant 0 : index
    %c0_12 = arith.constant 0 : index
    %17 = vector.load %arg2[%c1, %c0_11, %c0_12] : memref<5x96x168xbf16, #tpu.memory_space<vmem>>, vector<1x96x168xbf16>
    %18 = vector.shape_cast %17 : vector<1x96x168xbf16> to vector<96x168xbf16>
    %cst_13 = arith.constant dense<0.000000e+00> : vector<28x168xf32>
    %19 = tpu.matmul %16, %18, %cst_13 {dimension_numbers = #tpu.dot_dimension_numbers<[1], [0], [0], [1], [0, 0, 1, 1], [], []>} : vector<28x96xbf16>, vector<96x168xbf16>, vector<28x168xf32> -> vector<28x168xf32>
    %20 = arith.addf %14, %19 : vector<28x168xf32>
    %21 = vector.extract_strided_slice %8 {offsets = [2, 0], sizes = [28, 96], strides = [1, 1]} : vector<32x96xf32> to vector<28x96xf32>
    %22 = arith.truncf %21 : vector<28x96xf32> to vector<28x96xbf16>
    %c2 = arith.constant 2 : index
    %c0_14 = arith.constant 0 : index
    %c0_15 = arith.constant 0 : index
    %23 = vector.load %arg2[%c2, %c0_14, %c0_15] : memref<5x96x168xbf16, #tpu.memory_space<vmem>>, vector<1x96x168xbf16>
    %24 = vector.shape_cast %23 : vector<1x96x168xbf16> to vector<96x168xbf16>
    %cst_16 = arith.constant dense<0.000000e+00> : vector<28x168xf32>
    %25 = tpu.matmul %22, %24, %cst_16 {dimension_numbers = #tpu.dot_dimension_numbers<[1], [0], [0], [1], [0, 0, 1, 1], [], []>} : vector<28x96xbf16>, vector<96x168xbf16>, vector<28x168xf32> -> vector<28x168xf32>
    %26 = arith.addf %20, %25 : vector<28x168xf32>
    %27 = vector.extract_strided_slice %8 {offsets = [3, 0], sizes = [28, 96], strides = [1, 1]} : vector<32x96xf32> to vector<28x96xf32>
    %28 = arith.truncf %27 : vector<28x96xf32> to vector<28x96xbf16>
    %c3 = arith.constant 3 : index
    %c0_17 = arith.constant 0 : index
    %c0_18 = arith.constant 0 : index
    %29 = vector.load %arg2[%c3, %c0_17, %c0_18] : memref<5x96x168xbf16, #tpu.memory_space<vmem>>, vector<1x96x168xbf16>
    %30 = vector.shape_cast %29 : vector<1x96x168xbf16> to vector<96x168xbf16>
    %cst_19 = arith.constant dense<0.000000e+00> : vector<28x168xf32>
    %31 = tpu.matmul %28, %30, %cst_19 {dimension_numbers = #tpu.dot_dimension_numbers<[1], [0], [0], [1], [0, 0, 1, 1], [], []>} : vector<28x96xbf16>, vector<96x168xbf16>, vector<28x168xf32> -> vector<28x168xf32>
    %32 = arith.addf %26, %31 : vector<28x168xf32>
    %33 = vector.extract_strided_slice %8 {offsets = [4, 0], sizes = [28, 96], strides = [1, 1]} : vector<32x96xf32> to vector<28x96xf32>
    %34 = arith.truncf %33 : vector<28x96xf32> to vector<28x96xbf16>
    %c4 = arith.constant 4 : index
    %c0_20 = arith.constant 0 : index
    %c0_21 = arith.constant 0 : index
    %35 = vector.load %arg2[%c4, %c0_20, %c0_21] : memref<5x96x168xbf16, #tpu.memory_space<vmem>>, vector<1x96x168xbf16>
    %36 = vector.shape_cast %35 : vector<1x96x168xbf16> to vector<96x168xbf16>
    %cst_22 = arith.constant dense<0.000000e+00> : vector<28x168xf32>
    %37 = tpu.matmul %34, %36, %cst_22 {dimension_numbers = #tpu.dot_dimension_numbers<[1], [0], [0], [1], [0, 0, 1, 1], [], []>} : vector<28x96xbf16>, vector<96x168xbf16>, vector<28x168xf32> -> vector<28x168xf32>
    %38 = arith.addf %32, %37 : vector<28x168xf32>
    %cst_23 = arith.constant 0.000000e+00 : f32
    %39 = vector.broadcast %cst_23 : f32 to vector<28x168xf32>
    %40 = arith.maximumf %38, %39 : vector<28x168xf32>
    %41 = vector.extract_strided_slice %40 {offsets = [0, 0], sizes = [27, 168], strides = [1, 1]} : vector<28x168xf32> to vector<27x168xf32>
    %42 = vector.extract_strided_slice %40 {offsets = [1, 0], sizes = [27, 168], strides = [1, 1]} : vector<28x168xf32> to vector<27x168xf32>
    %43 = arith.maximumf %41, %42 : vector<27x168xf32>
    %cst_24 = arith.constant dense<0.000000e+00> : vector<14x168xf32>
    %44 = tpu.matmul %6, %43, %cst_24 {dimension_numbers = #tpu.dot_dimension_numbers<[1], [0], [0], [1], [0, 0, 1, 1], [], []>} : vector<14x27xf32>, vector<27x168xf32>, vector<14x168xf32> -> vector<14x168xf32>
    %45 = vector.extract_strided_slice %44 {offsets = [0, 0], sizes = [14, 162], strides = [1, 1]} : vector<14x168xf32> to vector<14x162xf32>
    %46 = vector.extract_strided_slice %44 {offsets = [0, 6], sizes = [14, 162], strides = [1, 1]} : vector<14x168xf32> to vector<14x162xf32>
    %47 = arith.maximumf %45, %46 : vector<14x162xf32>
    %48 = vector.extract_strided_slice %47 {offsets = [0, 0], sizes = [10, 162], strides = [1, 1]} : vector<14x162xf32> to vector<10x162xf32>
    %49 = arith.truncf %48 : vector<10x162xf32> to vector<10x162xbf16>
    %c0_25 = arith.constant 0 : index
    %c0_26 = arith.constant 0 : index
    %c0_27 = arith.constant 0 : index
    %50 = vector.load %arg5[%c0_25, %c0_26, %c0_27] : memref<5x162x160xbf16, #tpu.memory_space<vmem>>, vector<1x162x160xbf16>
    %51 = vector.shape_cast %50 : vector<1x162x160xbf16> to vector<162x160xbf16>
    %cst_28 = arith.constant dense<0.000000e+00> : vector<10x160xf32>
    %52 = tpu.matmul %49, %51, %cst_28 {dimension_numbers = #tpu.dot_dimension_numbers<[1], [0], [0], [1], [0, 0, 1, 1], [], []>} : vector<10x162xbf16>, vector<162x160xbf16>, vector<10x160xf32> -> vector<10x160xf32>
    %53 = arith.addf %5, %52 : vector<10x160xf32>
    %54 = vector.extract_strided_slice %47 {offsets = [1, 0], sizes = [10, 162], strides = [1, 1]} : vector<14x162xf32> to vector<10x162xf32>
    %55 = arith.truncf %54 : vector<10x162xf32> to vector<10x162xbf16>
    %c1_29 = arith.constant 1 : index
    %c0_30 = arith.constant 0 : index
    %c0_31 = arith.constant 0 : index
    %56 = vector.load %arg5[%c1_29, %c0_30, %c0_31] : memref<5x162x160xbf16, #tpu.memory_space<vmem>>, vector<1x162x160xbf16>
    %57 = vector.shape_cast %56 : vector<1x162x160xbf16> to vector<162x160xbf16>
    %cst_32 = arith.constant dense<0.000000e+00> : vector<10x160xf32>
    %58 = tpu.matmul %55, %57, %cst_32 {dimension_numbers = #tpu.dot_dimension_numbers<[1], [0], [0], [1], [0, 0, 1, 1], [], []>} : vector<10x162xbf16>, vector<162x160xbf16>, vector<10x160xf32> -> vector<10x160xf32>
    %59 = arith.addf %53, %58 : vector<10x160xf32>
    %60 = vector.extract_strided_slice %47 {offsets = [2, 0], sizes = [10, 162], strides = [1, 1]} : vector<14x162xf32> to vector<10x162xf32>
    %61 = arith.truncf %60 : vector<10x162xf32> to vector<10x162xbf16>
    %c2_33 = arith.constant 2 : index
    %c0_34 = arith.constant 0 : index
    %c0_35 = arith.constant 0 : index
    %62 = vector.load %arg5[%c2_33, %c0_34, %c0_35] : memref<5x162x160xbf16, #tpu.memory_space<vmem>>, vector<1x162x160xbf16>
    %63 = vector.shape_cast %62 : vector<1x162x160xbf16> to vector<162x160xbf16>
    %cst_36 = arith.constant dense<0.000000e+00> : vector<10x160xf32>
    %64 = tpu.matmul %61, %63, %cst_36 {dimension_numbers = #tpu.dot_dimension_numbers<[1], [0], [0], [1], [0, 0, 1, 1], [], []>} : vector<10x162xbf16>, vector<162x160xbf16>, vector<10x160xf32> -> vector<10x160xf32>
    %65 = arith.addf %59, %64 : vector<10x160xf32>
    %66 = vector.extract_strided_slice %47 {offsets = [3, 0], sizes = [10, 162], strides = [1, 1]} : vector<14x162xf32> to vector<10x162xf32>
    %67 = arith.truncf %66 : vector<10x162xf32> to vector<10x162xbf16>
    %c3_37 = arith.constant 3 : index
    %c0_38 = arith.constant 0 : index
    %c0_39 = arith.constant 0 : index
    %68 = vector.load %arg5[%c3_37, %c0_38, %c0_39] : memref<5x162x160xbf16, #tpu.memory_space<vmem>>, vector<1x162x160xbf16>
    %69 = vector.shape_cast %68 : vector<1x162x160xbf16> to vector<162x160xbf16>
    %cst_40 = arith.constant dense<0.000000e+00> : vector<10x160xf32>
    %70 = tpu.matmul %67, %69, %cst_40 {dimension_numbers = #tpu.dot_dimension_numbers<[1], [0], [0], [1], [0, 0, 1, 1], [], []>} : vector<10x162xbf16>, vector<162x160xbf16>, vector<10x160xf32> -> vector<10x160xf32>
    %71 = arith.addf %65, %70 : vector<10x160xf32>
    %72 = vector.extract_strided_slice %47 {offsets = [4, 0], sizes = [10, 162], strides = [1, 1]} : vector<14x162xf32> to vector<10x162xf32>
    %73 = arith.truncf %72 : vector<10x162xf32> to vector<10x162xbf16>
    %c4_41 = arith.constant 4 : index
    %c0_42 = arith.constant 0 : index
    %c0_43 = arith.constant 0 : index
    %74 = vector.load %arg5[%c4_41, %c0_42, %c0_43] : memref<5x162x160xbf16, #tpu.memory_space<vmem>>, vector<1x162x160xbf16>
    %75 = vector.shape_cast %74 : vector<1x162x160xbf16> to vector<162x160xbf16>
    %cst_44 = arith.constant dense<0.000000e+00> : vector<10x160xf32>
    %76 = tpu.matmul %73, %75, %cst_44 {dimension_numbers = #tpu.dot_dimension_numbers<[1], [0], [0], [1], [0, 0, 1, 1], [], []>} : vector<10x162xbf16>, vector<162x160xbf16>, vector<10x160xf32> -> vector<10x160xf32>
    %77 = arith.addf %71, %76 : vector<10x160xf32>
    %cst_45 = arith.constant 0.000000e+00 : f32
    %78 = vector.broadcast %cst_45 : f32 to vector<10x160xf32>
    %79 = arith.maximumf %77, %78 : vector<10x160xf32>
    %80 = vector.extract_strided_slice %79 {offsets = [0, 0], sizes = [9, 160], strides = [1, 1]} : vector<10x160xf32> to vector<9x160xf32>
    %81 = vector.extract_strided_slice %79 {offsets = [1, 0], sizes = [9, 160], strides = [1, 1]} : vector<10x160xf32> to vector<9x160xf32>
    %82 = arith.maximumf %80, %81 : vector<9x160xf32>
    %83 = vector.extract_strided_slice %82 {offsets = [0, 0], sizes = [9, 144], strides = [1, 1]} : vector<9x160xf32> to vector<9x144xf32>
    %84 = vector.extract_strided_slice %82 {offsets = [0, 16], sizes = [9, 144], strides = [1, 1]} : vector<9x160xf32> to vector<9x144xf32>
    %85 = arith.maximumf %83, %84 : vector<9x144xf32>
    %86 = vector.extract_strided_slice %85 {offsets = [0, 0], sizes = [1, 144], strides = [1, 1]} : vector<9x144xf32> to vector<1x144xf32>
    %c0_46 = arith.constant 0 : index
    %c0_47 = arith.constant 0 : index
    %c0_48 = arith.constant 0 : index
    %87 = vector.load %arg14[%c0_46, %c0_47, %c0_48] : memref<5x2x144xf32, #tpu.memory_space<vmem>>, vector<1x1x144xf32>
    %88 = vector.shape_cast %87 : vector<1x1x144xf32> to vector<1x144xf32>
    %89 = vector.shape_cast %86 : vector<1x144xf32> to vector<1x1x144xf32>
    tpu.vector_store %arg14[%c0_46, %c0_47, %c0_48], %89 {strides = array<i32>} : memref<5x2x144xf32, #tpu.memory_space<vmem>>, vector<1x1x144xf32>,
    %90 = vector.extract_strided_slice %85 {offsets = [2, 0], sizes = [1, 144], strides = [1, 1]} : vector<9x144xf32> to vector<1x144xf32>
    %c1_49 = arith.constant 1 : index
    %c0_50 = arith.constant 0 : index
    %c0_51 = arith.constant 0 : index
    %91 = vector.load %arg14[%c1_49, %c0_50, %c0_51] : memref<5x2x144xf32, #tpu.memory_space<vmem>>, vector<1x1x144xf32>
    %92 = vector.shape_cast %91 : vector<1x1x144xf32> to vector<1x144xf32>
    %93 = vector.shape_cast %90 : vector<1x144xf32> to vector<1x1x144xf32>
    tpu.vector_store %arg14[%c1_49, %c0_50, %c0_51], %93 {strides = array<i32>} : memref<5x2x144xf32, #tpu.memory_space<vmem>>, vector<1x1x144xf32>,
    %94 = vector.extract_strided_slice %85 {offsets = [4, 0], sizes = [1, 144], strides = [1, 1]} : vector<9x144xf32> to vector<1x144xf32>
    %c2_52 = arith.constant 2 : index
    %c0_53 = arith.constant 0 : index
    %c0_54 = arith.constant 0 : index
    %95 = vector.load %arg14[%c2_52, %c0_53, %c0_54] : memref<5x2x144xf32, #tpu.memory_space<vmem>>, vector<1x1x144xf32>
    %96 = vector.shape_cast %95 : vector<1x1x144xf32> to vector<1x144xf32>
    %97 = vector.shape_cast %94 : vector<1x144xf32> to vector<1x1x144xf32>
    tpu.vector_store %arg14[%c2_52, %c0_53, %c0_54], %97 {strides = array<i32>} : memref<5x2x144xf32, #tpu.memory_space<vmem>>, vector<1x1x144xf32>,
    %98 = vector.extract_strided_slice %85 {offsets = [6, 0], sizes = [1, 144], strides = [1, 1]} : vector<9x144xf32> to vector<1x144xf32>
    %c3_55 = arith.constant 3 : index
    %c0_56 = arith.constant 0 : index
    %c0_57 = arith.constant 0 : index
    %99 = vector.load %arg14[%c3_55, %c0_56, %c0_57] : memref<5x2x144xf32, #tpu.memory_space<vmem>>, vector<1x1x144xf32>
    %100 = vector.shape_cast %99 : vector<1x1x144xf32> to vector<1x144xf32>
    %101 = vector.shape_cast %98 : vector<1x144xf32> to vector<1x1x144xf32>
    tpu.vector_store %arg14[%c3_55, %c0_56, %c0_57], %101 {strides = array<i32>} : memref<5x2x144xf32, #tpu.memory_space<vmem>>, vector<1x1x144xf32>,
    %102 = vector.extract_strided_slice %85 {offsets = [8, 0], sizes = [1, 144], strides = [1, 1]} : vector<9x144xf32> to vector<1x144xf32>
    %c4_58 = arith.constant 4 : index
    %c0_59 = arith.constant 0 : index
    %c0_60 = arith.constant 0 : index
    %103 = vector.load %arg14[%c4_58, %c0_59, %c0_60] : memref<5x2x144xf32, #tpu.memory_space<vmem>>, vector<1x1x144xf32>
    %104 = vector.shape_cast %103 : vector<1x1x144xf32> to vector<1x144xf32>
    %105 = vector.shape_cast %102 : vector<1x144xf32> to vector<1x1x144xf32>
    tpu.vector_store %arg14[%c4_58, %c0_59, %c0_60], %105 {strides = array<i32>} : memref<5x2x144xf32, #tpu.memory_space<vmem>>, vector<1x1x144xf32>,
    %c1_61 = arith.constant 1 : index
    %c0_62 = arith.constant 0 : index
    %c0_63 = arith.constant 0 : index
    %106 = vector.load %arg1[%c1_61, %c0_62, %c0_63] : memref<2x32x96xf32, #tpu.memory_space<vmem>>, vector<1x32x96xf32>
    %107 = vector.shape_cast %106 : vector<1x32x96xf32> to vector<32x96xf32>
    %108 = vector.extract_strided_slice %107 {offsets = [0, 0], sizes = [28, 96], strides = [1, 1]} : vector<32x96xf32> to vector<28x96xf32>
    %109 = arith.truncf %108 : vector<28x96xf32> to vector<28x96xbf16>
    %c0_64 = arith.constant 0 : index
    %c0_65 = arith.constant 0 : index
    %c0_66 = arith.constant 0 : index
    %110 = vector.load %arg2[%c0_64, %c0_65, %c0_66] : memref<5x96x168xbf16, #tpu.memory_space<vmem>>, vector<1x96x168xbf16>
    %111 = vector.shape_cast %110 : vector<1x96x168xbf16> to vector<96x168xbf16>
    %cst_67 = arith.constant dense<0.000000e+00> : vector<28x168xf32>
    %112 = tpu.matmul %109, %111, %cst_67 {dimension_numbers = #tpu.dot_dimension_numbers<[1], [0], [0], [1], [0, 0, 1, 1], [], []>} : vector<28x96xbf16>, vector<96x168xbf16>, vector<28x168xf32> -> vector<28x168xf32>
    %113 = arith.addf %2, %112 : vector<28x168xf32>
    %114 = vector.extract_strided_slice %107 {offsets = [1, 0], sizes = [28, 96], strides = [1, 1]} : vector<32x96xf32> to vector<28x96xf32>
    %115 = arith.truncf %114 : vector<28x96xf32> to vector<28x96xbf16>
    %c1_68 = arith.constant 1 : index
    %c0_69 = arith.constant 0 : index
    %c0_70 = arith.constant 0 : index
    %116 = vector.load %arg2[%c1_68, %c0_69, %c0_70] : memref<5x96x168xbf16, #tpu.memory_space<vmem>>, vector<1x96x168xbf16>
    %117 = vector.shape_cast %116 : vector<1x96x168xbf16> to vector<96x168xbf16>
    %cst_71 = arith.constant dense<0.000000e+00> : vector<28x168xf32>
    %118 = tpu.matmul %115, %117, %cst_71 {dimension_numbers = #tpu.dot_dimension_numbers<[1], [0], [0], [1], [0, 0, 1, 1], [], []>} : vector<28x96xbf16>, vector<96x168xbf16>, vector<28x168xf32> -> vector<28x168xf32>
    %119 = arith.addf %113, %118 : vector<28x168xf32>
    %120 = vector.extract_strided_slice %107 {offsets = [2, 0], sizes = [28, 96], strides = [1, 1]} : vector<32x96xf32> to vector<28x96xf32>
    %121 = arith.truncf %120 : vector<28x96xf32> to vector<28x96xbf16>
    %c2_72 = arith.constant 2 : index
    %c0_73 = arith.constant 0 : index
    %c0_74 = arith.constant 0 : index
    %122 = vector.load %arg2[%c2_72, %c0_73, %c0_74] : memref<5x96x168xbf16, #tpu.memory_space<vmem>>, vector<1x96x168xbf16>
    %123 = vector.shape_cast %122 : vector<1x96x168xbf16> to vector<96x168xbf16>
    %cst_75 = arith.constant dense<0.000000e+00> : vector<28x168xf32>
    %124 = tpu.matmul %121, %123, %cst_75 {dimension_numbers = #tpu.dot_dimension_numbers<[1], [0], [0], [1], [0, 0, 1, 1], [], []>} : vector<28x96xbf16>, vector<96x168xbf16>, vector<28x168xf32> -> vector<28x168xf32>
    %125 = arith.addf %119, %124 : vector<28x168xf32>
    %126 = vector.extract_strided_slice %107 {offsets = [3, 0], sizes = [28, 96], strides = [1, 1]} : vector<32x96xf32> to vector<28x96xf32>
    %127 = arith.truncf %126 : vector<28x96xf32> to vector<28x96xbf16>
    %c3_76 = arith.constant 3 : index
    %c0_77 = arith.constant 0 : index
    %c0_78 = arith.constant 0 : index
    %128 = vector.load %arg2[%c3_76, %c0_77, %c0_78] : memref<5x96x168xbf16, #tpu.memory_space<vmem>>, vector<1x96x168xbf16>
    %129 = vector.shape_cast %128 : vector<1x96x168xbf16> to vector<96x168xbf16>
    %cst_79 = arith.constant dense<0.000000e+00> : vector<28x168xf32>
    %130 = tpu.matmul %127, %129, %cst_79 {dimension_numbers = #tpu.dot_dimension_numbers<[1], [0], [0], [1], [0, 0, 1, 1], [], []>} : vector<28x96xbf16>, vector<96x168xbf16>, vector<28x168xf32> -> vector<28x168xf32>
    %131 = arith.addf %125, %130 : vector<28x168xf32>
    %132 = vector.extract_strided_slice %107 {offsets = [4, 0], sizes = [28, 96], strides = [1, 1]} : vector<32x96xf32> to vector<28x96xf32>
    %133 = arith.truncf %132 : vector<28x96xf32> to vector<28x96xbf16>
    %c4_80 = arith.constant 4 : index
    %c0_81 = arith.constant 0 : index
    %c0_82 = arith.constant 0 : index
    %134 = vector.load %arg2[%c4_80, %c0_81, %c0_82] : memref<5x96x168xbf16, #tpu.memory_space<vmem>>, vector<1x96x168xbf16>
    %135 = vector.shape_cast %134 : vector<1x96x168xbf16> to vector<96x168xbf16>
    %cst_83 = arith.constant dense<0.000000e+00> : vector<28x168xf32>
    %136 = tpu.matmul %133, %135, %cst_83 {dimension_numbers = #tpu.dot_dimension_numbers<[1], [0], [0], [1], [0, 0, 1, 1], [], []>} : vector<28x96xbf16>, vector<96x168xbf16>, vector<28x168xf32> -> vector<28x168xf32>
    %137 = arith.addf %131, %136 : vector<28x168xf32>
    %cst_84 = arith.constant 0.000000e+00 : f32
    %138 = vector.broadcast %cst_84 : f32 to vector<28x168xf32>
    %139 = arith.maximumf %137, %138 : vector<28x168xf32>
    %140 = vector.extract_strided_slice %139 {offsets = [0, 0], sizes = [27, 168], strides = [1, 1]} : vector<28x168xf32> to vector<27x168xf32>
    %141 = vector.extract_strided_slice %139 {offsets = [1, 0], sizes = [27, 168], strides = [1, 1]} : vector<28x168xf32> to vector<27x168xf32>
    %142 = arith.maximumf %140, %141 : vector<27x168xf32>
    %cst_85 = arith.constant dense<0.000000e+00> : vector<14x168xf32>
    %143 = tpu.matmul %6, %142, %cst_85 {dimension_numbers = #tpu.dot_dimension_numbers<[1], [0], [0], [1], [0, 0, 1, 1], [], []>} : vector<14x27xf32>, vector<27x168xf32>, vector<14x168xf32> -> vector<14x168xf32>
    %144 = vector.extract_strided_slice %143 {offsets = [0, 0], sizes = [14, 162], strides = [1, 1]} : vector<14x168xf32> to vector<14x162xf32>
    %145 = vector.extract_strided_slice %143 {offsets = [0, 6], sizes = [14, 162], strides = [1, 1]} : vector<14x168xf32> to vector<14x162xf32>
    %146 = arith.maximumf %144, %145 : vector<14x162xf32>
    %147 = vector.extract_strided_slice %146 {offsets = [0, 0], sizes = [10, 162], strides = [1, 1]} : vector<14x162xf32> to vector<10x162xf32>
    %148 = arith.truncf %147 : vector<10x162xf32> to vector<10x162xbf16>
    %c0_86 = arith.constant 0 : index
    %c0_87 = arith.constant 0 : index
    %c0_88 = arith.constant 0 : index
    %149 = vector.load %arg5[%c0_86, %c0_87, %c0_88] : memref<5x162x160xbf16, #tpu.memory_space<vmem>>, vector<1x162x160xbf16>
    %150 = vector.shape_cast %149 : vector<1x162x160xbf16> to vector<162x160xbf16>
    %cst_89 = arith.constant dense<0.000000e+00> : vector<10x160xf32>
    %151 = tpu.matmul %148, %150, %cst_89 {dimension_numbers = #tpu.dot_dimension_numbers<[1], [0], [0], [1], [0, 0, 1, 1], [], []>} : vector<10x162xbf16>, vector<162x160xbf16>, vector<10x160xf32> -> vector<10x160xf32>
    %152 = arith.addf %5, %151 : vector<10x160xf32>
    %153 = vector.extract_strided_slice %146 {offsets = [1, 0], sizes = [10, 162], strides = [1, 1]} : vector<14x162xf32> to vector<10x162xf32>
    %154 = arith.truncf %153 : vector<10x162xf32> to vector<10x162xbf16>
    %c1_90 = arith.constant 1 : index
    %c0_91 = arith.constant 0 : index
    %c0_92 = arith.constant 0 : index
    %155 = vector.load %arg5[%c1_90, %c0_91, %c0_92] : memref<5x162x160xbf16, #tpu.memory_space<vmem>>, vector<1x162x160xbf16>
    %156 = vector.shape_cast %155 : vector<1x162x160xbf16> to vector<162x160xbf16>
    %cst_93 = arith.constant dense<0.000000e+00> : vector<10x160xf32>
    %157 = tpu.matmul %154, %156, %cst_93 {dimension_numbers = #tpu.dot_dimension_numbers<[1], [0], [0], [1], [0, 0, 1, 1], [], []>} : vector<10x162xbf16>, vector<162x160xbf16>, vector<10x160xf32> -> vector<10x160xf32>
    %158 = arith.addf %152, %157 : vector<10x160xf32>
    %159 = vector.extract_strided_slice %146 {offsets = [2, 0], sizes = [10, 162], strides = [1, 1]} : vector<14x162xf32> to vector<10x162xf32>
    %160 = arith.truncf %159 : vector<10x162xf32> to vector<10x162xbf16>
    %c2_94 = arith.constant 2 : index
    %c0_95 = arith.constant 0 : index
    %c0_96 = arith.constant 0 : index
    %161 = vector.load %arg5[%c2_94, %c0_95, %c0_96] : memref<5x162x160xbf16, #tpu.memory_space<vmem>>, vector<1x162x160xbf16>
    %162 = vector.shape_cast %161 : vector<1x162x160xbf16> to vector<162x160xbf16>
    %cst_97 = arith.constant dense<0.000000e+00> : vector<10x160xf32>
    %163 = tpu.matmul %160, %162, %cst_97 {dimension_numbers = #tpu.dot_dimension_numbers<[1], [0], [0], [1], [0, 0, 1, 1], [], []>} : vector<10x162xbf16>, vector<162x160xbf16>, vector<10x160xf32> -> vector<10x160xf32>
    %164 = arith.addf %158, %163 : vector<10x160xf32>
    %165 = vector.extract_strided_slice %146 {offsets = [3, 0], sizes = [10, 162], strides = [1, 1]} : vector<14x162xf32> to vector<10x162xf32>
    %166 = arith.truncf %165 : vector<10x162xf32> to vector<10x162xbf16>
    %c3_98 = arith.constant 3 : index
    %c0_99 = arith.constant 0 : index
    %c0_100 = arith.constant 0 : index
    %167 = vector.load %arg5[%c3_98, %c0_99, %c0_100] : memref<5x162x160xbf16, #tpu.memory_space<vmem>>, vector<1x162x160xbf16>
    %168 = vector.shape_cast %167 : vector<1x162x160xbf16> to vector<162x160xbf16>
    %cst_101 = arith.constant dense<0.000000e+00> : vector<10x160xf32>
    %169 = tpu.matmul %166, %168, %cst_101 {dimension_numbers = #tpu.dot_dimension_numbers<[1], [0], [0], [1], [0, 0, 1, 1], [], []>} : vector<10x162xbf16>, vector<162x160xbf16>, vector<10x160xf32> -> vector<10x160xf32>
    %170 = arith.addf %164, %169 : vector<10x160xf32>
    %171 = vector.extract_strided_slice %146 {offsets = [4, 0], sizes = [10, 162], strides = [1, 1]} : vector<14x162xf32> to vector<10x162xf32>
    %172 = arith.truncf %171 : vector<10x162xf32> to vector<10x162xbf16>
    %c4_102 = arith.constant 4 : index
    %c0_103 = arith.constant 0 : index
    %c0_104 = arith.constant 0 : index
    %173 = vector.load %arg5[%c4_102, %c0_103, %c0_104] : memref<5x162x160xbf16, #tpu.memory_space<vmem>>, vector<1x162x160xbf16>
    %174 = vector.shape_cast %173 : vector<1x162x160xbf16> to vector<162x160xbf16>
    %cst_105 = arith.constant dense<0.000000e+00> : vector<10x160xf32>
    %175 = tpu.matmul %172, %174, %cst_105 {dimension_numbers = #tpu.dot_dimension_numbers<[1], [0], [0], [1], [0, 0, 1, 1], [], []>} : vector<10x162xbf16>, vector<162x160xbf16>, vector<10x160xf32> -> vector<10x160xf32>
    %176 = arith.addf %170, %175 : vector<10x160xf32>
    %cst_106 = arith.constant 0.000000e+00 : f32
    %177 = vector.broadcast %cst_106 : f32 to vector<10x160xf32>
    %178 = arith.maximumf %176, %177 : vector<10x160xf32>
    %179 = vector.extract_strided_slice %178 {offsets = [0, 0], sizes = [9, 160], strides = [1, 1]} : vector<10x160xf32> to vector<9x160xf32>
    %180 = vector.extract_strided_slice %178 {offsets = [1, 0], sizes = [9, 160], strides = [1, 1]} : vector<10x160xf32> to vector<9x160xf32>
    %181 = arith.maximumf %179, %180 : vector<9x160xf32>
    %182 = vector.extract_strided_slice %181 {offsets = [0, 0], sizes = [9, 144], strides = [1, 1]} : vector<9x160xf32> to vector<9x144xf32>
    %183 = vector.extract_strided_slice %181 {offsets = [0, 16], sizes = [9, 144], strides = [1, 1]} : vector<9x160xf32> to vector<9x144xf32>
    %184 = arith.maximumf %182, %183 : vector<9x144xf32>
    %185 = vector.extract_strided_slice %184 {offsets = [0, 0], sizes = [1, 144], strides = [1, 1]} : vector<9x144xf32> to vector<1x144xf32>
    %c0_107 = arith.constant 0 : index
    %c1_108 = arith.constant 1 : index
    %c0_109 = arith.constant 0 : index
    %186 = vector.load %arg14[%c0_107, %c1_108, %c0_109] : memref<5x2x144xf32, #tpu.memory_space<vmem>>, vector<1x1x144xf32>
    %187 = vector.shape_cast %186 : vector<1x1x144xf32> to vector<1x144xf32>
    %188 = vector.shape_cast %185 : vector<1x144xf32> to vector<1x1x144xf32>
    tpu.vector_store %arg14[%c0_107, %c1_108, %c0_109], %188 {strides = array<i32>} : memref<5x2x144xf32, #tpu.memory_space<vmem>>, vector<1x1x144xf32>,
    %189 = vector.extract_strided_slice %184 {offsets = [2, 0], sizes = [1, 144], strides = [1, 1]} : vector<9x144xf32> to vector<1x144xf32>
    %c1_110 = arith.constant 1 : index
    %c1_111 = arith.constant 1 : index
    %c0_112 = arith.constant 0 : index
    %190 = vector.load %arg14[%c1_110, %c1_111, %c0_112] : memref<5x2x144xf32, #tpu.memory_space<vmem>>, vector<1x1x144xf32>
    %191 = vector.shape_cast %190 : vector<1x1x144xf32> to vector<1x144xf32>
    %192 = vector.shape_cast %189 : vector<1x144xf32> to vector<1x1x144xf32>
    tpu.vector_store %arg14[%c1_110, %c1_111, %c0_112], %192 {strides = array<i32>} : memref<5x2x144xf32, #tpu.memory_space<vmem>>, vector<1x1x144xf32>,
    %193 = vector.extract_strided_slice %184 {offsets = [4, 0], sizes = [1, 144], strides = [1, 1]} : vector<9x144xf32> to vector<1x144xf32>
    %c2_113 = arith.constant 2 : index
    %c1_114 = arith.constant 1 : index
    %c0_115 = arith.constant 0 : index
    %194 = vector.load %arg14[%c2_113, %c1_114, %c0_115] : memref<5x2x144xf32, #tpu.memory_space<vmem>>, vector<1x1x144xf32>
    %195 = vector.shape_cast %194 : vector<1x1x144xf32> to vector<1x144xf32>
    %196 = vector.shape_cast %193 : vector<1x144xf32> to vector<1x1x144xf32>
    tpu.vector_store %arg14[%c2_113, %c1_114, %c0_115], %196 {strides = array<i32>} : memref<5x2x144xf32, #tpu.memory_space<vmem>>, vector<1x1x144xf32>,
    %197 = vector.extract_strided_slice %184 {offsets = [6, 0], sizes = [1, 144], strides = [1, 1]} : vector<9x144xf32> to vector<1x144xf32>
    %c3_116 = arith.constant 3 : index
    %c1_117 = arith.constant 1 : index
    %c0_118 = arith.constant 0 : index
    %198 = vector.load %arg14[%c3_116, %c1_117, %c0_118] : memref<5x2x144xf32, #tpu.memory_space<vmem>>, vector<1x1x144xf32>
    %199 = vector.shape_cast %198 : vector<1x1x144xf32> to vector<1x144xf32>
    %200 = vector.shape_cast %197 : vector<1x144xf32> to vector<1x1x144xf32>
    tpu.vector_store %arg14[%c3_116, %c1_117, %c0_118], %200 {strides = array<i32>} : memref<5x2x144xf32, #tpu.memory_space<vmem>>, vector<1x1x144xf32>,
    %201 = vector.extract_strided_slice %184 {offsets = [8, 0], sizes = [1, 144], strides = [1, 1]} : vector<9x144xf32> to vector<1x144xf32>
    %c4_119 = arith.constant 4 : index
    %c1_120 = arith.constant 1 : index
    %c0_121 = arith.constant 0 : index
    %202 = vector.load %arg14[%c4_119, %c1_120, %c0_121] : memref<5x2x144xf32, #tpu.memory_space<vmem>>, vector<1x1x144xf32>
    %203 = vector.shape_cast %202 : vector<1x1x144xf32> to vector<1x144xf32>
    %204 = vector.shape_cast %201 : vector<1x144xf32> to vector<1x1x144xf32>
    tpu.vector_store %arg14[%c4_119, %c1_120, %c0_121], %204 {strides = array<i32>} : memref<5x2x144xf32, #tpu.memory_space<vmem>>, vector<1x1x144xf32>,
    %c0_122 = arith.constant 0 : index
    %c0_123 = arith.constant 0 : index
    %205 = vector.load %arg8[%c0_122, %c0_123] : memref<1x120xf32, #tpu.memory_space<vmem>>, vector<1x120xf32>
    %206 = vector.shape_cast %205 : vector<1x120xf32> to vector<1x120xf32>
    %207 = vector.broadcast %206 : vector<1x120xf32> to vector<2x120xf32>
    %c0_124 = arith.constant 0 : index
    %c0_125 = arith.constant 0 : index
    %c0_126 = arith.constant 0 : index
    %208 = vector.load %arg14[%c0_124, %c0_125, %c0_126] : memref<5x2x144xf32, #tpu.memory_space<vmem>>, vector<1x2x144xf32>
    %209 = vector.shape_cast %208 : vector<1x2x144xf32> to vector<2x144xf32>
    %210 = arith.truncf %209 : vector<2x144xf32> to vector<2x144xbf16>
    %c0_127 = arith.constant 0 : index
    %c0_128 = arith.constant 0 : index
    %c0_129 = arith.constant 0 : index
    %211 = vector.load %arg7[%c0_127, %c0_128, %c0_129] : memref<5x144x120xbf16, #tpu.memory_space<vmem>>, vector<1x144x120xbf16>
    %212 = vector.shape_cast %211 : vector<1x144x120xbf16> to vector<144x120xbf16>
    %cst_130 = arith.constant dense<0.000000e+00> : vector<2x120xf32>
    %213 = tpu.matmul %210, %212, %cst_130 {dimension_numbers = #tpu.dot_dimension_numbers<[1], [0], [0], [1], [0, 0, 1, 1], [], []>} : vector<2x144xbf16>, vector<144x120xbf16>, vector<2x120xf32> -> vector<2x120xf32>
    %214 = arith.addf %207, %213 : vector<2x120xf32>
    %c1_131 = arith.constant 1 : index
    %c0_132 = arith.constant 0 : index
    %c0_133 = arith.constant 0 : index
    %215 = vector.load %arg14[%c1_131, %c0_132, %c0_133] : memref<5x2x144xf32, #tpu.memory_space<vmem>>, vector<1x2x144xf32>
    %216 = vector.shape_cast %215 : vector<1x2x144xf32> to vector<2x144xf32>
    %217 = arith.truncf %216 : vector<2x144xf32> to vector<2x144xbf16>
    %c1_134 = arith.constant 1 : index
    %c0_135 = arith.constant 0 : index
    %c0_136 = arith.constant 0 : index
    %218 = vector.load %arg7[%c1_134, %c0_135, %c0_136] : memref<5x144x120xbf16, #tpu.memory_space<vmem>>, vector<1x144x120xbf16>
    %219 = vector.shape_cast %218 : vector<1x144x120xbf16> to vector<144x120xbf16>
    %cst_137 = arith.constant dense<0.000000e+00> : vector<2x120xf32>
    %220 = tpu.matmul %217, %219, %cst_137 {dimension_numbers = #tpu.dot_dimension_numbers<[1], [0], [0], [1], [0, 0, 1, 1], [], []>} : vector<2x144xbf16>, vector<144x120xbf16>, vector<2x120xf32> -> vector<2x120xf32>
    %221 = arith.addf %214, %220 : vector<2x120xf32>
    %c2_138 = arith.constant 2 : index
    %c0_139 = arith.constant 0 : index
    %c0_140 = arith.constant 0 : index
    %222 = vector.load %arg14[%c2_138, %c0_139, %c0_140] : memref<5x2x144xf32, #tpu.memory_space<vmem>>, vector<1x2x144xf32>
    %223 = vector.shape_cast %222 : vector<1x2x144xf32> to vector<2x144xf32>
    %224 = arith.truncf %223 : vector<2x144xf32> to vector<2x144xbf16>
    %c2_141 = arith.constant 2 : index
    %c0_142 = arith.constant 0 : index
    %c0_143 = arith.constant 0 : index
    %225 = vector.load %arg7[%c2_141, %c0_142, %c0_143] : memref<5x144x120xbf16, #tpu.memory_space<vmem>>, vector<1x144x120xbf16>
    %226 = vector.shape_cast %225 : vector<1x144x120xbf16> to vector<144x120xbf16>
    %cst_144 = arith.constant dense<0.000000e+00> : vector<2x120xf32>
    %227 = tpu.matmul %224, %226, %cst_144 {dimension_numbers = #tpu.dot_dimension_numbers<[1], [0], [0], [1], [0, 0, 1, 1], [], []>} : vector<2x144xbf16>, vector<144x120xbf16>, vector<2x120xf32> -> vector<2x120xf32>
    %228 = arith.addf %221, %227 : vector<2x120xf32>
    %c3_145 = arith.constant 3 : index
    %c0_146 = arith.constant 0 : index
    %c0_147 = arith.constant 0 : index
    %229 = vector.load %arg14[%c3_145, %c0_146, %c0_147] : memref<5x2x144xf32, #tpu.memory_space<vmem>>, vector<1x2x144xf32>
    %230 = vector.shape_cast %229 : vector<1x2x144xf32> to vector<2x144xf32>
    %231 = arith.truncf %230 : vector<2x144xf32> to vector<2x144xbf16>
    %c3_148 = arith.constant 3 : index
    %c0_149 = arith.constant 0 : index
    %c0_150 = arith.constant 0 : index
    %232 = vector.load %arg7[%c3_148, %c0_149, %c0_150] : memref<5x144x120xbf16, #tpu.memory_space<vmem>>, vector<1x144x120xbf16>
    %233 = vector.shape_cast %232 : vector<1x144x120xbf16> to vector<144x120xbf16>
    %cst_151 = arith.constant dense<0.000000e+00> : vector<2x120xf32>
    %234 = tpu.matmul %231, %233, %cst_151 {dimension_numbers = #tpu.dot_dimension_numbers<[1], [0], [0], [1], [0, 0, 1, 1], [], []>} : vector<2x144xbf16>, vector<144x120xbf16>, vector<2x120xf32> -> vector<2x120xf32>
    %235 = arith.addf %228, %234 : vector<2x120xf32>
    %c4_152 = arith.constant 4 : index
    %c0_153 = arith.constant 0 : index
    %c0_154 = arith.constant 0 : index
    %236 = vector.load %arg14[%c4_152, %c0_153, %c0_154] : memref<5x2x144xf32, #tpu.memory_space<vmem>>, vector<1x2x144xf32>
    %237 = vector.shape_cast %236 : vector<1x2x144xf32> to vector<2x144xf32>
    %238 = arith.truncf %237 : vector<2x144xf32> to vector<2x144xbf16>
    %c4_155 = arith.constant 4 : index
    %c0_156 = arith.constant 0 : index
    %c0_157 = arith.constant 0 : index
    %239 = vector.load %arg7[%c4_155, %c0_156, %c0_157] : memref<5x144x120xbf16, #tpu.memory_space<vmem>>, vector<1x144x120xbf16>
    %240 = vector.shape_cast %239 : vector<1x144x120xbf16> to vector<144x120xbf16>
    %cst_158 = arith.constant dense<0.000000e+00> : vector<2x120xf32>
    %241 = tpu.matmul %238, %240, %cst_158 {dimension_numbers = #tpu.dot_dimension_numbers<[1], [0], [0], [1], [0, 0, 1, 1], [], []>} : vector<2x144xbf16>, vector<144x120xbf16>, vector<2x120xf32> -> vector<2x120xf32>
    %242 = arith.addf %235, %241 : vector<2x120xf32>
    %cst_159 = arith.constant 0.000000e+00 : f32
    %243 = vector.broadcast %cst_159 : f32 to vector<2x120xf32>
    %244 = arith.maximumf %242, %243 : vector<2x120xf32>
    %245 = arith.truncf %244 : vector<2x120xf32> to vector<2x120xbf16>
    %c0_160 = arith.constant 0 : index
    %c0_161 = arith.constant 0 : index
    %246 = vector.load %arg9[%c0_160, %c0_161] : memref<120x84xbf16, #tpu.memory_space<vmem>>, vector<120x84xbf16>
    %cst_162 = arith.constant dense<0.000000e+00> : vector<2x84xf32>
    %247 = tpu.matmul %245, %246, %cst_162 {dimension_numbers = #tpu.dot_dimension_numbers<[1], [0], [0], [1], [0, 0, 1, 1], [], []>} : vector<2x120xbf16>, vector<120x84xbf16>, vector<2x84xf32> -> vector<2x84xf32>
    %c0_163 = arith.constant 0 : index
    %c0_164 = arith.constant 0 : index
    %248 = vector.load %arg10[%c0_163, %c0_164] : memref<1x84xf32, #tpu.memory_space<vmem>>, vector<1x84xf32>
    %249 = vector.broadcast %248 : vector<1x84xf32> to vector<2x84xf32>
    %250 = arith.addf %247, %249 : vector<2x84xf32>
    %cst_165 = arith.constant 0.000000e+00 : f32
    %251 = vector.broadcast %cst_165 : f32 to vector<2x84xf32>
    %252 = arith.maximumf %250, %251 : vector<2x84xf32>
    %253 = arith.truncf %252 : vector<2x84xf32> to vector<2x84xbf16>
    %c0_166 = arith.constant 0 : index
    %c0_167 = arith.constant 0 : index
    %254 = vector.load %arg11[%c0_166, %c0_167] : memref<84x128xbf16, #tpu.memory_space<vmem>>, vector<84x128xbf16>
    %cst_168 = arith.constant dense<0.000000e+00> : vector<2x128xf32>
    %255 = tpu.matmul %253, %254, %cst_168 {dimension_numbers = #tpu.dot_dimension_numbers<[1], [0], [0], [1], [0, 0, 1, 1], [], []>} : vector<2x84xbf16>, vector<84x128xbf16>, vector<2x128xf32> -> vector<2x128xf32>
    %c0_169 = arith.constant 0 : index
    %c0_170 = arith.constant 0 : index
    %256 = vector.load %arg12[%c0_169, %c0_170] : memref<1x128xf32, #tpu.memory_space<vmem>>, vector<1x128xf32>
    %257 = vector.broadcast %256 : vector<1x128xf32> to vector<2x128xf32>
    %258 = arith.addf %255, %257 : vector<2x128xf32>
    %c0_171 = arith.constant 0 : index
    %c0_172 = arith.constant 0 : index
    %259 = vector.load %arg13[%c0_171, %c0_172] : memref<2x128xf32, #tpu.memory_space<vmem>>, vector<2x128xf32>
    tpu.vector_store %arg13[%c0_171, %c0_172], %258 {strides = array<i32>} : memref<2x128xf32, #tpu.memory_space<vmem>>, vector<2x128xf32>,
    return
  }
  func.func @transform_0(%arg0: i32) -> (i32, i32, i32) {
    %c0_i32 = arith.constant 0 : i32
    %c0_i32_0 = arith.constant 0 : i32
    %c0_i32_1 = arith.constant 0 : i32
    return %arg0, %c0_i32, %c0_i32_0 : i32, i32, i32
  }
  func.func @transform_1(%arg0: i32) -> (i32, i32, i32) {
    %c0_i32 = arith.constant 0 : i32
    %c0_i32_0 = arith.constant 0 : i32
    %c0_i32_1 = arith.constant 0 : i32
    %c0_i32_2 = arith.constant 0 : i32
    return %c0_i32, %c0_i32_0, %c0_i32_1 : i32, i32, i32
  }
  func.func @transform_2(%arg0: i32) -> (i32, i32) {
    %c0_i32 = arith.constant 0 : i32
    %c0_i32_0 = arith.constant 0 : i32
    %c0_i32_1 = arith.constant 0 : i32
    return %c0_i32, %c0_i32_0 : i32, i32
  }
  func.func @transform_3(%arg0: i32) -> (i32, i32) {
    %c0_i32 = arith.constant 0 : i32
    %c0_i32_0 = arith.constant 0 : i32
    %c0_i32_1 = arith.constant 0 : i32
    return %c0_i32, %c0_i32_0 : i32, i32
  }
  func.func @transform_4(%arg0: i32) -> (i32, i32, i32) {
    %c0_i32 = arith.constant 0 : i32
    %c0_i32_0 = arith.constant 0 : i32
    %c0_i32_1 = arith.constant 0 : i32
    %c0_i32_2 = arith.constant 0 : i32
    return %c0_i32, %c0_i32_0, %c0_i32_1 : i32, i32, i32
  }
  func.func @transform_5(%arg0: i32) -> (i32, i32) {
    %c0_i32 = arith.constant 0 : i32
    %c0_i32_0 = arith.constant 0 : i32
    %c0_i32_1 = arith.constant 0 : i32
    return %c0_i32, %c0_i32_0 : i32, i32
  }
  func.func @transform_6(%arg0: i32) -> (i32, i32, i32) {
    %c0_i32 = arith.constant 0 : i32
    %c0_i32_0 = arith.constant 0 : i32
    %c0_i32_1 = arith.constant 0 : i32
    %c0_i32_2 = arith.constant 0 : i32
    return %c0_i32, %c0_i32_0, %c0_i32_1 : i32, i32, i32
  }
  func.func @transform_7(%arg0: i32) -> (i32, i32) {
    %c0_i32 = arith.constant 0 : i32
    %c0_i32_0 = arith.constant 0 : i32
    %c0_i32_1 = arith.constant 0 : i32
    return %c0_i32, %c0_i32_0 : i32, i32
  }
  func.func @transform_8(%arg0: i32) -> (i32, i32) {
    %c0_i32 = arith.constant 0 : i32
    %c0_i32_0 = arith.constant 0 : i32
    %c0_i32_1 = arith.constant 0 : i32
    return %c0_i32, %c0_i32_0 : i32, i32
  }
  func.func @transform_9(%arg0: i32) -> (i32, i32) {
    %c0_i32 = arith.constant 0 : i32
    %c0_i32_0 = arith.constant 0 : i32
    %c0_i32_1 = arith.constant 0 : i32
    return %c0_i32, %c0_i32_0 : i32, i32
  }
  func.func @transform_10(%arg0: i32) -> (i32, i32) {
    %c0_i32 = arith.constant 0 : i32
    %c0_i32_0 = arith.constant 0 : i32
    %c0_i32_1 = arith.constant 0 : i32
    return %c0_i32, %c0_i32_0 : i32, i32
  }
  func.func @transform_11(%arg0: i32) -> (i32, i32) {
    %c0_i32 = arith.constant 0 : i32
    %c0_i32_0 = arith.constant 0 : i32
    %c0_i32_1 = arith.constant 0 : i32
    return %c0_i32, %c0_i32_0 : i32, i32
  }
  func.func @transform_12(%arg0: i32) -> (i32, i32) {
    %c0_i32 = arith.constant 0 : i32
    %c0_i32_0 = arith.constant 0 : i32
    return %arg0, %c0_i32 : i32, i32
  }
}

</mosaic_0001>

<llo_original>
// kernel: lenet_forward.1
$region0: #{lenet_forward.1}
  #allocation0 [shape = 'u32[]', space=smem, size = 0x4, offset = 0x4, fixed_abs, tag = 'smem constant byte address 0x4 - core index']
  #allocation1 [shape = 'u32[144,128]{1,0:T(1,128)}', space=vmem, size = 0x12000, scoped, tag = 'internal scratch']
  #allocation2 [shape = 'f32[5,2,144]{2,1,0:T(2,128)}', space=vmem, size = 0x2800, scoped, tag = 'scratch operand']
  %s0 = inlined_call_operand.vmem [shape: f32[2,32,96], index: 0, kind: input, shape index: {}]
  %s1 = inlined_call_operand.vmem [shape: bf16[5,96,168], index: 1, kind: input, shape index: {}]
  %s2 = inlined_call_operand.vmem [shape: f32[1,168], index: 2, kind: input, shape index: {}]
  %s3 = inlined_call_operand.vmem [shape: f32[14,27], index: 3, kind: input, shape index: {}]
  %s4 = inlined_call_operand.vmem [shape: bf16[5,162,160], index: 4, kind: input, shape index: {}]
  %s5 = inlined_call_operand.vmem [shape: f32[1,160], index: 5, kind: input, shape index: {}]
  %s6 = inlined_call_operand.vmem [shape: bf16[5,144,120], index: 6, kind: input, shape index: {}]
  %s7 = inlined_call_operand.vmem [shape: f32[1,120], index: 7, kind: input, shape index: {}]
  %s8 = inlined_call_operand.vmem [shape: bf16[120,84], index: 8, kind: input, shape index: {}]
  %s9 = inlined_call_operand.vmem [shape: f32[1,84], index: 9, kind: input, shape index: {}]
  %s10 = inlined_call_operand.vmem [shape: bf16[84,128], index: 10, kind: input, shape index: {}]
  %s11 = inlined_call_operand.vmem [shape: f32[1,128], index: 11, kind: input, shape index: {}]
  %s12 = inlined_call_operand.hbm [shape: f32[2,128], index: 12, kind: output, shape index: {}]
  %s13 = sld [smem:[#allocation0]]
  $region58: #{lenet_forward.1} parent=0
    _
  %s15 = ssub.s32 1, %s13
  %s16 = scalar_select 0, %s15, %s13
  $region1: #{lenet_forward.1} parent=0
    #allocation3 [shape = 'u8[1024]{0}', space=vmem, size = 0x400, scoped, tag = 'output window, operand 0, single buffered']
    #allocation4 [shape = 's32[1]{0}', space=sflag, size = 0x4, scoped, tag = 'scoped memory for lenet_forward.1']
    %17 = vsyncpa [#allocation4], 0
    // Predicated region
    $region2: #{lenet_forward.1} parent=1 // pred_check
      _
    $region3: #{lenet_forward.1} parent=1 // pred_check_branch
      %19 = sbr.rel (0) target = $region5
    $region4: #{lenet_forward.1} parent=1 // pred_region
      _
    $region5: #{lenet_forward.1} parent=1 // pred_fallthru
      _
    // Predicated region
    $region6: #{lenet_forward.1} parent=1 // pred_check
      _
    $region7: #{lenet_forward.1} parent=1 // pred_check_branch
      %21 = sbr.rel (0) target = $region9
    $region8: #{lenet_forward.1} parent=1 // pred_region
      _
    $region9: #{lenet_forward.1} parent=1 // pred_fallthru
      _
    // Predicated region
    $region10: #{lenet_forward.1} parent=1 // pred_check
      _
    $region11: #{lenet_forward.1} parent=1 // pred_check_branch
      %23 = sbr.rel (0) target = $region13
    $region12: #{lenet_forward.1} parent=1 // pred_region
      _
    $region13: #{lenet_forward.1} parent=1 // pred_fallthru
      _
    // Predicated region
    $region14: #{lenet_forward.1} parent=1 // pred_check
      _
    $region15: #{lenet_forward.1} parent=1 // pred_check_branch
      %25 = sbr.rel (0) target = $region17
    $region16: #{lenet_forward.1} parent=1 // pred_region
      _
    $region17: #{lenet_forward.1} parent=1 // pred_fallthru
      _
    // Predicated region
    $region18: #{lenet_forward.1} parent=1 // pred_check
      _
    $region19: #{lenet_forward.1} parent=1 // pred_check_branch
      %27 = sbr.rel (0) target = $region21
    $region20: #{lenet_forward.1} parent=1 // pred_region
      _
    $region21: #{lenet_forward.1} parent=1 // pred_fallthru
      _
    // Predicated region
    $region22: #{lenet_forward.1} parent=1 // pred_check
      _
    $region23: #{lenet_forward.1} parent=1 // pred_check_branch
      %29 = sbr.rel (0) target = $region25
    $region24: #{lenet_forward.1} parent=1 // pred_region
      _
    $region25: #{lenet_forward.1} parent=1 // pred_fallthru
      _
    // Predicated region
    $region26: #{lenet_forward.1} parent=1 // pred_check
      _
    $region27: #{lenet_forward.1} parent=1 // pred_check_branch
      %31 = sbr.rel (0) target = $region29
    $region28: #{lenet_forward.1} parent=1 // pred_region
      _
    $region29: #{lenet_forward.1} parent=1 // pred_fallthru
      _
    // Predicated region
    $region30: #{lenet_forward.1} parent=1 // pred_check
      _
    $region31: #{lenet_forward.1} parent=1 // pred_check_branch
      %33 = sbr.rel (0) target = $region33
    $region32: #{lenet_forward.1} parent=1 // pred_region
      _
    $region33: #{lenet_forward.1} parent=1 // pred_fallthru
      _
    // Predicated region
    $region34: #{lenet_forward.1} parent=1 // pred_check
      _
    $region35: #{lenet_forward.1} parent=1 // pred_check_branch
      %35 = sbr.rel (0) target = $region37
    $region36: #{lenet_forward.1} parent=1 // pred_region
      _
    $region37: #{lenet_forward.1} parent=1 // pred_fallthru
      _
    // Predicated region
    $region38: #{lenet_forward.1} parent=1 // pred_check
      _
    $region39: #{lenet_forward.1} parent=1 // pred_check_branch
      %37 = sbr.rel (0) target = $region41
    $region40: #{lenet_forward.1} parent=1 // pred_region
      _
    $region41: #{lenet_forward.1} parent=1 // pred_fallthru
      _
    // Predicated region
    $region42: #{lenet_forward.1} parent=1 // pred_check
      _
    $region43: #{lenet_forward.1} parent=1 // pred_check_branch
      %39 = sbr.rel (0) target = $region45
    $region44: #{lenet_forward.1} parent=1 // pred_region
      _
    $region45: #{lenet_forward.1} parent=1 // pred_fallthru
      _
    // Predicated region
    $region46: #{lenet_forward.1} parent=1 // pred_check
      _
    $region47: #{lenet_forward.1} parent=1 // pred_check_branch
      %41 = sbr.rel (0) target = $region49
    $region48: #{lenet_forward.1} parent=1 // pred_region
      _
    $region49: #{lenet_forward.1} parent=1 // pred_fallthru
      _
    %v43 = vld [vmem:[%s2] sm:$0x3]
    %v45 = vlaneseq
    %v46 = vshrl.u32 %v45, 7
    %v47 = vsub.s32 0, %v46
    %v48 = vrot.slane %v43, %v47
    %v49 = vlaneseq
    %v50 = vshrl.u32 %v49, 7
    %v51 = vsub.s32 1, %v50
    %v52 = vrot.slane %v43, %v51
    %v55 = vld [vmem:[%s5] sm:$0x3]
    %v57 = vlaneseq
    %v58 = vshrl.u32 %v57, 7
    %v59 = vsub.s32 0, %v58
    %v60 = vrot.slane %v55, %v59
    %v61 = vlaneseq
    %v62 = vshrl.u32 %v61, 7
    %v63 = vsub.s32 1, %v62
    %v64 = vrot.slane %v55, %v63
    %v67 = vld [vmem:[%s3] sm:$0xff]
    %v68 = vld [vmem:[%s3 + $0x8] sm:$0x3f]
    %v69 = vld [vmem:[%s0] sm:$0xff]
    %v70 = vld [vmem:[%s0 + $0x8] sm:$0xff]
    %v71 = vld [vmem:[%s0 + $0x10] sm:$0xff]
    %v72 = vld [vmem:[%s0 + $0x18] sm:$0xff]
    %v73 = vpack.c.bf16 %v70, %v69
    %v74 = vpack.c.bf16 %v72, %v71
    %v75 = vld [vmem:[%s1] sm:$0xff]
    %v76 = vld [vmem:[%s1 + $0x8] sm:$0xff]
    %v77 = vld [vmem:[%s1 + $0x10] sm:$0xff]
    %v78 = vld [vmem:[%s1 + $0x18] sm:$0xff]
    %v79 = vld [vmem:[%s1 + $0x20] sm:$0xff]
    %v80 = vld [vmem:[%s1 + $0x28] sm:$0xff]
    %v81 = vld [vmem:[%s1 + $0x30] sm:$0xff]
    %v82 = vld [vmem:[%s1 + $0x38] sm:$0xff]
    %v83 = vld [vmem:[%s1 + $0x40] sm:$0xff]
    %v84 = vld [vmem:[%s1 + $0x48] sm:$0xff]
    %v85 = vld [vmem:[%s1 + $0x50] sm:$0xff]
    %v86 = vld [vmem:[%s1 + $0x58] sm:$0xff]
    %v99 = vunpack.c.l.b16 %v75
    %v100 = vunpack.c.h.b16 %v75
    %v101 = vunpack.c.l.b16 %v76
    %v102 = vunpack.c.h.b16 %v76
    %v103 = vunpack.c.l.b16 %v77
    %v104 = vunpack.c.h.b16 %v77
    %v105 = vunpack.c.l.b16 %v78
    %v106 = vunpack.c.h.b16 %v78
    %v107 = vunpack.c.l.b16 %v79
    %v108 = vunpack.c.h.b16 %v79
    %v109 = vunpack.c.l.b16 %v80
    %v110 = vunpack.c.h.b16 %v80
    %v111 = vunpack.c.l.b16 %v81
    %v112 = vunpack.c.h.b16 %v81
    %v113 = vunpack.c.l.b16 %v82
    %v114 = vunpack.c.h.b16 %v82
    %v115 = vunpack.c.l.b16 %v83
    %v116 = vunpack.c.h.b16 %v83
    %v117 = vunpack.c.l.b16 %v84
    %v118 = vunpack.c.h.b16 %v84
    %v119 = vunpack.c.l.b16 %v85
    %v120 = vunpack.c.h.b16 %v85
    %v121 = vunpack.c.l.b16 %v86
    %v122 = vunpack.c.h.b16 %v86
    %v123 = vpack.c.b16 %v101, %v99
    %v124 = vpack.c.b16 %v102, %v100
    %v125 = vpack.c.b16 %v105, %v103
    %v126 = vpack.c.b16 %v106, %v104
    %v127 = vpack.c.b16 %v109, %v107
    %v128 = vpack.c.b16 %v110, %v108
    %v129 = vpack.c.b16 %v113, %v111
    %v130 = vpack.c.b16 %v114, %v112
    %v131 = vpack.c.b16 %v117, %v115
    %v132 = vpack.c.b16 %v118, %v116
    %v133 = vpack.c.b16 %v121, %v119
    %v134 = vpack.c.b16 %v122, %v120
    %vm147 = vcmask 785408
    %v149 = vsel %vm147, %v73, 0
    %v152 = vsel %vm147, %v74, 0
    %154 = vmatprep.subr.bf16.mxu0 %v124
    %155 = vmatpush1.bf16.msra.mxu0 %v123
    %156 = vmatprep.subr.bf16.mxu0 %v126
    %157 = vmatpush1.bf16.msra.mxu0 %v125
    %158 = vmatprep.subr.bf16.mxu0 %v128
    %159 = vmatpush1.bf16.msra.mxu0 %v127
    %160 = vmatprep.subr.bf16.mxu0 %v130
    %161 = vmatpush1.bf16.msra.mxu0 %v129
    %162 = vmatprep.subr.bf16.mxu0 %v132
    %163 = vmatpush1.bf16.msra.mxu0 %v131
    %164 = vmatprep.subr.bf16.mxu0 %v134
    %165 = vmatpush1.bf16.msra.mxu0 %v133
    %166 = vmatprep.subr.bf16.mxu0 0
    %167 = vmatpush1.bf16.msra.mxu0 0
    %168 = vmatprep.subr.bf16.mxu0 0
    %169 = vmatpush1.bf16.msra.mxu0 0
    %170 = vmatprep.subr.bf16.mxu0 0
    %171 = vmatpush1.bf16.msra.mxu0 0
    %172 = vmatprep.subr.bf16.mxu0 0
    %173 = vmatpush1.bf16.msra.mxu0 0
    %174 = vmatprep.subr.bf16.mxu0 0
    %175 = vmatpush1.bf16.msra.mxu0 0
    %176 = vmatprep.subr.bf16.mxu0 0
    %177 = vmatpush1.bf16.msra.mxu0 0
    %178 = vmatprep.subr.bf16.mxu0 0
    %179 = vmatpush1.bf16.msra.mxu0 0
    %180 = vmatprep.subr.bf16.mxu0 0
    %181 = vmatpush1.bf16.msra.mxu0 0
    %182 = vmatprep.subr.bf16.mxu0 0
    %183 = vmatpush1.bf16.msra.mxu0 0
    %184 = vmatprep.subr.bf16.mxu0 0
    %185 = vmatpush1.bf16.msra.mxu0 0
    %186 = vmatprep.mubr.bf16.mxu0 0
    %187 = vmatmul.mubr.bf16.gmra.mrb[0].mxu0 %v149
    %v188 = vpop.f32.mrb[0].mxu0
    %v189 = vadd.f32 0.0, %v188
    %v190 = vpop.f32.mrb[0].mxu0
    %v191 = vadd.f32 0.0, %v190
    %v192 = vpop.f32.mrb[0].mxu0
    %v193 = vadd.f32 0.0, %v192
    %v194 = vpop.f32.mrb[0].mxu0
    %v195 = vadd.f32 0.0, %v194
    %196 = vmatprep.mubr.bf16.mxu0 0
    %197 = vmatmul.mubr.bf16.gmra.mrb[0].mxu0 %v152
    %v198 = vpop.f32.mrb[0].mxu0
    %v199 = vadd.f32 0.0, %v198
    %v200 = vpop.f32.mrb[0].mxu0
    %v201 = vadd.f32 0.0, %v200
    %v202 = vpop.f32.mrb[0].mxu0
    %v203 = vadd.f32 0.0, %v202
    %v204 = vpop.f32.mrb[0].mxu0
    %v205 = vadd.f32 0.0, %v204
    %206 = vdwg.mxu0
    %v207 = vadd.f32 %v48, %v189
    %v208 = vadd.f32 %v52, %v191
    %v209 = vadd.f32 %v48, %v193
    %v210 = vadd.f32 %v52, %v195
    %v211 = vadd.f32 %v48, %v199
    %v212 = vadd.f32 %v52, %v201
    %v213 = vadd.f32 %v48, %v203
    %v214 = vadd.f32 %v52, %v205
    %s215 = scalar_lea.vmem %s1, 96
    %v216 = vld [vmem:[%s215] sm:$0xff]
    %v217 = vld [vmem:[%s215 + $0x8] sm:$0xff]
    %v218 = vld [vmem:[%s215 + $0x10] sm:$0xff]
    %v219 = vld [vmem:[%s215 + $0x18] sm:$0xff]
    %v220 = vld [vmem:[%s215 + $0x20] sm:$0xff]
    %v221 = vld [vmem:[%s215 + $0x28] sm:$0xff]
    %v222 = vld [vmem:[%s215 + $0x30] sm:$0xff]
    %v223 = vld [vmem:[%s215 + $0x38] sm:$0xff]
    %v224 = vld [vmem:[%s215 + $0x40] sm:$0xff]
    %v225 = vld [vmem:[%s215 + $0x48] sm:$0xff]
    %v226 = vld [vmem:[%s215 + $0x50] sm:$0xff]
    %v227 = vld [vmem:[%s215 + $0x58] sm:$0xff]
    %vm228 = vsmask.f32 7424
    %v229 = vshrl.u32 %v73, 16
    %v231 = vshll.u32 %v73, 16
    %v233 = vrot.slane %v231, 1
    %v234 = vor.u32 %v229, %v233
    %v235 = vshll.u32 %v74, 16
    %v237 = vrot.slane %v235, 1
    %v238 = vsel %vm228, %v234, %v237
    %v239 = vshrl.u32 %v74, 16
    %v241 = vor.u32 %v239, %v237
    %v254 = vunpack.c.l.b16 %v216
    %v255 = vunpack.c.h.b16 %v216
    %v256 = vunpack.c.l.b16 %v217
    %v257 = vunpack.c.h.b16 %v217
    %v258 = vunpack.c.l.b16 %v218
    %v259 = vunpack.c.h.b16 %v218
    %v260 = vunpack.c.l.b16 %v219
    %v261 = vunpack.c.h.b16 %v219
    %v262 = vunpack.c.l.b16 %v220
    %v263 = vunpack.c.h.b16 %v220
    %v264 = vunpack.c.l.b16 %v221
    %v265 = vunpack.c.h.b16 %v221
    %v266 = vunpack.c.l.b16 %v222
    %v267 = vunpack.c.h.b16 %v222
    %v268 = vunpack.c.l.b16 %v223
    %v269 = vunpack.c.h.b16 %v223
    %v270 = vunpack.c.l.b16 %v224
    %v271 = vunpack.c.h.b16 %v224
    %v272 = vunpack.c.l.b16 %v225
    %v273 = vunpack.c.h.b16 %v225
    %v274 = vunpack.c.l.b16 %v226
    %v275 = vunpack.c.h.b16 %v226
    %v276 = vunpack.c.l.b16 %v227
    %v277 = vunpack.c.h.b16 %v227
    %v278 = vpack.c.b16 %v256, %v254
    %v279 = vpack.c.b16 %v257, %v255
    %v280 = vpack.c.b16 %v260, %v258
    %v281 = vpack.c.b16 %v261, %v259
    %v282 = vpack.c.b16 %v264, %v262
    %v283 = vpack.c.b16 %v265, %v263
    %v284 = vpack.c.b16 %v268, %v266
    %v285 = vpack.c.b16 %v269, %v267
    %v286 = vpack.c.b16 %v272, %v270
    %v287 = vpack.c.b16 %v273, %v271
    %v288 = vpack.c.b16 %v276, %v274
    %v289 = vpack.c.b16 %v277, %v275
    %v303 = vsel %vm147, %v238, 0
    %v306 = vsel %vm147, %v241, 0
    %308 = vmatprep.subr.bf16.mxu0 %v279
    %309 = vmatpush1.bf16.msra.mxu0 %v278
    %310 = vmatprep.subr.bf16.mxu0 %v281
    %311 = vmatpush1.bf16.msra.mxu0 %v280
    %312 = vmatprep.subr.bf16.mxu0 %v283
    %313 = vmatpush1.bf16.msra.mxu0 %v282
    %314 = vmatprep.subr.bf16.mxu0 %v285
    %315 = vmatpush1.bf16.msra.mxu0 %v284
    %316 = vmatprep.subr.bf16.mxu0 %v287
    %317 = vmatpush1.bf16.msra.mxu0 %v286
    %318 = vmatprep.subr.bf16.mxu0 %v289
    %319 = vmatpush1.bf16.msra.mxu0 %v288
    %320 = vmatprep.subr.bf16.mxu0 0
    %321 = vmatpush1.bf16.msra.mxu0 0
    %322 = vmatprep.subr.bf16.mxu0 0
    %323 = vmatpush1.bf16.msra.mxu0 0
    %324 = vmatprep.subr.bf16.mxu0 0
    %325 = vmatpush1.bf16.msra.mxu0 0
    %326 = vmatprep.subr.bf16.mxu0 0
    %327 = vmatpush1.bf16.msra.mxu0 0
    %328 = vmatprep.subr.bf16.mxu0 0
    %329 = vmatpush1.bf16.msra.mxu0 0
    %330 = vmatprep.subr.bf16.mxu0 0
    %331 = vmatpush1.bf16.msra.mxu0 0
    %332 = vmatprep.subr.bf16.mxu0 0
    %333 = vmatpush1.bf16.msra.mxu0 0
    %334 = vmatprep.subr.bf16.mxu0 0
    %335 = vmatpush1.bf16.msra.mxu0 0
    %336 = vmatprep.subr.bf16.mxu0 0
    %337 = vmatpush1.bf16.msra.mxu0 0
    %338 = vmatprep.subr.bf16.mxu0 0
    %339 = vmatpush1.bf16.msra.mxu0 0
    %340 = vmatprep.mubr.bf16.mxu0 0
    %341 = vmatmul.mubr.bf16.gmra.mrb[0].mxu0 %v303
    %v342 = vpop.f32.mrb[0].mxu0
    %v343 = vadd.f32 0.0, %v342
    %v344 = vpop.f32.mrb[0].mxu0
    %v345 = vadd.f32 0.0, %v344
    %v346 = vpop.f32.mrb[0].mxu0
    %v347 = vadd.f32 0.0, %v346
    %v348 = vpop.f32.mrb[0].mxu0
    %v349 = vadd.f32 0.0, %v348
    %350 = vmatprep.mubr.bf16.mxu0 0
    %351 = vmatmul.mubr.bf16.gmra.mrb[0].mxu0 %v306
    %v352 = vpop.f32.mrb[0].mxu0
    %v353 = vadd.f32 0.0, %v352
    %v354 = vpop.f32.mrb[0].mxu0
    %v355 = vadd.f32 0.0, %v354
    %v356 = vpop.f32.mrb[0].mxu0
    %v357 = vadd.f32 0.0, %v356
    %v358 = vpop.f32.mrb[0].mxu0
    %v359 = vadd.f32 0.0, %v358
    %360 = vdwg.mxu0
    %v361 = vadd.f32 %v207, %v343
    %v362 = vadd.f32 %v208, %v345
    %v363 = vadd.f32 %v209, %v347
    %v364 = vadd.f32 %v210, %v349
    %v365 = vadd.f32 %v211, %v353
    %v366 = vadd.f32 %v212, %v355
    %v367 = vadd.f32 %v213, %v357
    %v368 = vadd.f32 %v214, %v359
    %s369 = scalar_lea.vmem %s1, 192
    %v370 = vld [vmem:[%s369] sm:$0xff]
    %v371 = vld [vmem:[%s369 + $0x8] sm:$0xff]
    %v372 = vld [vmem:[%s369 + $0x10] sm:$0xff]
    %v373 = vld [vmem:[%s369 + $0x18] sm:$0xff]
    %v374 = vld [vmem:[%s369 + $0x20] sm:$0xff]
    %v375 = vld [vmem:[%s369 + $0x28] sm:$0xff]
    %v376 = vld [vmem:[%s369 + $0x30] sm:$0xff]
    %v377 = vld [vmem:[%s369 + $0x38] sm:$0xff]
    %v378 = vld [vmem:[%s369 + $0x40] sm:$0xff]
    %v379 = vld [vmem:[%s369 + $0x48] sm:$0xff]
    %v380 = vld [vmem:[%s369 + $0x50] sm:$0xff]
    %v381 = vld [vmem:[%s369 + $0x58] sm:$0xff]
    %vm384 = vcmask 1046528
    %v385 = vrot.slane %v73, 1
    %v386 = vrot.slane %v74, 1
    %v387 = vsel %vm384, %v385, %v386
    %v400 = vunpack.c.l.b16 %v370
    %v401 = vunpack.c.h.b16 %v370
    %v402 = vunpack.c.l.b16 %v371
    %v403 = vunpack.c.h.b16 %v371
    %v404 = vunpack.c.l.b16 %v372
    %v405 = vunpack.c.h.b16 %v372
    %v406 = vunpack.c.l.b16 %v373
    %v407 = vunpack.c.h.b16 %v373
    %v408 = vunpack.c.l.b16 %v374
    %v409 = vunpack.c.h.b16 %v374
    %v410 = vunpack.c.l.b16 %v375
    %v411 = vunpack.c.h.b16 %v375
    %v412 = vunpack.c.l.b16 %v376
    %v413 = vunpack.c.h.b16 %v376
    %v414 = vunpack.c.l.b16 %v377
    %v415 = vunpack.c.h.b16 %v377
    %v416 = vunpack.c.l.b16 %v378
    %v417 = vunpack.c.h.b16 %v378
    %v418 = vunpack.c.l.b16 %v379
    %v419 = vunpack.c.h.b16 %v379
    %v420 = vunpack.c.l.b16 %v380
    %v421 = vunpack.c.h.b16 %v380
    %v422 = vunpack.c.l.b16 %v381
    %v423 = vunpack.c.h.b16 %v381
    %v424 = vpack.c.b16 %v402, %v400
    %v425 = vpack.c.b16 %v403, %v401
    %v426 = vpack.c.b16 %v406, %v404
    %v427 = vpack.c.b16 %v407, %v405
    %v428 = vpack.c.b16 %v410, %v408
    %v429 = vpack.c.b16 %v411, %v409
    %v430 = vpack.c.b16 %v414, %v412
    %v431 = vpack.c.b16 %v415, %v413
    %v432 = vpack.c.b16 %v418, %v416
    %v433 = vpack.c.b16 %v419, %v417
    %v434 = vpack.c.b16 %v422, %v420
    %v435 = vpack.c.b16 %v423, %v421
    %v449 = vsel %vm147, %v387, 0
    %v452 = vsel %vm147, %v386, 0
    %454 = vmatprep.subr.bf16.mxu0 %v425
    %455 = vmatpush1.bf16.msra.mxu0 %v424
    %456 = vmatprep.subr.bf16.mxu0 %v427
    %457 = vmatpush1.bf16.msra.mxu0 %v426
    %458 = vmatprep.subr.bf16.mxu0 %v429
    %459 = vmatpush1.bf16.msra.mxu0 %v428
    %460 = vmatprep.subr.bf16.mxu0 %v431
    %461 = vmatpush1.bf16.msra.mxu0 %v430
    %462 = vmatprep.subr.bf16.mxu0 %v433
    %463 = vmatpush1.bf16.msra.mxu0 %v432
    %464 = vmatprep.subr.bf16.mxu0 %v435
    %465 = vmatpush1.bf16.msra.mxu0 %v434
    %466 = vmatprep.subr.bf16.mxu0 0
    %467 = vmatpush1.bf16.msra.mxu0 0
    %468 = vmatprep.subr.bf16.mxu0 0
    %469 = vmatpush1.bf16.msra.mxu0 0
    %470 = vmatprep.subr.bf16.mxu0 0
    %471 = vmatpush1.bf16.msra.mxu0 0
    %472 = vmatprep.subr.bf16.mxu0 0
    %473 = vmatpush1.bf16.msra.mxu0 0
    %474 = vmatprep.subr.bf16.mxu0 0
    %475 = vmatpush1.bf16.msra.mxu0 0
    %476 = vmatprep.subr.bf16.mxu0 0
    %477 = vmatpush1.bf16.msra.mxu0 0
    %478 = vmatprep.subr.bf16.mxu0 0
    %479 = vmatpush1.bf16.msra.mxu0 0
    %480 = vmatprep.subr.bf16.mxu0 0
    %481 = vmatpush1.bf16.msra.mxu0 0
    %482 = vmatprep.subr.bf16.mxu0 0
    %483 = vmatpush1.bf16.msra.mxu0 0
    %484 = vmatprep.subr.bf16.mxu0 0
    %485 = vmatpush1.bf16.msra.mxu0 0
    %486 = vmatprep.mubr.bf16.mxu0 0
    %487 = vmatmul.mubr.bf16.gmra.mrb[0].mxu0 %v449
    %v488 = vpop.f32.mrb[0].mxu0
    %v489 = vadd.f32 0.0, %v488
    %v490 = vpop.f32.mrb[0].mxu0
    %v491 = vadd.f32 0.0, %v490
    %v492 = vpop.f32.mrb[0].mxu0
    %v493 = vadd.f32 0.0, %v492
    %v494 = vpop.f32.mrb[0].mxu0
    %v495 = vadd.f32 0.0, %v494
    %496 = vmatprep.mubr.bf16.mxu0 0
    %497 = vmatmul.mubr.bf16.gmra.mrb[0].mxu0 %v452
    %v498 = vpop.f32.mrb[0].mxu0
    %v499 = vadd.f32 0.0, %v498
    %v500 = vpop.f32.mrb[0].mxu0
    %v501 = vadd.f32 0.0, %v500
    %v502 = vpop.f32.mrb[0].mxu0
    %v503 = vadd.f32 0.0, %v502
    %v504 = vpop.f32.mrb[0].mxu0
    %v505 = vadd.f32 0.0, %v504
    %506 = vdwg.mxu0
    %v507 = vadd.f32 %v361, %v489
    %v508 = vadd.f32 %v362, %v491
    %v509 = vadd.f32 %v363, %v493
    %v510 = vadd.f32 %v364, %v495
    %v511 = vadd.f32 %v365, %v499
    %v512 = vadd.f32 %v366, %v501
    %v513 = vadd.f32 %v367, %v503
    %v514 = vadd.f32 %v368, %v505
    %s515 = scalar_lea.vmem %s1, 288
    %v516 = vld [vmem:[%s515] sm:$0xff]
    %v517 = vld [vmem:[%s515 + $0x8] sm:$0xff]
    %v518 = vld [vmem:[%s515 + $0x10] sm:$0xff]
    %v519 = vld [vmem:[%s515 + $0x18] sm:$0xff]
    %v520 = vld [vmem:[%s515 + $0x20] sm:$0xff]
    %v521 = vld [vmem:[%s515 + $0x28] sm:$0xff]
    %v522 = vld [vmem:[%s515 + $0x30] sm:$0xff]
    %v523 = vld [vmem:[%s515 + $0x38] sm:$0xff]
    %v524 = vld [vmem:[%s515 + $0x40] sm:$0xff]
    %v525 = vld [vmem:[%s515 + $0x48] sm:$0xff]
    %v526 = vld [vmem:[%s515 + $0x50] sm:$0xff]
    %v527 = vld [vmem:[%s515 + $0x58] sm:$0xff]
    %vm528 = vsmask.f32 6400
    %v529 = vrot.slane %v229, 1
    %v530 = vrot.slane %v231, 2
    %v531 = vor.u32 %v529, %v530
    %v532 = vrot.slane %v239, 1
    %v533 = vrot.slane %v235, 2
    %v534 = vor.u32 %v532, %v533
    %v535 = vsel %vm528, %v531, %v534
    %v548 = vunpack.c.l.b16 %v516
    %v549 = vunpack.c.h.b16 %v516
    %v550 = vunpack.c.l.b16 %v517
    %v551 = vunpack.c.h.b16 %v517
    %v552 = vunpack.c.l.b16 %v518
    %v553 = vunpack.c.h.b16 %v518
    %v554 = vunpack.c.l.b16 %v519
    %v555 = vunpack.c.h.b16 %v519
    %v556 = vunpack.c.l.b16 %v520
    %v557 = vunpack.c.h.b16 %v520
    %v558 = vunpack.c.l.b16 %v521
    %v559 = vunpack.c.h.b16 %v521
    %v560 = vunpack.c.l.b16 %v522
    %v561 = vunpack.c.h.b16 %v522
    %v562 = vunpack.c.l.b16 %v523
    %v563 = vunpack.c.h.b16 %v523
    %v564 = vunpack.c.l.b16 %v524
    %v565 = vunpack.c.h.b16 %v524
    %v566 = vunpack.c.l.b16 %v525
    %v567 = vunpack.c.h.b16 %v525
    %v568 = vunpack.c.l.b16 %v526
    %v569 = vunpack.c.h.b16 %v526
    %v570 = vunpack.c.l.b16 %v527
    %v571 = vunpack.c.h.b16 %v527
    %v572 = vpack.c.b16 %v550, %v548
    %v573 = vpack.c.b16 %v551, %v549
    %v574 = vpack.c.b16 %v554, %v552
    %v575 = vpack.c.b16 %v555, %v553
    %v576 = vpack.c.b16 %v558, %v556
    %v577 = vpack.c.b16 %v559, %v557
    %v578 = vpack.c.b16 %v562, %v560
    %v579 = vpack.c.b16 %v563, %v561
    %v580 = vpack.c.b16 %v566, %v564
    %v581 = vpack.c.b16 %v567, %v565
    %v582 = vpack.c.b16 %v570, %v568
    %v583 = vpack.c.b16 %v571, %v569
    %v597 = vsel %vm147, %v535, 0
    %v600 = vsel %vm147, %v534, 0
    %602 = vmatprep.subr.bf16.mxu0 %v573
    %603 = vmatpush1.bf16.msra.mxu0 %v572
    %604 = vmatprep.subr.bf16.mxu0 %v575
    %605 = vmatpush1.bf16.msra.mxu0 %v574
    %606 = vmatprep.subr.bf16.mxu0 %v577
    %607 = vmatpush1.bf16.msra.mxu0 %v576
    %608 = vmatprep.subr.bf16.mxu0 %v579
    %609 = vmatpush1.bf16.msra.mxu0 %v578
    %610 = vmatprep.subr.bf16.mxu0 %v581
    %611 = vmatpush1.bf16.msra.mxu0 %v580
    %612 = vmatprep.subr.bf16.mxu0 %v583
    %613 = vmatpush1.bf16.msra.mxu0 %v582
    %614 = vmatprep.subr.bf16.mxu0 0
    %615 = vmatpush1.bf16.msra.mxu0 0
    %616 = vmatprep.subr.bf16.mxu0 0
    %617 = vmatpush1.bf16.msra.mxu0 0
    %618 = vmatprep.subr.bf16.mxu0 0
    %619 = vmatpush1.bf16.msra.mxu0 0
    %620 = vmatprep.subr.bf16.mxu0 0
    %621 = vmatpush1.bf16.msra.mxu0 0
    %622 = vmatprep.subr.bf16.mxu0 0
    %623 = vmatpush1.bf16.msra.mxu0 0
    %624 = vmatprep.subr.bf16.mxu0 0
    %625 = vmatpush1.bf16.msra.mxu0 0
    %626 = vmatprep.subr.bf16.mxu0 0
    %627 = vmatpush1.bf16.msra.mxu0 0
    %628 = vmatprep.subr.bf16.mxu0 0
    %629 = vmatpush1.bf16.msra.mxu0 0
    %630 = vmatprep.subr.bf16.mxu0 0
    %631 = vmatpush1.bf16.msra.mxu0 0
    %632 = vmatprep.subr.bf16.mxu0 0
    %633 = vmatpush1.bf16.msra.mxu0 0
    %634 = vmatprep.mubr.bf16.mxu0 0
    %635 = vmatmul.mubr.bf16.gmra.mrb[0].mxu0 %v597
    %v636 = vpop.f32.mrb[0].mxu0
    %v637 = vadd.f32 0.0, %v636
    %v638 = vpop.f32.mrb[0].mxu0
    %v639 = vadd.f32 0.0, %v638
    %v640 = vpop.f32.mrb[0].mxu0
    %v641 = vadd.f32 0.0, %v640
    %v642 = vpop.f32.mrb[0].mxu0
    %v643 = vadd.f32 0.0, %v642
    %644 = vmatprep.mubr.bf16.mxu0 0
    %645 = vmatmul.mubr.bf16.gmra.mrb[0].mxu0 %v600
    %v646 = vpop.f32.mrb[0].mxu0
    %v647 = vadd.f32 0.0, %v646
    %v648 = vpop.f32.mrb[0].mxu0
    %v649 = vadd.f32 0.0, %v648
    %v650 = vpop.f32.mrb[0].mxu0
    %v651 = vadd.f32 0.0, %v650
    %v652 = vpop.f32.mrb[0].mxu0
    %v653 = vadd.f32 0.0, %v652
    %654 = vdwg.mxu0
    %v655 = vadd.f32 %v507, %v637
    %v656 = vadd.f32 %v508, %v639
    %v657 = vadd.f32 %v509, %v641
    %v658 = vadd.f32 %v510, %v643
    %v659 = vadd.f32 %v511, %v647
    %v660 = vadd.f32 %v512, %v649
    %v661 = vadd.f32 %v513, %v651
    %v662 = vadd.f32 %v514, %v653
    %s663 = scalar_lea.vmem %s1, 384
    %v664 = vld [vmem:[%s663] sm:$0xff]
    %v665 = vld [vmem:[%s663 + $0x8] sm:$0xff]
    %v666 = vld [vmem:[%s663 + $0x10] sm:$0xff]
    %v667 = vld [vmem:[%s663 + $0x18] sm:$0xff]
    %v668 = vld [vmem:[%s663 + $0x20] sm:$0xff]
    %v669 = vld [vmem:[%s663 + $0x28] sm:$0xff]
    %v670 = vld [vmem:[%s663 + $0x30] sm:$0xff]
    %v671 = vld [vmem:[%s663 + $0x38] sm:$0xff]
    %v672 = vld [vmem:[%s663 + $0x40] sm:$0xff]
    %v673 = vld [vmem:[%s663 + $0x48] sm:$0xff]
    %v674 = vld [vmem:[%s663 + $0x50] sm:$0xff]
    %v675 = vld [vmem:[%s663 + $0x58] sm:$0xff]
    %vm676 = vcmask 1045504
    %v677 = vrot.slane %v73, 2
    %v678 = vrot.slane %v74, 2
    %v679 = vsel %vm676, %v677, %v678
    %v692 = vunpack.c.l.b16 %v664
    %v693 = vunpack.c.h.b16 %v664
    %v694 = vunpack.c.l.b16 %v665
    %v695 = vunpack.c.h.b16 %v665
    %v696 = vunpack.c.l.b16 %v666
    %v697 = vunpack.c.h.b16 %v666
    %v698 = vunpack.c.l.b16 %v667
    %v699 = vunpack.c.h.b16 %v667
    %v700 = vunpack.c.l.b16 %v668
    %v701 = vunpack.c.h.b16 %v668
    %v702 = vunpack.c.l.b16 %v669
    %v703 = vunpack.c.h.b16 %v669
    %v704 = vunpack.c.l.b16 %v670
    %v705 = vunpack.c.h.b16 %v670
    %v706 = vunpack.c.l.b16 %v671
    %v707 = vunpack.c.h.b16 %v671
    %v708 = vunpack.c.l.b16 %v672
    %v709 = vunpack.c.h.b16 %v672
    %v710 = vunpack.c.l.b16 %v673
    %v711 = vunpack.c.h.b16 %v673
    %v712 = vunpack.c.l.b16 %v674
    %v713 = vunpack.c.h.b16 %v674
    %v714 = vunpack.c.l.b16 %v675
    %v715 = vunpack.c.h.b16 %v675
    %v716 = vpack.c.b16 %v694, %v692
    %v717 = vpack.c.b16 %v695, %v693
    %v718 = vpack.c.b16 %v698, %v696
    %v719 = vpack.c.b16 %v699, %v697
    %v720 = vpack.c.b16 %v702, %v700
    %v721 = vpack.c.b16 %v703, %v701
    %v722 = vpack.c.b16 %v706, %v704
    %v723 = vpack.c.b16 %v707, %v705
    %v724 = vpack.c.b16 %v710, %v708
    %v725 = vpack.c.b16 %v711, %v709
    %v726 = vpack.c.b16 %v714, %v712
    %v727 = vpack.c.b16 %v715, %v713
    %v741 = vsel %vm147, %v679, 0
    %v744 = vsel %vm147, %v678, 0
    %746 = vmatprep.subr.bf16.mxu0 %v717
    %747 = vmatpush1.bf16.msra.mxu0 %v716
    %748 = vmatprep.subr.bf16.mxu0 %v719
    %749 = vmatpush1.bf16.msra.mxu0 %v718
    %750 = vmatprep.subr.bf16.mxu0 %v721
    %751 = vmatpush1.bf16.msra.mxu0 %v720
    %752 = vmatprep.subr.bf16.mxu0 %v723
    %753 = vmatpush1.bf16.msra.mxu0 %v722
    %754 = vmatprep.subr.bf16.mxu0 %v725
    %755 = vmatpush1.bf16.msra.mxu0 %v724
    %756 = vmatprep.subr.bf16.mxu0 %v727
    %757 = vmatpush1.bf16.msra.mxu0 %v726
    %758 = vmatprep.subr.bf16.mxu0 0
    %759 = vmatpush1.bf16.msra.mxu0 0
    %760 = vmatprep.subr.bf16.mxu0 0
    %761 = vmatpush1.bf16.msra.mxu0 0
    %762 = vmatprep.subr.bf16.mxu0 0
    %763 = vmatpush1.bf16.msra.mxu0 0
    %764 = vmatprep.subr.bf16.mxu0 0
    %765 = vmatpush1.bf16.msra.mxu0 0
    %766 = vmatprep.subr.bf16.mxu0 0
    %767 = vmatpush1.bf16.msra.mxu0 0
    %768 = vmatprep.subr.bf16.mxu0 0
    %769 = vmatpush1.bf16.msra.mxu0 0
    %770 = vmatprep.subr.bf16.mxu0 0
    %771 = vmatpush1.bf16.msra.mxu0 0
    %772 = vmatprep.subr.bf16.mxu0 0
    %773 = vmatpush1.bf16.msra.mxu0 0
    %774 = vmatprep.subr.bf16.mxu0 0
    %775 = vmatpush1.bf16.msra.mxu0 0
    %776 = vmatprep.subr.bf16.mxu0 0
    %777 = vmatpush1.bf16.msra.mxu0 0
    %778 = vmatprep.mubr.bf16.mxu0 0
    %779 = vmatmul.mubr.bf16.gmra.mrb[0].mxu0 %v741
    %v780 = vpop.f32.mrb[0].mxu0
    %v781 = vadd.f32 0.0, %v780
    %v782 = vpop.f32.mrb[0].mxu0
    %v783 = vadd.f32 0.0, %v782
    %v784 = vpop.f32.mrb[0].mxu0
    %v785 = vadd.f32 0.0, %v784
    %v786 = vpop.f32.mrb[0].mxu0
    %v787 = vadd.f32 0.0, %v786
    %788 = vmatprep.mubr.bf16.mxu0 0
    %789 = vmatmul.mubr.bf16.gmra.mrb[0].mxu0 %v744
    %v790 = vpop.f32.mrb[0].mxu0
    %v791 = vadd.f32 0.0, %v790
    %v792 = vpop.f32.mrb[0].mxu0
    %v793 = vadd.f32 0.0, %v792
    %v794 = vpop.f32.mrb[0].mxu0
    %v795 = vadd.f32 0.0, %v794
    %v796 = vpop.f32.mrb[0].mxu0
    %v797 = vadd.f32 0.0, %v796
    %798 = vdwg.mxu0
    %v799 = vadd.f32 %v655, %v781
    %v800 = vadd.f32 %v656, %v783
    %v801 = vadd.f32 %v657, %v785
    %v802 = vadd.f32 %v658, %v787
    %v803 = vadd.f32 %v659, %v791
    %v804 = vadd.f32 %v660, %v793
    %v805 = vadd.f32 %v661, %v795
    %v806 = vadd.f32 %v662, %v797
    %v807 = vmax.f32 %v799, 0.0
    %v808 = vmax.f32 %v800, 0.0
    %v809 = vmax.f32 %v801, 0.0
    %v810 = vmax.f32 %v802, 0.0
    %v811 = vmax.f32 %v803, 0.0
    %v812 = vmax.f32 %v804, 0.0
    %v813 = vmax.f32 %v805, 0.0
    %v814 = vmax.f32 %v806, 0.0
    %vm823 = vcmask 1046528
    %v824 = vrot.slane %v807, 1
    %v825 = vrot.slane %v809, 1
    %v826 = vsel %vm823, %v824, %v825
    %v827 = vrot.slane %v808, 1
    %v828 = vrot.slane %v810, 1
    %v829 = vsel %vm823, %v827, %v828
    %v830 = vrot.slane %v811, 1
    %v831 = vsel %vm823, %v825, %v830
    %v832 = vrot.slane %v812, 1
    %v833 = vsel %vm823, %v828, %v832
    %v834 = vrot.slane %v813, 1
    %v835 = vsel %vm823, %v830, %v834
    %v836 = vrot.slane %v814, 1
    %v837 = vsel %vm823, %v832, %v836
    %v846 = vmax.f32 %v807, %v826
    %v847 = vmax.f32 %v808, %v829
    %v848 = vmax.f32 %v809, %v831
    %v849 = vmax.f32 %v810, %v833
    %v850 = vmax.f32 %v811, %v835
    %v851 = vmax.f32 %v812, %v837
    %v852 = vmax.f32 %v813, %v834
    %v853 = vmax.f32 %v814, %v836
    %vm854 = vcmask 220160
    %v856 = vsel %vm854, %v67, 0
    %v859 = vsel %vm854, %v68, 0
    %vm861 = vcmask 1042432
    %v863 = vsel %vm861, %v852, 0
    %v866 = vsel %vm861, %v853, 0
    %868 = vmatprep.subr.mxu0 %v847
    %869 = vmatpush1.msra.mxu0 %v846
    %870 = vmatprep.subr.mxu0 %v849
    %871 = vmatpush1.msra.mxu0 %v848
    %872 = vmatprep.subr.mxu0 %v851
    %873 = vmatpush1.msra.mxu0 %v850
    %874 = vmatprep.subr.mxu0 %v866
    %875 = vmatpush1.msra.mxu0 %v863
    %876 = vmatprep.subr.mxu0 0.0
    %877 = vmatpush1.msra.mxu0 0.0
    %878 = vmatprep.subr.mxu0 0.0
    %879 = vmatpush1.msra.mxu0 0.0
    %880 = vmatprep.subr.mxu0 0.0
    %881 = vmatpush1.msra.mxu0 0.0
    %882 = vmatprep.subr.mxu0 0.0
    %883 = vmatpush1.msra.mxu0 0.0
    %884 = vmatprep.subr.mxu0 0.0
    %885 = vmatpush1.msra.mxu0 0.0
    %886 = vmatprep.subr.mxu0 0.0
    %887 = vmatpush1.msra.mxu0 0.0
    %888 = vmatprep.subr.mxu0 0.0
    %889 = vmatpush1.msra.mxu0 0.0
    %890 = vmatprep.subr.mxu0 0.0
    %891 = vmatpush1.msra.mxu0 0.0
    %892 = vmatprep.subr.mxu0 0.0
    %893 = vmatpush1.msra.mxu0 0.0
    %894 = vmatprep.subr.mxu0 0.0
    %895 = vmatpush1.msra.mxu0 0.0
    %896 = vmatprep.subr.mxu0 0.0
    %897 = vmatpush1.msra.mxu0 0.0
    %898 = vmatprep.subr.mxu0 0.0
    %899 = vmatpush1.msra.mxu0 0.0
    %900 = vmatprep.subr.mxu0 0.0
    %901 = vmatpush1.msra.mxu0 0.0
    %902 = vmatprep.subr.mxu0 0.0
    %903 = vmatpush1.msra.mxu0 0.0
    %904 = vmatprep.subr.mxu0 0.0
    %905 = vmatpush1.msra.mxu0 0.0
    %906 = vmatprep.subr.mxu0 0.0
    %907 = vmatpush1.msra.mxu0 0.0
    %908 = vmatprep.subr.mxu0 0.0
    %909 = vmatpush1.msra.mxu0 0.0
    %910 = vmatprep.subr.mxu0 0.0
    %911 = vmatpush1.msra.mxu0 0.0
    %912 = vmatprep.subr.mxu0 0.0
    %913 = vmatpush1.msra.mxu0 0.0
    %914 = vmatprep.subr.mxu0 0.0
    %915 = vmatpush1.msra.mxu0 0.0
    %916 = vmatprep.subr.mxu0 0.0
    %917 = vmatpush1.msra.mxu0 0.0
    %918 = vmatprep.subr.mxu0 0.0
    %919 = vmatpush1.msra.mxu0 0.0
    %920 = vmatprep.subr.mxu0 0.0
    %921 = vmatpush1.msra.mxu0 0.0
    %922 = vmatprep.subr.mxu0 0.0
    %923 = vmatpush1.msra.mxu0 0.0
    %924 = vmatprep.subr.mxu0 0.0
    %925 = vmatpush1.msra.mxu0 0.0
    %926 = vmatprep.subr.mxu0 0.0
    %927 = vmatpush1.msra.mxu0 0.0
    %928 = vmatprep.subr.mxu0 0.0
    %929 = vmatpush1.msra.mxu0 0.0
    %930 = vmatprep.subr.mxu0 0.0
    %931 = vmatpush1.msra.mxu0 0.0
    %932 = vmatprep.mubr.f32.mxu0 0.0
    %933 = vmatmul.mubr.f32.gmra.mrb[0].mxu0 %v856
    %v934 = vpop.f32.mrb[0].mxu0
    %v935 = vadd.f32 0.0, %v934
    %v936 = vpop.f32.mrb[0].mxu0
    %v937 = vadd.f32 0.0, %v936
    %938 = vmatprep.mubr.f32.mxu0 0.0
    %939 = vmatmul.mubr.f32.gmra.mrb[0].mxu0 %v859
    %v940 = vpop.f32.mrb[0].mxu0
    %v941 = vadd.f32 0.0, %v940
    %v942 = vpop.f32.mrb[0].mxu0
    %v943 = vadd.f32 0.0, %v942
    %944 = vdwg.mxu0
    %949 = vrot.lane.b32.xlu0 %v935, 122
    %v950 = vpop.permute.xlu0 %949
    %951 = vrot.lane.b32.xlu0 %v937, 122
    %v952 = vpop.permute.xlu0 %951
    %953 = vrot.lane.b32.xlu0 %v941, 122
    %v954 = vpop.permute.xlu0 %953
    %955 = vrot.lane.b32.xlu0 %v943, 122
    %v956 = vpop.permute.xlu0 %955
    %vm957 = vcmask 998400
    %v958 = vsel %vm957, %v950, %v952
    %v959 = vsel %vm957, %v954, %v956
    %v964 = vmax.f32 %v935, %v958
    %v965 = vmax.f32 %v937, %v952
    %v966 = vmax.f32 %v941, %v959
    %v967 = vmax.f32 %v943, %v956
    %v968 = vpack.c.bf16 %v966, %v964
    %v969 = vpack.c.bf16 %v967, %v965
    %v970 = vld [vmem:[%s4] sm:$0xff]
    %v971 = vld [vmem:[%s4 + $0x8] sm:$0xff]
    %v972 = vld [vmem:[%s4 + $0x10] sm:$0xff]
    %v973 = vld [vmem:[%s4 + $0x18] sm:$0xff]
    %v974 = vld [vmem:[%s4 + $0x20] sm:$0xff]
    %v975 = vld [vmem:[%s4 + $0x28] sm:$0xff]
    %v976 = vld [vmem:[%s4 + $0x30] sm:$0xff]
    %v977 = vld [vmem:[%s4 + $0x38] sm:$0xff]
    %v978 = vld [vmem:[%s4 + $0x40] sm:$0xff]
    %v979 = vld [vmem:[%s4 + $0x48] sm:$0xff]
    %v980 = vld [vmem:[%s4 + $0x50] sm:$0xff]
    %v981 = vld [vmem:[%s4 + $0x58] sm:$0xff]
    %v982 = vld [vmem:[%s4 + $0x60] sm:$0xff]
    %v983 = vld [vmem:[%s4 + $0x68] sm:$0xff]
    %v984 = vld [vmem:[%s4 + $0x70] sm:$0xff]
    %v985 = vld [vmem:[%s4 + $0x78] sm:$0xff]
    %v986 = vld [vmem:[%s4 + $0x80] sm:$0xff]
    %v987 = vld [vmem:[%s4 + $0x88] sm:$0xff]
    %v988 = vld [vmem:[%s4 + $0x90] sm:$0xff]
    %v989 = vld [vmem:[%s4 + $0x98] sm:$0xff]
    %v990 = vld [vmem:[%s4 + $0xa0] sm:$0x11]
    %v1012 = vunpack.c.l.b16 %v970
    %v1013 = vunpack.c.h.b16 %v970
    %v1014 = vunpack.c.l.b16 %v971
    %v1015 = vunpack.c.h.b16 %v971
    %v1016 = vunpack.c.l.b16 %v972
    %v1017 = vunpack.c.h.b16 %v972
    %v1018 = vunpack.c.l.b16 %v973
    %v1019 = vunpack.c.h.b16 %v973
    %v1020 = vunpack.c.l.b16 %v974
    %v1021 = vunpack.c.h.b16 %v974
    %v1022 = vunpack.c.l.b16 %v975
    %v1023 = vunpack.c.h.b16 %v975
    %v1024 = vunpack.c.l.b16 %v976
    %v1025 = vunpack.c.h.b16 %v976
    %v1026 = vunpack.c.l.b16 %v977
    %v1027 = vunpack.c.h.b16 %v977
    %v1028 = vunpack.c.l.b16 %v978
    %v1029 = vunpack.c.h.b16 %v978
    %v1030 = vunpack.c.l.b16 %v979
    %v1031 = vunpack.c.h.b16 %v979
    %v1032 = vunpack.c.l.b16 %v980
    %v1033 = vunpack.c.h.b16 %v980
    %v1034 = vunpack.c.l.b16 %v981
    %v1035 = vunpack.c.h.b16 %v981
    %v1036 = vunpack.c.l.b16 %v982
    %v1037 = vunpack.c.h.b16 %v982
    %v1038 = vunpack.c.l.b16 %v983
    %v1039 = vunpack.c.h.b16 %v983
    %v1040 = vunpack.c.l.b16 %v984
    %v1041 = vunpack.c.h.b16 %v984
    %v1042 = vunpack.c.l.b16 %v985
    %v1043 = vunpack.c.h.b16 %v985
    %v1044 = vunpack.c.l.b16 %v986
    %v1045 = vunpack.c.h.b16 %v986
    %v1046 = vunpack.c.l.b16 %v987
    %v1047 = vunpack.c.h.b16 %v987
    %v1048 = vunpack.c.l.b16 %v988
    %v1049 = vunpack.c.h.b16 %v988
    %v1050 = vunpack.c.l.b16 %v989
    %v1051 = vunpack.c.h.b16 %v989
    %v1052 = vunpack.c.l.b16 %v990
    %v1053 = vunpack.c.h.b16 %v990
    %v1054 = vpack.c.b16 %v1014, %v1012
    %v1055 = vpack.c.b16 %v1015, %v1013
    %v1056 = vpack.c.b16 %v1018, %v1016
    %v1057 = vpack.c.b16 %v1019, %v1017
    %v1058 = vpack.c.b16 %v1022, %v1020
    %v1059 = vpack.c.b16 %v1023, %v1021
    %v1060 = vpack.c.b16 %v1026, %v1024
    %v1061 = vpack.c.b16 %v1027, %v1025
    %v1062 = vpack.c.b16 %v1030, %v1028
    %v1063 = vpack.c.b16 %v1031, %v1029
    %v1064 = vpack.c.b16 %v1034, %v1032
    %v1065 = vpack.c.b16 %v1035, %v1033
    %v1066 = vpack.c.b16 %v1038, %v1036
    %v1067 = vpack.c.b16 %v1039, %v1037
    %v1068 = vpack.c.b16 %v1042, %v1040
    %v1069 = vpack.c.b16 %v1043, %v1041
    %v1070 = vpack.c.b16 %v1046, %v1044
    %v1071 = vpack.c.b16 %v1047, %v1045
    %v1072 = vpack.c.b16 %v1050, %v1048
    %v1073 = vpack.c.b16 %v1051, %v1049
    %v1074 = vpack.c.b16 %v1052, %v1052
    %v1075 = vpack.c.b16 %v1053, %v1053
    %vm1096 = vcmask 277504
    %v1098 = vsel %vm1096, %v969, 0
    %vm1100 = vcmask 1040384
    %v1102 = vsel %vm1100, %v1074, 0
    %v1105 = vsel %vm1100, %v1075, 0
    %1107 = vmatprep.subr.bf16.mxu0 %v1055
    %1108 = vmatpush1.bf16.msra.mxu0 %v1054
    %1109 = vmatprep.subr.bf16.mxu0 %v1057
    %1110 = vmatpush1.bf16.msra.mxu0 %v1056
    %1111 = vmatprep.subr.bf16.mxu0 %v1059
    %1112 = vmatpush1.bf16.msra.mxu0 %v1058
    %1113 = vmatprep.subr.bf16.mxu0 %v1061
    %1114 = vmatpush1.bf16.msra.mxu0 %v1060
    %1115 = vmatprep.subr.bf16.mxu0 %v1063
    %1116 = vmatpush1.bf16.msra.mxu0 %v1062
    %1117 = vmatprep.subr.bf16.mxu0 %v1065
    %1118 = vmatpush1.bf16.msra.mxu0 %v1064
    %1119 = vmatprep.subr.bf16.mxu0 %v1067
    %1120 = vmatpush1.bf16.msra.mxu0 %v1066
    %1121 = vmatprep.subr.bf16.mxu0 %v1069
    %1122 = vmatpush1.bf16.msra.mxu0 %v1068
    %1123 = vmatprep.subr.bf16.mxu0 %v1071
    %1124 = vmatpush1.bf16.msra.mxu0 %v1070
    %1125 = vmatprep.subr.bf16.mxu0 %v1073
    %1126 = vmatpush1.bf16.msra.mxu0 %v1072
    %1127 = vmatprep.subr.bf16.mxu0 %v1105
    %1128 = vmatpush1.bf16.msra.mxu0 %v1102
    %1129 = vmatprep.subr.bf16.mxu0 0
    %1130 = vmatpush1.bf16.msra.mxu0 0
    %1131 = vmatprep.subr.bf16.mxu0 0
    %1132 = vmatpush1.bf16.msra.mxu0 0
    %1133 = vmatprep.subr.bf16.mxu0 0
    %1134 = vmatpush1.bf16.msra.mxu0 0
    %1135 = vmatprep.subr.bf16.mxu0 0
    %1136 = vmatpush1.bf16.msra.mxu0 0
    %1137 = vmatprep.subr.bf16.mxu0 0
    %1138 = vmatpush1.bf16.msra.mxu0 0
    %1139 = vmatprep.mubr.bf16.mxu0 %v1098
    %1140 = vmatmul.mubr.bf16.gmra.mrb[0].mxu0 %v968
    %v1141 = vpop.f32.mrb[0].mxu0
    %v1142 = vadd.f32 0.0, %v1141
    %v1143 = vpop.f32.mrb[0].mxu0
    %v1144 = vadd.f32 0.0, %v1143
    %v1145 = vpop.f32.mrb[0].mxu0
    %v1146 = vadd.f32 0.0, %v1145
    %v1147 = vpop.f32.mrb[0].mxu0
    %v1148 = vadd.f32 0.0, %v1147
    %1149 = vdwg.mxu0
    %v1150 = vadd.f32 %v60, %v1142
    %v1151 = vadd.f32 %v64, %v1144
    %v1152 = vadd.f32 %v60, %v1146
    %v1153 = vadd.f32 %v64, %v1148
    %s1154 = scalar_lea.vmem %s4, 168
    %v1155 = vld [vmem:[%s1154] sm:$0xff]
    %v1156 = vld [vmem:[%s1154 + $0x8] sm:$0xff]
    %v1157 = vld [vmem:[%s1154 + $0x10] sm:$0xff]
    %v1158 = vld [vmem:[%s1154 + $0x18] sm:$0xff]
    %v1159 = vld [vmem:[%s1154 + $0x20] sm:$0xff]
    %v1160 = vld [vmem:[%s1154 + $0x28] sm:$0xff]
    %v1161 = vld [vmem:[%s1154 + $0x30] sm:$0xff]
    %v1162 = vld [vmem:[%s1154 + $0x38] sm:$0xff]
    %v1163 = vld [vmem:[%s1154 + $0x40] sm:$0xff]
    %v1164 = vld [vmem:[%s1154 + $0x48] sm:$0xff]
    %v1165 = vld [vmem:[%s1154 + $0x50] sm:$0xff]
    %v1166 = vld [vmem:[%s1154 + $0x58] sm:$0xff]
    %v1167 = vld [vmem:[%s1154 + $0x60] sm:$0xff]
    %v1168 = vld [vmem:[%s1154 + $0x68] sm:$0xff]
    %v1169 = vld [vmem:[%s1154 + $0x70] sm:$0xff]
    %v1170 = vld [vmem:[%s1154 + $0x78] sm:$0xff]
    %v1171 = vld [vmem:[%s1154 + $0x80] sm:$0xff]
    %v1172 = vld [vmem:[%s1154 + $0x88] sm:$0xff]
    %v1173 = vld [vmem:[%s1154 + $0x90] sm:$0xff]
    %v1174 = vld [vmem:[%s1154 + $0x98] sm:$0xff]
    %v1175 = vld [vmem:[%s1154 + $0xa0] sm:$0x11]
    %v1177 = vshrl.u32 %v968, 16
    %v1179 = vshll.u32 %v968, 16
    %v1181 = vrot.slane %v1179, 1
    %v1182 = vor.u32 %v1177, %v1181
    %v1183 = vshrl.u32 %v969, 16
    %v1185 = vshll.u32 %v969, 16
    %v1187 = vrot.slane %v1185, 1
    %v1188 = vor.u32 %v1183, %v1187
    %v1211 = vunpack.c.l.b16 %v1155
    %v1212 = vunpack.c.h.b16 %v1155
    %v1213 = vunpack.c.l.b16 %v1156
    %v1214 = vunpack.c.h.b16 %v1156
    %v1215 = vunpack.c.l.b16 %v1157
    %v1216 = vunpack.c.h.b16 %v1157
    %v1217 = vunpack.c.l.b16 %v1158
    %v1218 = vunpack.c.h.b16 %v1158
    %v1219 = vunpack.c.l.b16 %v1159
    %v1220 = vunpack.c.h.b16 %v1159
    %v1221 = vunpack.c.l.b16 %v1160
    %v1222 = vunpack.c.h.b16 %v1160
    %v1223 = vunpack.c.l.b16 %v1161
    %v1224 = vunpack.c.h.b16 %v1161
    %v1225 = vunpack.c.l.b16 %v1162
    %v1226 = vunpack.c.h.b16 %v1162
    %v1227 = vunpack.c.l.b16 %v1163
    %v1228 = vunpack.c.h.b16 %v1163
    %v1229 = vunpack.c.l.b16 %v1164
    %v1230 = vunpack.c.h.b16 %v1164
    %v1231 = vunpack.c.l.b16 %v1165
    %v1232 = vunpack.c.h.b16 %v1165
    %v1233 = vunpack.c.l.b16 %v1166
    %v1234 = vunpack.c.h.b16 %v1166
    %v1235 = vunpack.c.l.b16 %v1167
    %v1236 = vunpack.c.h.b16 %v1167
    %v1237 = vunpack.c.l.b16 %v1168
    %v1238 = vunpack.c.h.b16 %v1168
    %v1239 = vunpack.c.l.b16 %v1169
    %v1240 = vunpack.c.h.b16 %v1169
    %v1241 = vunpack.c.l.b16 %v1170
    %v1242 = vunpack.c.h.b16 %v1170
    %v1243 = vunpack.c.l.b16 %v1171
    %v1244 = vunpack.c.h.b16 %v1171
    %v1245 = vunpack.c.l.b16 %v1172
    %v1246 = vunpack.c.h.b16 %v1172
    %v1247 = vunpack.c.l.b16 %v1173
    %v1248 = vunpack.c.h.b16 %v1173
    %v1249 = vunpack.c.l.b16 %v1174
    %v1250 = vunpack.c.h.b16 %v1174
    %v1251 = vunpack.c.l.b16 %v1175
    %v1252 = vunpack.c.h.b16 %v1175
    %v1253 = vpack.c.b16 %v1213, %v1211
    %v1254 = vpack.c.b16 %v1214, %v1212
    %v1255 = vpack.c.b16 %v1217, %v1215
    %v1256 = vpack.c.b16 %v1218, %v1216
    %v1257 = vpack.c.b16 %v1221, %v1219
    %v1258 = vpack.c.b16 %v1222, %v1220
    %v1259 = vpack.c.b16 %v1225, %v1223
    %v1260 = vpack.c.b16 %v1226, %v1224
    %v1261 = vpack.c.b16 %v1229, %v1227
    %v1262 = vpack.c.b16 %v1230, %v1228
    %v1263 = vpack.c.b16 %v1233, %v1231
    %v1264 = vpack.c.b16 %v1234, %v1232
    %v1265 = vpack.c.b16 %v1237, %v1235
    %v1266 = vpack.c.b16 %v1238, %v1236
    %v1267 = vpack.c.b16 %v1241, %v1239
    %v1268 = vpack.c.b16 %v1242, %v1240
    %v1269 = vpack.c.b16 %v1245, %v1243
    %v1270 = vpack.c.b16 %v1246, %v1244
    %v1271 = vpack.c.b16 %v1249, %v1247
    %v1272 = vpack.c.b16 %v1250, %v1248
    %v1273 = vpack.c.b16 %v1251, %v1251
    %v1274 = vpack.c.b16 %v1252, %v1252
    %v1296 = vsel %vm1096, %v1188, 0
    %v1299 = vsel %vm1100, %v1273, 0
    %v1302 = vsel %vm1100, %v1274, 0
    %1304 = vmatprep.subr.bf16.mxu0 %v1254
    %1305 = vmatpush1.bf16.msra.mxu0 %v1253
    %1306 = vmatprep.subr.bf16.mxu0 %v1256
    %1307 = vmatpush1.bf16.msra.mxu0 %v1255
    %1308 = vmatprep.subr.bf16.mxu0 %v1258
    %1309 = vmatpush1.bf16.msra.mxu0 %v1257
    %1310 = vmatprep.subr.bf16.mxu0 %v1260
    %1311 = vmatpush1.bf16.msra.mxu0 %v1259
    %1312 = vmatprep.subr.bf16.mxu0 %v1262
    %1313 = vmatpush1.bf16.msra.mxu0 %v1261
    %1314 = vmatprep.subr.bf16.mxu0 %v1264
    %1315 = vmatpush1.bf16.msra.mxu0 %v1263
    %1316 = vmatprep.subr.bf16.mxu0 %v1266
    %1317 = vmatpush1.bf16.msra.mxu0 %v1265
    %1318 = vmatprep.subr.bf16.mxu0 %v1268
    %1319 = vmatpush1.bf16.msra.mxu0 %v1267
    %1320 = vmatprep.subr.bf16.mxu0 %v1270
    %1321 = vmatpush1.bf16.msra.mxu0 %v1269
    %1322 = vmatprep.subr.bf16.mxu0 %v1272
    %1323 = vmatpush1.bf16.msra.mxu0 %v1271
    %1324 = vmatprep.subr.bf16.mxu0 %v1302
    %1325 = vmatpush1.bf16.msra.mxu0 %v1299
    %1326 = vmatprep.subr.bf16.mxu0 0
    %1327 = vmatpush1.bf16.msra.mxu0 0
    %1328 = vmatprep.subr.bf16.mxu0 0
    %1329 = vmatpush1.bf16.msra.mxu0 0
    %1330 = vmatprep.subr.bf16.mxu0 0
    %1331 = vmatpush1.bf16.msra.mxu0 0
    %1332 = vmatprep.subr.bf16.mxu0 0
    %1333 = vmatpush1.bf16.msra.mxu0 0
    %1334 = vmatprep.subr.bf16.mxu0 0
    %1335 = vmatpush1.bf16.msra.mxu0 0
    %1336 = vmatprep.mubr.bf16.mxu0 %v1296
    %1337 = vmatmul.mubr.bf16.gmra.mrb[0].mxu0 %v1182
    %v1338 = vpop.f32.mrb[0].mxu0
    %v1339 = vadd.f32 0.0, %v1338
    %v1340 = vpop.f32.mrb[0].mxu0
    %v1341 = vadd.f32 0.0, %v1340
    %v1342 = vpop.f32.mrb[0].mxu0
    %v1343 = vadd.f32 0.0, %v1342
    %v1344 = vpop.f32.mrb[0].mxu0
    %v1345 = vadd.f32 0.0, %v1344
    %1346 = vdwg.mxu0
    %v1347 = vadd.f32 %v1150, %v1339
    %v1348 = vadd.f32 %v1151, %v1341
    %v1349 = vadd.f32 %v1152, %v1343
    %v1350 = vadd.f32 %v1153, %v1345
    %s1351 = scalar_lea.vmem %s4, 336
    %v1352 = vld [vmem:[%s1351] sm:$0xff]
    %v1353 = vld [vmem:[%s1351 + $0x8] sm:$0xff]
    %v1354 = vld [vmem:[%s1351 + $0x10] sm:$0xff]
    %v1355 = vld [vmem:[%s1351 + $0x18] sm:$0xff]
    %v1356 = vld [vmem:[%s1351 + $0x20] sm:$0xff]
    %v1357 = vld [vmem:[%s1351 + $0x28] sm:$0xff]
    %v1358 = vld [vmem:[%s1351 + $0x30] sm:$0xff]
    %v1359 = vld [vmem:[%s1351 + $0x38] sm:$0xff]
    %v1360 = vld [vmem:[%s1351 + $0x40] sm:$0xff]
    %v1361 = vld [vmem:[%s1351 + $0x48] sm:$0xff]
    %v1362 = vld [vmem:[%s1351 + $0x50] sm:$0xff]
    %v1363 = vld [vmem:[%s1351 + $0x58] sm:$0xff]
    %v1364 = vld [vmem:[%s1351 + $0x60] sm:$0xff]
    %v1365 = vld [vmem:[%s1351 + $0x68] sm:$0xff]
    %v1366 = vld [vmem:[%s1351 + $0x70] sm:$0xff]
    %v1367 = vld [vmem:[%s1351 + $0x78] sm:$0xff]
    %v1368 = vld [vmem:[%s1351 + $0x80] sm:$0xff]
    %v1369 = vld [vmem:[%s1351 + $0x88] sm:$0xff]
    %v1370 = vld [vmem:[%s1351 + $0x90] sm:$0xff]
    %v1371 = vld [vmem:[%s1351 + $0x98] sm:$0xff]
    %v1372 = vld [vmem:[%s1351 + $0xa0] sm:$0x11]
    %v1375 = vrot.slane %v968, 1
    %v1376 = vrot.slane %v969, 1
    %v1399 = vunpack.c.l.b16 %v1352
    %v1400 = vunpack.c.h.b16 %v1352
    %v1401 = vunpack.c.l.b16 %v1353
    %v1402 = vunpack.c.h.b16 %v1353
    %v1403 = vunpack.c.l.b16 %v1354
    %v1404 = vunpack.c.h.b16 %v1354
    %v1405 = vunpack.c.l.b16 %v1355
    %v1406 = vunpack.c.h.b16 %v1355
    %v1407 = vunpack.c.l.b16 %v1356
    %v1408 = vunpack.c.h.b16 %v1356
    %v1409 = vunpack.c.l.b16 %v1357
    %v1410 = vunpack.c.h.b16 %v1357
    %v1411 = vunpack.c.l.b16 %v1358
    %v1412 = vunpack.c.h.b16 %v1358
    %v1413 = vunpack.c.l.b16 %v1359
    %v1414 = vunpack.c.h.b16 %v1359
    %v1415 = vunpack.c.l.b16 %v1360
    %v1416 = vunpack.c.h.b16 %v1360
    %v1417 = vunpack.c.l.b16 %v1361
    %v1418 = vunpack.c.h.b16 %v1361
    %v1419 = vunpack.c.l.b16 %v1362
    %v1420 = vunpack.c.h.b16 %v1362
    %v1421 = vunpack.c.l.b16 %v1363
    %v1422 = vunpack.c.h.b16 %v1363
    %v1423 = vunpack.c.l.b16 %v1364
    %v1424 = vunpack.c.h.b16 %v1364
    %v1425 = vunpack.c.l.b16 %v1365
    %v1426 = vunpack.c.h.b16 %v1365
    %v1427 = vunpack.c.l.b16 %v1366
    %v1428 = vunpack.c.h.b16 %v1366
    %v1429 = vunpack.c.l.b16 %v1367
    %v1430 = vunpack.c.h.b16 %v1367
    %v1431 = vunpack.c.l.b16 %v1368
    %v1432 = vunpack.c.h.b16 %v1368
    %v1433 = vunpack.c.l.b16 %v1369
    %v1434 = vunpack.c.h.b16 %v1369
    %v1435 = vunpack.c.l.b16 %v1370
    %v1436 = vunpack.c.h.b16 %v1370
    %v1437 = vunpack.c.l.b16 %v1371
    %v1438 = vunpack.c.h.b16 %v1371
    %v1439 = vunpack.c.l.b16 %v1372
    %v1440 = vunpack.c.h.b16 %v1372
    %v1441 = vpack.c.b16 %v1401, %v1399
    %v1442 = vpack.c.b16 %v1402, %v1400
    %v1443 = vpack.c.b16 %v1405, %v1403
    %v1444 = vpack.c.b16 %v1406, %v1404
    %v1445 = vpack.c.b16 %v1409, %v1407
    %v1446 = vpack.c.b16 %v1410, %v1408
    %v1447 = vpack.c.b16 %v1413, %v1411
    %v1448 = vpack.c.b16 %v1414, %v1412
    %v1449 = vpack.c.b16 %v1417, %v1415
    %v1450 = vpack.c.b16 %v1418, %v1416
    %v1451 = vpack.c.b16 %v1421, %v1419
    %v1452 = vpack.c.b16 %v1422, %v1420
    %v1453 = vpack.c.b16 %v1425, %v1423
    %v1454 = vpack.c.b16 %v1426, %v1424
    %v1455 = vpack.c.b16 %v1429, %v1427
    %v1456 = vpack.c.b16 %v1430, %v1428
    %v1457 = vpack.c.b16 %v1433, %v1431
    %v1458 = vpack.c.b16 %v1434, %v1432
    %v1459 = vpack.c.b16 %v1437, %v1435
    %v1460 = vpack.c.b16 %v1438, %v1436
    %v1461 = vpack.c.b16 %v1439, %v1439
    %v1462 = vpack.c.b16 %v1440, %v1440
    %v1484 = vsel %vm1096, %v1376, 0
    %v1487 = vsel %vm1100, %v1461, 0
    %v1490 = vsel %vm1100, %v1462, 0
    %1492 = vmatprep.subr.bf16.mxu0 %v1442
    %1493 = vmatpush1.bf16.msra.mxu0 %v1441
    %1494 = vmatprep.subr.bf16.mxu0 %v1444
    %1495 = vmatpush1.bf16.msra.mxu0 %v1443
    %1496 = vmatprep.subr.bf16.mxu0 %v1446
    %1497 = vmatpush1.bf16.msra.mxu0 %v1445
    %1498 = vmatprep.subr.bf16.mxu0 %v1448
    %1499 = vmatpush1.bf16.msra.mxu0 %v1447
    %1500 = vmatprep.subr.bf16.mxu0 %v1450
    %1501 = vmatpush1.bf16.msra.mxu0 %v1449
    %1502 = vmatprep.subr.bf16.mxu0 %v1452
    %1503 = vmatpush1.bf16.msra.mxu0 %v1451
    %1504 = vmatprep.subr.bf16.mxu0 %v1454
    %1505 = vmatpush1.bf16.msra.mxu0 %v1453
    %1506 = vmatprep.subr.bf16.mxu0 %v1456
    %1507 = vmatpush1.bf16.msra.mxu0 %v1455
    %1508 = vmatprep.subr.bf16.mxu0 %v1458
    %1509 = vmatpush1.bf16.msra.mxu0 %v1457
    %1510 = vmatprep.subr.bf16.mxu0 %v1460
    %1511 = vmatpush1.bf16.msra.mxu0 %v1459
    %1512 = vmatprep.subr.bf16.mxu0 %v1490
    %1513 = vmatpush1.bf16.msra.mxu0 %v1487
    %1514 = vmatprep.subr.bf16.mxu0 0
    %1515 = vmatpush1.bf16.msra.mxu0 0
    %1516 = vmatprep.subr.bf16.mxu0 0
    %1517 = vmatpush1.bf16.msra.mxu0 0
    %1518 = vmatprep.subr.bf16.mxu0 0
    %1519 = vmatpush1.bf16.msra.mxu0 0
    %1520 = vmatprep.subr.bf16.mxu0 0
    %1521 = vmatpush1.bf16.msra.mxu0 0
    %1522 = vmatprep.subr.bf16.mxu0 0
    %1523 = vmatpush1.bf16.msra.mxu0 0
    %1524 = vmatprep.mubr.bf16.mxu0 %v1484
    %1525 = vmatmul.mubr.bf16.gmra.mrb[0].mxu0 %v1375
    %v1526 = vpop.f32.mrb[0].mxu0
    %v1527 = vadd.f32 0.0, %v1526
    %v1528 = vpop.f32.mrb[0].mxu0
    %v1529 = vadd.f32 0.0, %v1528
    %v1530 = vpop.f32.mrb[0].mxu0
    %v1531 = vadd.f32 0.0, %v1530
    %v1532 = vpop.f32.mrb[0].mxu0
    %v1533 = vadd.f32 0.0, %v1532
    %1534 = vdwg.mxu0
    %v1535 = vadd.f32 %v1347, %v1527
    %v1536 = vadd.f32 %v1348, %v1529
    %v1537 = vadd.f32 %v1349, %v1531
    %v1538 = vadd.f32 %v1350, %v1533
    %s1539 = scalar_lea.vmem %s4, 504
    %v1540 = vld [vmem:[%s1539] sm:$0xff]
    %v1541 = vld [vmem:[%s1539 + $0x8] sm:$0xff]
    %v1542 = vld [vmem:[%s1539 + $0x10] sm:$0xff]
    %v1543 = vld [vmem:[%s1539 + $0x18] sm:$0xff]
    %v1544 = vld [vmem:[%s1539 + $0x20] sm:$0xff]
    %v1545 = vld [vmem:[%s1539 + $0x28] sm:$0xff]
    %v1546 = vld [vmem:[%s1539 + $0x30] sm:$0xff]
    %v1547 = vld [vmem:[%s1539 + $0x38] sm:$0xff]
    %v1548 = vld [vmem:[%s1539 + $0x40] sm:$0xff]
    %v1549 = vld [vmem:[%s1539 + $0x48] sm:$0xff]
    %v1550 = vld [vmem:[%s1539 + $0x50] sm:$0xff]
    %v1551 = vld [vmem:[%s1539 + $0x58] sm:$0xff]
    %v1552 = vld [vmem:[%s1539 + $0x60] sm:$0xff]
    %v1553 = vld [vmem:[%s1539 + $0x68] sm:$0xff]
    %v1554 = vld [vmem:[%s1539 + $0x70] sm:$0xff]
    %v1555 = vld [vmem:[%s1539 + $0x78] sm:$0xff]
    %v1556 = vld [vmem:[%s1539 + $0x80] sm:$0xff]
    %v1557 = vld [vmem:[%s1539 + $0x88] sm:$0xff]
    %v1558 = vld [vmem:[%s1539 + $0x90] sm:$0xff]
    %v1559 = vld [vmem:[%s1539 + $0x98] sm:$0xff]
    %v1560 = vld [vmem:[%s1539 + $0xa0] sm:$0x11]
    %v1561 = vrot.slane %v1177, 1
    %v1562 = vrot.slane %v1179, 2
    %v1563 = vor.u32 %v1561, %v1562
    %v1564 = vrot.slane %v1183, 1
    %v1565 = vrot.slane %v1185, 2
    %v1566 = vor.u32 %v1564, %v1565
    %v1589 = vunpack.c.l.b16 %v1540
    %v1590 = vunpack.c.h.b16 %v1540
    %v1591 = vunpack.c.l.b16 %v1541
    %v1592 = vunpack.c.h.b16 %v1541
    %v1593 = vunpack.c.l.b16 %v1542
    %v1594 = vunpack.c.h.b16 %v1542
    %v1595 = vunpack.c.l.b16 %v1543
    %v1596 = vunpack.c.h.b16 %v1543
    %v1597 = vunpack.c.l.b16 %v1544
    %v1598 = vunpack.c.h.b16 %v1544
    %v1599 = vunpack.c.l.b16 %v1545
    %v1600 = vunpack.c.h.b16 %v1545
    %v1601 = vunpack.c.l.b16 %v1546
    %v1602 = vunpack.c.h.b16 %v1546
    %v1603 = vunpack.c.l.b16 %v1547
    %v1604 = vunpack.c.h.b16 %v1547
    %v1605 = vunpack.c.l.b16 %v1548
    %v1606 = vunpack.c.h.b16 %v1548
    %v1607 = vunpack.c.l.b16 %v1549
    %v1608 = vunpack.c.h.b16 %v1549
    %v1609 = vunpack.c.l.b16 %v1550
    %v1610 = vunpack.c.h.b16 %v1550
    %v1611 = vunpack.c.l.b16 %v1551
    %v1612 = vunpack.c.h.b16 %v1551
    %v1613 = vunpack.c.l.b16 %v1552
    %v1614 = vunpack.c.h.b16 %v1552
    %v1615 = vunpack.c.l.b16 %v1553
    %v1616 = vunpack.c.h.b16 %v1553
    %v1617 = vunpack.c.l.b16 %v1554
    %v1618 = vunpack.c.h.b16 %v1554
    %v1619 = vunpack.c.l.b16 %v1555
    %v1620 = vunpack.c.h.b16 %v1555
    %v1621 = vunpack.c.l.b16 %v1556
    %v1622 = vunpack.c.h.b16 %v1556
    %v1623 = vunpack.c.l.b16 %v1557
    %v1624 = vunpack.c.h.b16 %v1557
    %v1625 = vunpack.c.l.b16 %v1558
    %v1626 = vunpack.c.h.b16 %v1558
    %v1627 = vunpack.c.l.b16 %v1559
    %v1628 = vunpack.c.h.b16 %v1559
    %v1629 = vunpack.c.l.b16 %v1560
    %v1630 = vunpack.c.h.b16 %v1560
    %v1631 = vpack.c.b16 %v1591, %v1589
    %v1632 = vpack.c.b16 %v1592, %v1590
    %v1633 = vpack.c.b16 %v1595, %v1593
    %v1634 = vpack.c.b16 %v1596, %v1594
    %v1635 = vpack.c.b16 %v1599, %v1597
    %v1636 = vpack.c.b16 %v1600, %v1598
    %v1637 = vpack.c.b16 %v1603, %v1601
    %v1638 = vpack.c.b16 %v1604, %v1602
    %v1639 = vpack.c.b16 %v1607, %v1605
    %v1640 = vpack.c.b16 %v1608, %v1606
    %v1641 = vpack.c.b16 %v1611, %v1609
    %v1642 = vpack.c.b16 %v1612, %v1610
    %v1643 = vpack.c.b16 %v1615, %v1613
    %v1644 = vpack.c.b16 %v1616, %v1614
    %v1645 = vpack.c.b16 %v1619, %v1617
    %v1646 = vpack.c.b16 %v1620, %v1618
    %v1647 = vpack.c.b16 %v1623, %v1621
    %v1648 = vpack.c.b16 %v1624, %v1622
    %v1649 = vpack.c.b16 %v1627, %v1625
    %v1650 = vpack.c.b16 %v1628, %v1626
    %v1651 = vpack.c.b16 %v1629, %v1629
    %v1652 = vpack.c.b16 %v1630, %v1630
    %v1674 = vsel %vm1096, %v1566, 0
    %v1677 = vsel %vm1100, %v1651, 0
    %v1680 = vsel %vm1100, %v1652, 0
    %1682 = vmatprep.subr.bf16.mxu0 %v1632
    %1683 = vmatpush1.bf16.msra.mxu0 %v1631
    %1684 = vmatprep.subr.bf16.mxu0 %v1634
    %1685 = vmatpush1.bf16.msra.mxu0 %v1633
    %1686 = vmatprep.subr.bf16.mxu0 %v1636
    %1687 = vmatpush1.bf16.msra.mxu0 %v1635
    %1688 = vmatprep.subr.bf16.mxu0 %v1638
    %1689 = vmatpush1.bf16.msra.mxu0 %v1637
    %1690 = vmatprep.subr.bf16.mxu0 %v1640
    %1691 = vmatpush1.bf16.msra.mxu0 %v1639
    %1692 = vmatprep.subr.bf16.mxu0 %v1642
    %1693 = vmatpush1.bf16.msra.mxu0 %v1641
    %1694 = vmatprep.subr.bf16.mxu0 %v1644
    %1695 = vmatpush1.bf16.msra.mxu0 %v1643
    %1696 = vmatprep.subr.bf16.mxu0 %v1646
    %1697 = vmatpush1.bf16.msra.mxu0 %v1645
    %1698 = vmatprep.subr.bf16.mxu0 %v1648
    %1699 = vmatpush1.bf16.msra.mxu0 %v1647
    %1700 = vmatprep.subr.bf16.mxu0 %v1650
    %1701 = vmatpush1.bf16.msra.mxu0 %v1649
    %1702 = vmatprep.subr.bf16.mxu0 %v1680
    %1703 = vmatpush1.bf16.msra.mxu0 %v1677
    %1704 = vmatprep.subr.bf16.mxu0 0
    %1705 = vmatpush1.bf16.msra.mxu0 0
    %1706 = vmatprep.subr.bf16.mxu0 0
    %1707 = vmatpush1.bf16.msra.mxu0 0
    %1708 = vmatprep.subr.bf16.mxu0 0
    %1709 = vmatpush1.bf16.msra.mxu0 0
    %1710 = vmatprep.subr.bf16.mxu0 0
    %1711 = vmatpush1.bf16.msra.mxu0 0
    %1712 = vmatprep.subr.bf16.mxu0 0
    %1713 = vmatpush1.bf16.msra.mxu0 0
    %1714 = vmatprep.mubr.bf16.mxu0 %v1674
    %1715 = vmatmul.mubr.bf16.gmra.mrb[0].mxu0 %v1563
    %v1716 = vpop.f32.mrb[0].mxu0
    %v1717 = vadd.f32 0.0, %v1716
    %v1718 = vpop.f32.mrb[0].mxu0
    %v1719 = vadd.f32 0.0, %v1718
    %v1720 = vpop.f32.mrb[0].mxu0
    %v1721 = vadd.f32 0.0, %v1720
    %v1722 = vpop.f32.mrb[0].mxu0
    %v1723 = vadd.f32 0.0, %v1722
    %1724 = vdwg.mxu0
    %v1725 = vadd.f32 %v1535, %v1717
    %v1726 = vadd.f32 %v1536, %v1719
    %v1727 = vadd.f32 %v1537, %v1721
    %v1728 = vadd.f32 %v1538, %v1723
    %s1729 = scalar_lea.vmem %s4, 672
    %v1730 = vld [vmem:[%s1729] sm:$0xff]
    %v1731 = vld [vmem:[%s1729 + $0x8] sm:$0xff]
    %v1732 = vld [vmem:[%s1729 + $0x10] sm:$0xff]
    %v1733 = vld [vmem:[%s1729 + $0x18] sm:$0xff]
    %v1734 = vld [vmem:[%s1729 + $0x20] sm:$0xff]
    %v1735 = vld [vmem:[%s1729 + $0x28] sm:$0xff]
    %v1736 = vld [vmem:[%s1729 + $0x30] sm:$0xff]
    %v1737 = vld [vmem:[%s1729 + $0x38] sm:$0xff]
    %v1738 = vld [vmem:[%s1729 + $0x40] sm:$0xff]
    %v1739 = vld [vmem:[%s1729 + $0x48] sm:$0xff]
    %v1740 = vld [vmem:[%s1729 + $0x50] sm:$0xff]
    %v1741 = vld [vmem:[%s1729 + $0x58] sm:$0xff]
    %v1742 = vld [vmem:[%s1729 + $0x60] sm:$0xff]
    %v1743 = vld [vmem:[%s1729 + $0x68] sm:$0xff]
    %v1744 = vld [vmem:[%s1729 + $0x70] sm:$0xff]
    %v1745 = vld [vmem:[%s1729 + $0x78] sm:$0xff]
    %v1746 = vld [vmem:[%s1729 + $0x80] sm:$0xff]
    %v1747 = vld [vmem:[%s1729 + $0x88] sm:$0xff]
    %v1748 = vld [vmem:[%s1729 + $0x90] sm:$0xff]
    %v1749 = vld [vmem:[%s1729 + $0x98] sm:$0xff]
    %v1750 = vld [vmem:[%s1729 + $0xa0] sm:$0x11]
    %v1751 = vrot.slane %v968, 2
    %v1752 = vrot.slane %v969, 2
    %v1775 = vunpack.c.l.b16 %v1730
    %v1776 = vunpack.c.h.b16 %v1730
    %v1777 = vunpack.c.l.b16 %v1731
    %v1778 = vunpack.c.h.b16 %v1731
    %v1779 = vunpack.c.l.b16 %v1732
    %v1780 = vunpack.c.h.b16 %v1732
    %v1781 = vunpack.c.l.b16 %v1733
    %v1782 = vunpack.c.h.b16 %v1733
    %v1783 = vunpack.c.l.b16 %v1734
    %v1784 = vunpack.c.h.b16 %v1734
    %v1785 = vunpack.c.l.b16 %v1735
    %v1786 = vunpack.c.h.b16 %v1735
    %v1787 = vunpack.c.l.b16 %v1736
    %v1788 = vunpack.c.h.b16 %v1736
    %v1789 = vunpack.c.l.b16 %v1737
    %v1790 = vunpack.c.h.b16 %v1737
    %v1791 = vunpack.c.l.b16 %v1738
    %v1792 = vunpack.c.h.b16 %v1738
    %v1793 = vunpack.c.l.b16 %v1739
    %v1794 = vunpack.c.h.b16 %v1739
    %v1795 = vunpack.c.l.b16 %v1740
    %v1796 = vunpack.c.h.b16 %v1740
    %v1797 = vunpack.c.l.b16 %v1741
    %v1798 = vunpack.c.h.b16 %v1741
    %v1799 = vunpack.c.l.b16 %v1742
    %v1800 = vunpack.c.h.b16 %v1742
    %v1801 = vunpack.c.l.b16 %v1743
    %v1802 = vunpack.c.h.b16 %v1743
    %v1803 = vunpack.c.l.b16 %v1744
    %v1804 = vunpack.c.h.b16 %v1744
    %v1805 = vunpack.c.l.b16 %v1745
    %v1806 = vunpack.c.h.b16 %v1745
    %v1807 = vunpack.c.l.b16 %v1746
    %v1808 = vunpack.c.h.b16 %v1746
    %v1809 = vunpack.c.l.b16 %v1747
    %v1810 = vunpack.c.h.b16 %v1747
    %v1811 = vunpack.c.l.b16 %v1748
    %v1812 = vunpack.c.h.b16 %v1748
    %v1813 = vunpack.c.l.b16 %v1749
    %v1814 = vunpack.c.h.b16 %v1749
    %v1815 = vunpack.c.l.b16 %v1750
    %v1816 = vunpack.c.h.b16 %v1750
    %v1817 = vpack.c.b16 %v1777, %v1775
    %v1818 = vpack.c.b16 %v1778, %v1776
    %v1819 = vpack.c.b16 %v1781, %v1779
    %v1820 = vpack.c.b16 %v1782, %v1780
    %v1821 = vpack.c.b16 %v1785, %v1783
    %v1822 = vpack.c.b16 %v1786, %v1784
    %v1823 = vpack.c.b16 %v1789, %v1787
    %v1824 = vpack.c.b16 %v1790, %v1788
    %v1825 = vpack.c.b16 %v1793, %v1791
    %v1826 = vpack.c.b16 %v1794, %v1792
    %v1827 = vpack.c.b16 %v1797, %v1795
    %v1828 = vpack.c.b16 %v1798, %v1796
    %v1829 = vpack.c.b16 %v1801, %v1799
    %v1830 = vpack.c.b16 %v1802, %v1800
    %v1831 = vpack.c.b16 %v1805, %v1803
    %v1832 = vpack.c.b16 %v1806, %v1804
    %v1833 = vpack.c.b16 %v1809, %v1807
    %v1834 = vpack.c.b16 %v1810, %v1808
    %v1835 = vpack.c.b16 %v1813, %v1811
    %v1836 = vpack.c.b16 %v1814, %v1812
    %v1837 = vpack.c.b16 %v1815, %v1815
    %v1838 = vpack.c.b16 %v1816, %v1816
    %v1860 = vsel %vm1096, %v1752, 0
    %v1863 = vsel %vm1100, %v1837, 0
    %v1866 = vsel %vm1100, %v1838, 0
    %1868 = vmatprep.subr.bf16.mxu0 %v1818
    %1869 = vmatpush1.bf16.msra.mxu0 %v1817
    %1870 = vmatprep.subr.bf16.mxu0 %v1820
    %1871 = vmatpush1.bf16.msra.mxu0 %v1819
    %1872 = vmatprep.subr.bf16.mxu0 %v1822
    %1873 = vmatpush1.bf16.msra.mxu0 %v1821
    %1874 = vmatprep.subr.bf16.mxu0 %v1824
    %1875 = vmatpush1.bf16.msra.mxu0 %v1823
    %1876 = vmatprep.subr.bf16.mxu0 %v1826
    %1877 = vmatpush1.bf16.msra.mxu0 %v1825
    %1878 = vmatprep.subr.bf16.mxu0 %v1828
    %1879 = vmatpush1.bf16.msra.mxu0 %v1827
    %1880 = vmatprep.subr.bf16.mxu0 %v1830
    %1881 = vmatpush1.bf16.msra.mxu0 %v1829
    %1882 = vmatprep.subr.bf16.mxu0 %v1832
    %1883 = vmatpush1.bf16.msra.mxu0 %v1831
    %1884 = vmatprep.subr.bf16.mxu0 %v1834
    %1885 = vmatpush1.bf16.msra.mxu0 %v1833
    %1886 = vmatprep.subr.bf16.mxu0 %v1836
    %1887 = vmatpush1.bf16.msra.mxu0 %v1835
    %1888 = vmatprep.subr.bf16.mxu0 %v1866
    %1889 = vmatpush1.bf16.msra.mxu0 %v1863
    %1890 = vmatprep.subr.bf16.mxu0 0
    %1891 = vmatpush1.bf16.msra.mxu0 0
    %1892 = vmatprep.subr.bf16.mxu0 0
    %1893 = vmatpush1.bf16.msra.mxu0 0
    %1894 = vmatprep.subr.bf16.mxu0 0
    %1895 = vmatpush1.bf16.msra.mxu0 0
    %1896 = vmatprep.subr.bf16.mxu0 0
    %1897 = vmatpush1.bf16.msra.mxu0 0
    %1898 = vmatprep.subr.bf16.mxu0 0
    %1899 = vmatpush1.bf16.msra.mxu0 0
    %1900 = vmatprep.mubr.bf16.mxu0 %v1860
    %1901 = vmatmul.mubr.bf16.gmra.mrb[0].mxu0 %v1751
    %v1902 = vpop.f32.mrb[0].mxu0
    %v1903 = vadd.f32 0.0, %v1902
    %v1904 = vpop.f32.mrb[0].mxu0
    %v1905 = vadd.f32 0.0, %v1904
    %v1906 = vpop.f32.mrb[0].mxu0
    %v1907 = vadd.f32 0.0, %v1906
    %v1908 = vpop.f32.mrb[0].mxu0
    %v1909 = vadd.f32 0.0, %v1908
    %1910 = vdwg.mxu0
    %v1911 = vadd.f32 %v1725, %v1903
    %v1912 = vadd.f32 %v1726, %v1905
    %v1913 = vadd.f32 %v1727, %v1907
    %v1914 = vadd.f32 %v1728, %v1909
    %v1915 = vmax.f32 %v1911, 0.0
    %v1916 = vmax.f32 %v1912, 0.0
    %v1917 = vmax.f32 %v1913, 0.0
    %v1918 = vmax.f32 %v1914, 0.0
    %v1923 = vrot.slane %v1915, 1
    %v1924 = vrot.slane %v1917, 1
    %v1925 = vsel %vm823, %v1923, %v1924
    %v1926 = vrot.slane %v1916, 1
    %v1927 = vrot.slane %v1918, 1
    %v1928 = vsel %vm823, %v1926, %v1927
    %v1933 = vmax.f32 %v1915, %v1925
    %v1934 = vmax.f32 %v1916, %v1928
    %v1935 = vmax.f32 %v1917, %v1924
    %v1936 = vmax.f32 %v1918, %v1927
    %1941 = vrot.lane.b32.xlu0 %v1933, 112
    %v1942 = vpop.permute.xlu0 %1941
    %1943 = vrot.lane.b32.xlu0 %v1934, 112
    %v1944 = vpop.permute.xlu0 %1943
    %1945 = vrot.lane.b32.xlu0 %v1935, 112
    %v1946 = vpop.permute.xlu0 %1945
    %1947 = vrot.lane.b32.xlu0 %v1936, 112
    %v1948 = vpop.permute.xlu0 %1947
    %vm1949 = vcmask 916480
    %v1950 = vsel %vm1949, %v1942, %v1944
    %v1951 = vsel %vm1949, %v1946, %v1948
    %v1956 = vmax.f32 %v1933, %v1950
    %v1957 = vmax.f32 %v1934, %v1944
    %v1958 = vmax.f32 %v1935, %v1951
    %v1959 = vmax.f32 %v1936, %v1948
    %v1962 = vcombine.low %v1956, %v1957
    %v1964 = vunpack.c.l.s4 1966171168
    %v1965 = vunpack.c.0.s8 %v1964
    %v1966 = vlaneseq
    %v1967 = vshrl.u32 %v1966, 7
    %v1968 = vsub.s32 %v1965, %v1967
    %v1969 = vrot.slane %v1962, %v1968
    %v1971 = vunpack.c.l.s4 1966171168
    %v1972 = vunpack.c.0.s8 %v1971
    %v1973 = vlaneseq
    %v1974 = vshrl.u32 %v1973, 7
    %v1975 = vsub.s32 %v1972, %v1974
    %v1976 = vrot.slane %v1969, %v1975
    %v1978 = vlaneseq
    %vm1979 = vcmp.ge.s32.totalorder %v1978, 0
    %vm1980 = vcmp.lt.s32.totalorder %v1978, 144
    %vm1981 = vmand %vm1979, %vm1980
    %1982 = vst.msk [vmem:[#allocation2] ss:$2 sm:$0x3] %vm1981, %v1976
    %v1983 = vcombine.high %v1976, %v1976
    %s1985 = scalar_lea.vmem [#allocation2], 4
    %1986 = vst.msk [vmem:[%s1985] ss:$2 sm:$0x3] %vm1981, %v1983
    %v1987 = vcombine.high %v1956, %v1957
    %v1989 = vunpack.c.l.s4 1966171168
    %v1990 = vunpack.c.0.s8 %v1989
    %v1991 = vlaneseq
    %v1992 = vshrl.u32 %v1991, 7
    %v1993 = vsub.s32 %v1990, %v1992
    %v1994 = vrot.slane %v1987, %v1993
    %v1996 = vunpack.c.l.s4 1966171168
    %v1997 = vunpack.c.0.s8 %v1996
    %v1998 = vlaneseq
    %v1999 = vshrl.u32 %v1998, 7
    %v2000 = vsub.s32 %v1997, %v1999
    %v2001 = vrot.slane %v1994, %v2000
    %s2003 = scalar_lea.vmem [#allocation2], 8
    %2004 = vst.msk [vmem:[%s2003] ss:$2 sm:$0x3] %vm1981, %v2001
    %v2005 = vcombine.high %v2001, %v2001
    %s2007 = scalar_lea.vmem [#allocation2], 12
    %2008 = vst.msk [vmem:[%s2007] ss:$2 sm:$0x3] %vm1981, %v2005
    %v2011 = vcombine.low %v1958, %v1959
    %v2013 = vunpack.c.l.s4 1966171168
    %v2014 = vunpack.c.0.s8 %v2013
    %v2015 = vlaneseq
    %v2016 = vshrl.u32 %v2015, 7
    %v2017 = vsub.s32 %v2014, %v2016
    %v2018 = vrot.slane %v2011, %v2017
    %v2020 = vunpack.c.l.s4 1966171168
    %v2021 = vunpack.c.0.s8 %v2020
    %v2022 = vlaneseq
    %v2023 = vshrl.u32 %v2022, 7
    %v2024 = vsub.s32 %v2021, %v2023
    %v2025 = vrot.slane %v2018, %v2024
    %s2027 = scalar_lea.vmem [#allocation2], 16
    %2028 = vst.msk [vmem:[%s2027] ss:$2 sm:$0x3] %vm1981, %v2025
    %s2029 = scalar_lea.vmem %s0, 32
    %v2030 = vld [vmem:[%s2029] sm:$0xff]
    %v2031 = vld [vmem:[%s2029 + $0x8] sm:$0xff]
    %v2032 = vld [vmem:[%s2029 + $0x10] sm:$0xff]
    %v2033 = vld [vmem:[%s2029 + $0x18] sm:$0xff]
    %v2034 = vpack.c.bf16 %v2031, %v2030
    %v2035 = vpack.c.bf16 %v2033, %v2032
    %v2036 = vld [vmem:[%s1] sm:$0xff]
    %v2037 = vld [vmem:[%s1 + $0x8] sm:$0xff]
    %v2038 = vld [vmem:[%s1 + $0x10] sm:$0xff]
    %v2039 = vld [vmem:[%s1 + $0x18] sm:$0xff]
    %v2040 = vld [vmem:[%s1 + $0x20] sm:$0xff]
    %v2041 = vld [vmem:[%s1 + $0x28] sm:$0xff]
    %v2042 = vld [vmem:[%s1 + $0x30] sm:$0xff]
    %v2043 = vld [vmem:[%s1 + $0x38] sm:$0xff]
    %v2044 = vld [vmem:[%s1 + $0x40] sm:$0xff]
    %v2045 = vld [vmem:[%s1 + $0x48] sm:$0xff]
    %v2046 = vld [vmem:[%s1 + $0x50] sm:$0xff]
    %v2047 = vld [vmem:[%s1 + $0x58] sm:$0xff]
    %v2060 = vunpack.c.l.b16 %v2036
    %v2061 = vunpack.c.h.b16 %v2036
    %v2062 = vunpack.c.l.b16 %v2037
    %v2063 = vunpack.c.h.b16 %v2037
    %v2064 = vunpack.c.l.b16 %v2038
    %v2065 = vunpack.c.h.b16 %v2038
    %v2066 = vunpack.c.l.b16 %v2039
    %v2067 = vunpack.c.h.b16 %v2039
    %v2068 = vunpack.c.l.b16 %v2040
    %v2069 = vunpack.c.h.b16 %v2040
    %v2070 = vunpack.c.l.b16 %v2041
    %v2071 = vunpack.c.h.b16 %v2041
    %v2072 = vunpack.c.l.b16 %v2042
    %v2073 = vunpack.c.h.b16 %v2042
    %v2074 = vunpack.c.l.b16 %v2043
    %v2075 = vunpack.c.h.b16 %v2043
    %v2076 = vunpack.c.l.b16 %v2044
    %v2077 = vunpack.c.h.b16 %v2044
    %v2078 = vunpack.c.l.b16 %v2045
    %v2079 = vunpack.c.h.b16 %v2045
    %v2080 = vunpack.c.l.b16 %v2046
    %v2081 = vunpack.c.h.b16 %v2046
    %v2082 = vunpack.c.l.b16 %v2047
    %v2083 = vunpack.c.h.b16 %v2047
    %v2084 = vpack.c.b16 %v2062, %v2060
    %v2085 = vpack.c.b16 %v2063, %v2061
    %v2086 = vpack.c.b16 %v2066, %v2064
    %v2087 = vpack.c.b16 %v2067, %v2065
    %v2088 = vpack.c.b16 %v2070, %v2068
    %v2089 = vpack.c.b16 %v2071, %v2069
    %v2090 = vpack.c.b16 %v2074, %v2072
    %v2091 = vpack.c.b16 %v2075, %v2073
    %v2092 = vpack.c.b16 %v2078, %v2076
    %v2093 = vpack.c.b16 %v2079, %v2077
    %v2094 = vpack.c.b16 %v2082, %v2080
    %v2095 = vpack.c.b16 %v2083, %v2081
    %v2109 = vsel %vm147, %v2034, 0
    %v2112 = vsel %vm147, %v2035, 0
    %2114 = vmatprep.subr.bf16.mxu0 %v2085
    %2115 = vmatpush1.bf16.msra.mxu0 %v2084
    %2116 = vmatprep.subr.bf16.mxu0 %v2087
    %2117 = vmatpush1.bf16.msra.mxu0 %v2086
    %2118 = vmatprep.subr.bf16.mxu0 %v2089
    %2119 = vmatpush1.bf16.msra.mxu0 %v2088
    %2120 = vmatprep.subr.bf16.mxu0 %v2091
    %2121 = vmatpush1.bf16.msra.mxu0 %v2090
    %2122 = vmatprep.subr.bf16.mxu0 %v2093
    %2123 = vmatpush1.bf16.msra.mxu0 %v2092
    %2124 = vmatprep.subr.bf16.mxu0 %v2095
    %2125 = vmatpush1.bf16.msra.mxu0 %v2094
    %2126 = vmatprep.subr.bf16.mxu0 0
    %2127 = vmatpush1.bf16.msra.mxu0 0
    %2128 = vmatprep.subr.bf16.mxu0 0
    %2129 = vmatpush1.bf16.msra.mxu0 0
    %2130 = vmatprep.subr.bf16.mxu0 0
    %2131 = vmatpush1.bf16.msra.mxu0 0
    %2132 = vmatprep.subr.bf16.mxu0 0
    %2133 = vmatpush1.bf16.msra.mxu0 0
    %2134 = vmatprep.subr.bf16.mxu0 0
    %2135 = vmatpush1.bf16.msra.mxu0 0
    %2136 = vmatprep.subr.bf16.mxu0 0
    %2137 = vmatpush1.bf16.msra.mxu0 0
    %2138 = vmatprep.subr.bf16.mxu0 0
    %2139 = vmatpush1.bf16.msra.mxu0 0
    %2140 = vmatprep.subr.bf16.mxu0 0
    %2141 = vmatpush1.bf16.msra.mxu0 0
    %2142 = vmatprep.subr.bf16.mxu0 0
    %2143 = vmatpush1.bf16.msra.mxu0 0
    %2144 = vmatprep.subr.bf16.mxu0 0
    %2145 = vmatpush1.bf16.msra.mxu0 0
    %2146 = vmatprep.mubr.bf16.mxu0 0
    %2147 = vmatmul.mubr.bf16.gmra.mrb[0].mxu0 %v2109
    %v2148 = vpop.f32.mrb[0].mxu0
    %v2149 = vadd.f32 0.0, %v2148
    %v2150 = vpop.f32.mrb[0].mxu0
    %v2151 = vadd.f32 0.0, %v2150
    %v2152 = vpop.f32.mrb[0].mxu0
    %v2153 = vadd.f32 0.0, %v2152
    %v2154 = vpop.f32.mrb[0].mxu0
    %v2155 = vadd.f32 0.0, %v2154
    %2156 = vmatprep.mubr.bf16.mxu0 0
    %2157 = vmatmul.mubr.bf16.gmra.mrb[0].mxu0 %v2112
    %v2158 = vpop.f32.mrb[0].mxu0
    %v2159 = vadd.f32 0.0, %v2158
    %v2160 = vpop.f32.mrb[0].mxu0
    %v2161 = vadd.f32 0.0, %v2160
    %v2162 = vpop.f32.mrb[0].mxu0
    %v2163 = vadd.f32 0.0, %v2162
    %v2164 = vpop.f32.mrb[0].mxu0
    %v2165 = vadd.f32 0.0, %v2164
    %2166 = vdwg.mxu0
    %v2167 = vadd.f32 %v48, %v2149
    %v2168 = vadd.f32 %v52, %v2151
    %v2169 = vadd.f32 %v48, %v2153
    %v2170 = vadd.f32 %v52, %v2155
    %v2171 = vadd.f32 %v48, %v2159
    %v2172 = vadd.f32 %v52, %v2161
    %v2173 = vadd.f32 %v48, %v2163
    %v2174 = vadd.f32 %v52, %v2165
    %v2175 = vld [vmem:[%s215] sm:$0xff]
    %v2176 = vld [vmem:[%s215 + $0x8] sm:$0xff]
    %v2177 = vld [vmem:[%s215 + $0x10] sm:$0xff]
    %v2178 = vld [vmem:[%s215 + $0x18] sm:$0xff]
    %v2179 = vld [vmem:[%s215 + $0x20] sm:$0xff]
    %v2180 = vld [vmem:[%s215 + $0x28] sm:$0xff]
    %v2181 = vld [vmem:[%s215 + $0x30] sm:$0xff]
    %v2182 = vld [vmem:[%s215 + $0x38] sm:$0xff]
    %v2183 = vld [vmem:[%s215 + $0x40] sm:$0xff]
    %v2184 = vld [vmem:[%s215 + $0x48] sm:$0xff]
    %v2185 = vld [vmem:[%s215 + $0x50] sm:$0xff]
    %v2186 = vld [vmem:[%s215 + $0x58] sm:$0xff]
    %v2187 = vshrl.u32 %v2034, 16
    %v2189 = vshll.u32 %v2034, 16
    %v2191 = vrot.slane %v2189, 1
    %v2192 = vor.u32 %v2187, %v2191
    %v2193 = vshll.u32 %v2035, 16
    %v2195 = vrot.slane %v2193, 1
    %v2196 = vsel %vm228, %v2192, %v2195
    %v2197 = vshrl.u32 %v2035, 16
    %v2199 = vor.u32 %v2197, %v2195
    %v2212 = vunpack.c.l.b16 %v2175
    %v2213 = vunpack.c.h.b16 %v2175
    %v2214 = vunpack.c.l.b16 %v2176
    %v2215 = vunpack.c.h.b16 %v2176
    %v2216 = vunpack.c.l.b16 %v2177
    %v2217 = vunpack.c.h.b16 %v2177
    %v2218 = vunpack.c.l.b16 %v2178
    %v2219 = vunpack.c.h.b16 %v2178
    %v2220 = vunpack.c.l.b16 %v2179
    %v2221 = vunpack.c.h.b16 %v2179
    %v2222 = vunpack.c.l.b16 %v2180
    %v2223 = vunpack.c.h.b16 %v2180
    %v2224 = vunpack.c.l.b16 %v2181
    %v2225 = vunpack.c.h.b16 %v2181
    %v2226 = vunpack.c.l.b16 %v2182
    %v2227 = vunpack.c.h.b16 %v2182
    %v2228 = vunpack.c.l.b16 %v2183
    %v2229 = vunpack.c.h.b16 %v2183
    %v2230 = vunpack.c.l.b16 %v2184
    %v2231 = vunpack.c.h.b16 %v2184
    %v2232 = vunpack.c.l.b16 %v2185
    %v2233 = vunpack.c.h.b16 %v2185
    %v2234 = vunpack.c.l.b16 %v2186
    %v2235 = vunpack.c.h.b16 %v2186
    %v2236 = vpack.c.b16 %v2214, %v2212
    %v2237 = vpack.c.b16 %v2215, %v2213
    %v2238 = vpack.c.b16 %v2218, %v2216
    %v2239 = vpack.c.b16 %v2219, %v2217
    %v2240 = vpack.c.b16 %v2222, %v2220
    %v2241 = vpack.c.b16 %v2223, %v2221
    %v2242 = vpack.c.b16 %v2226, %v2224
    %v2243 = vpack.c.b16 %v2227, %v2225
    %v2244 = vpack.c.b16 %v2230, %v2228
    %v2245 = vpack.c.b16 %v2231, %v2229
    %v2246 = vpack.c.b16 %v2234, %v2232
    %v2247 = vpack.c.b16 %v2235, %v2233
    %v2261 = vsel %vm147, %v2196, 0
    %v2264 = vsel %vm147, %v2199, 0
    %2266 = vmatprep.subr.bf16.mxu0 %v2237
    %2267 = vmatpush1.bf16.msra.mxu0 %v2236
    %2268 = vmatprep.subr.bf16.mxu0 %v2239
    %2269 = vmatpush1.bf16.msra.mxu0 %v2238
    %2270 = vmatprep.subr.bf16.mxu0 %v2241
    %2271 = vmatpush1.bf16.msra.mxu0 %v2240
    %2272 = vmatprep.subr.bf16.mxu0 %v2243
    %2273 = vmatpush1.bf16.msra.mxu0 %v2242
    %2274 = vmatprep.subr.bf16.mxu0 %v2245
    %2275 = vmatpush1.bf16.msra.mxu0 %v2244
    %2276 = vmatprep.subr.bf16.mxu0 %v2247
    %2277 = vmatpush1.bf16.msra.mxu0 %v2246
    %2278 = vmatprep.subr.bf16.mxu0 0
    %2279 = vmatpush1.bf16.msra.mxu0 0
    %2280 = vmatprep.subr.bf16.mxu0 0
    %2281 = vmatpush1.bf16.msra.mxu0 0
    %2282 = vmatprep.subr.bf16.mxu0 0
    %2283 = vmatpush1.bf16.msra.mxu0 0
    %2284 = vmatprep.subr.bf16.mxu0 0
    %2285 = vmatpush1.bf16.msra.mxu0 0
    %2286 = vmatprep.subr.bf16.mxu0 0
    %2287 = vmatpush1.bf16.msra.mxu0 0
    %2288 = vmatprep.subr.bf16.mxu0 0
    %2289 = vmatpush1.bf16.msra.mxu0 0
    %2290 = vmatprep.subr.bf16.mxu0 0
    %2291 = vmatpush1.bf16.msra.mxu0 0
    %2292 = vmatprep.subr.bf16.mxu0 0
    %2293 = vmatpush1.bf16.msra.mxu0 0
    %2294 = vmatprep.subr.bf16.mxu0 0
    %2295 = vmatpush1.bf16.msra.mxu0 0
    %2296 = vmatprep.subr.bf16.mxu0 0
    %2297 = vmatpush1.bf16.msra.mxu0 0
    %2298 = vmatprep.mubr.bf16.mxu0 0
    %2299 = vmatmul.mubr.bf16.gmra.mrb[0].mxu0 %v2261
    %v2300 = vpop.f32.mrb[0].mxu0
    %v2301 = vadd.f32 0.0, %v2300
    %v2302 = vpop.f32.mrb[0].mxu0
    %v2303 = vadd.f32 0.0, %v2302
    %v2304 = vpop.f32.mrb[0].mxu0
    %v2305 = vadd.f32 0.0, %v2304
    %v2306 = vpop.f32.mrb[0].mxu0
    %v2307 = vadd.f32 0.0, %v2306
    %2308 = vmatprep.mubr.bf16.mxu0 0
    %2309 = vmatmul.mubr.bf16.gmra.mrb[0].mxu0 %v2264
    %v2310 = vpop.f32.mrb[0].mxu0
    %v2311 = vadd.f32 0.0, %v2310
    %v2312 = vpop.f32.mrb[0].mxu0
    %v2313 = vadd.f32 0.0, %v2312
    %v2314 = vpop.f32.mrb[0].mxu0
    %v2315 = vadd.f32 0.0, %v2314
    %v2316 = vpop.f32.mrb[0].mxu0
    %v2317 = vadd.f32 0.0, %v2316
    %2318 = vdwg.mxu0
    %v2319 = vadd.f32 %v2167, %v2301
    %v2320 = vadd.f32 %v2168, %v2303
    %v2321 = vadd.f32 %v2169, %v2305
    %v2322 = vadd.f32 %v2170, %v2307
    %v2323 = vadd.f32 %v2171, %v2311
    %v2324 = vadd.f32 %v2172, %v2313
    %v2325 = vadd.f32 %v2173, %v2315
    %v2326 = vadd.f32 %v2174, %v2317
    %v2327 = vld [vmem:[%s369] sm:$0xff]
    %v2328 = vld [vmem:[%s369 + $0x8] sm:$0xff]
    %v2329 = vld [vmem:[%s369 + $0x10] sm:$0xff]
    %v2330 = vld [vmem:[%s369 + $0x18] sm:$0xff]
    %v2331 = vld [vmem:[%s369 + $0x20] sm:$0xff]
    %v2332 = vld [vmem:[%s369 + $0x28] sm:$0xff]
    %v2333 = vld [vmem:[%s369 + $0x30] sm:$0xff]
    %v2334 = vld [vmem:[%s369 + $0x38] sm:$0xff]
    %v2335 = vld [vmem:[%s369 + $0x40] sm:$0xff]
    %v2336 = vld [vmem:[%s369 + $0x48] sm:$0xff]
    %v2337 = vld [vmem:[%s369 + $0x50] sm:$0xff]
    %v2338 = vld [vmem:[%s369 + $0x58] sm:$0xff]
    %v2341 = vrot.slane %v2034, 1
    %v2342 = vrot.slane %v2035, 1
    %v2343 = vsel %vm384, %v2341, %v2342
    %v2356 = vunpack.c.l.b16 %v2327
    %v2357 = vunpack.c.h.b16 %v2327
    %v2358 = vunpack.c.l.b16 %v2328
    %v2359 = vunpack.c.h.b16 %v2328
    %v2360 = vunpack.c.l.b16 %v2329
    %v2361 = vunpack.c.h.b16 %v2329
    %v2362 = vunpack.c.l.b16 %v2330
    %v2363 = vunpack.c.h.b16 %v2330
    %v2364 = vunpack.c.l.b16 %v2331
    %v2365 = vunpack.c.h.b16 %v2331
    %v2366 = vunpack.c.l.b16 %v2332
    %v2367 = vunpack.c.h.b16 %v2332
    %v2368 = vunpack.c.l.b16 %v2333
    %v2369 = vunpack.c.h.b16 %v2333
    %v2370 = vunpack.c.l.b16 %v2334
    %v2371 = vunpack.c.h.b16 %v2334
    %v2372 = vunpack.c.l.b16 %v2335
    %v2373 = vunpack.c.h.b16 %v2335
    %v2374 = vunpack.c.l.b16 %v2336
    %v2375 = vunpack.c.h.b16 %v2336
    %v2376 = vunpack.c.l.b16 %v2337
    %v2377 = vunpack.c.h.b16 %v2337
    %v2378 = vunpack.c.l.b16 %v2338
    %v2379 = vunpack.c.h.b16 %v2338
    %v2380 = vpack.c.b16 %v2358, %v2356
    %v2381 = vpack.c.b16 %v2359, %v2357
    %v2382 = vpack.c.b16 %v2362, %v2360
    %v2383 = vpack.c.b16 %v2363, %v2361
    %v2384 = vpack.c.b16 %v2366, %v2364
    %v2385 = vpack.c.b16 %v2367, %v2365
    %v2386 = vpack.c.b16 %v2370, %v2368
    %v2387 = vpack.c.b16 %v2371, %v2369
    %v2388 = vpack.c.b16 %v2374, %v2372
    %v2389 = vpack.c.b16 %v2375, %v2373
    %v2390 = vpack.c.b16 %v2378, %v2376
    %v2391 = vpack.c.b16 %v2379, %v2377
    %v2405 = vsel %vm147, %v2343, 0
    %v2408 = vsel %vm147, %v2342, 0
    %2410 = vmatprep.subr.bf16.mxu0 %v2381
    %2411 = vmatpush1.bf16.msra.mxu0 %v2380
    %2412 = vmatprep.subr.bf16.mxu0 %v2383
    %2413 = vmatpush1.bf16.msra.mxu0 %v2382
    %2414 = vmatprep.subr.bf16.mxu0 %v2385
    %2415 = vmatpush1.bf16.msra.mxu0 %v2384
    %2416 = vmatprep.subr.bf16.mxu0 %v2387
    %2417 = vmatpush1.bf16.msra.mxu0 %v2386
    %2418 = vmatprep.subr.bf16.mxu0 %v2389
    %2419 = vmatpush1.bf16.msra.mxu0 %v2388
    %2420 = vmatprep.subr.bf16.mxu0 %v2391
    %2421 = vmatpush1.bf16.msra.mxu0 %v2390
    %2422 = vmatprep.subr.bf16.mxu0 0
    %2423 = vmatpush1.bf16.msra.mxu0 0
    %2424 = vmatprep.subr.bf16.mxu0 0
    %2425 = vmatpush1.bf16.msra.mxu0 0
    %2426 = vmatprep.subr.bf16.mxu0 0
    %2427 = vmatpush1.bf16.msra.mxu0 0
    %2428 = vmatprep.subr.bf16.mxu0 0
    %2429 = vmatpush1.bf16.msra.mxu0 0
    %2430 = vmatprep.subr.bf16.mxu0 0
    %2431 = vmatpush1.bf16.msra.mxu0 0
    %2432 = vmatprep.subr.bf16.mxu0 0
    %2433 = vmatpush1.bf16.msra.mxu0 0
    %2434 = vmatprep.subr.bf16.mxu0 0
    %2435 = vmatpush1.bf16.msra.mxu0 0
    %2436 = vmatprep.subr.bf16.mxu0 0
    %2437 = vmatpush1.bf16.msra.mxu0 0
    %2438 = vmatprep.subr.bf16.mxu0 0
    %2439 = vmatpush1.bf16.msra.mxu0 0
    %2440 = vmatprep.subr.bf16.mxu0 0
    %2441 = vmatpush1.bf16.msra.mxu0 0
    %2442 = vmatprep.mubr.bf16.mxu0 0
    %2443 = vmatmul.mubr.bf16.gmra.mrb[0].mxu0 %v2405
    %v2444 = vpop.f32.mrb[0].mxu0
    %v2445 = vadd.f32 0.0, %v2444
    %v2446 = vpop.f32.mrb[0].mxu0
    %v2447 = vadd.f32 0.0, %v2446
    %v2448 = vpop.f32.mrb[0].mxu0
    %v2449 = vadd.f32 0.0, %v2448
    %v2450 = vpop.f32.mrb[0].mxu0
    %v2451 = vadd.f32 0.0, %v2450
    %2452 = vmatprep.mubr.bf16.mxu0 0
    %2453 = vmatmul.mubr.bf16.gmra.mrb[0].mxu0 %v2408
    %v2454 = vpop.f32.mrb[0].mxu0
    %v2455 = vadd.f32 0.0, %v2454
    %v2456 = vpop.f32.mrb[0].mxu0
    %v2457 = vadd.f32 0.0, %v2456
    %v2458 = vpop.f32.mrb[0].mxu0
    %v2459 = vadd.f32 0.0, %v2458
    %v2460 = vpop.f32.mrb[0].mxu0
    %v2461 = vadd.f32 0.0, %v2460
    %2462 = vdwg.mxu0
    %v2463 = vadd.f32 %v2319, %v2445
    %v2464 = vadd.f32 %v2320, %v2447
    %v2465 = vadd.f32 %v2321, %v2449
    %v2466 = vadd.f32 %v2322, %v2451
    %v2467 = vadd.f32 %v2323, %v2455
    %v2468 = vadd.f32 %v2324, %v2457
    %v2469 = vadd.f32 %v2325, %v2459
    %v2470 = vadd.f32 %v2326, %v2461
    %v2471 = vld [vmem:[%s515] sm:$0xff]
    %v2472 = vld [vmem:[%s515 + $0x8] sm:$0xff]
    %v2473 = vld [vmem:[%s515 + $0x10] sm:$0xff]
    %v2474 = vld [vmem:[%s515 + $0x18] sm:$0xff]
    %v2475 = vld [vmem:[%s515 + $0x20] sm:$0xff]
    %v2476 = vld [vmem:[%s515 + $0x28] sm:$0xff]
    %v2477 = vld [vmem:[%s515 + $0x30] sm:$0xff]
    %v2478 = vld [vmem:[%s515 + $0x38] sm:$0xff]
    %v2479 = vld [vmem:[%s515 + $0x40] sm:$0xff]
    %v2480 = vld [vmem:[%s515 + $0x48] sm:$0xff]
    %v2481 = vld [vmem:[%s515 + $0x50] sm:$0xff]
    %v2482 = vld [vmem:[%s515 + $0x58] sm:$0xff]
    %v2483 = vrot.slane %v2187, 1
    %v2484 = vrot.slane %v2189, 2
    %v2485 = vor.u32 %v2483, %v2484
    %v2486 = vrot.slane %v2197, 1
    %v2487 = vrot.slane %v2193, 2
    %v2488 = vor.u32 %v2486, %v2487
    %v2489 = vsel %vm528, %v2485, %v2488
    %v2502 = vunpack.c.l.b16 %v2471
    %v2503 = vunpack.c.h.b16 %v2471
    %v2504 = vunpack.c.l.b16 %v2472
    %v2505 = vunpack.c.h.b16 %v2472
    %v2506 = vunpack.c.l.b16 %v2473
    %v2507 = vunpack.c.h.b16 %v2473
    %v2508 = vunpack.c.l.b16 %v2474
    %v2509 = vunpack.c.h.b16 %v2474
    %v2510 = vunpack.c.l.b16 %v2475
    %v2511 = vunpack.c.h.b16 %v2475
    %v2512 = vunpack.c.l.b16 %v2476
    %v2513 = vunpack.c.h.b16 %v2476
    %v2514 = vunpack.c.l.b16 %v2477
    %v2515 = vunpack.c.h.b16 %v2477
    %v2516 = vunpack.c.l.b16 %v2478
    %v2517 = vunpack.c.h.b16 %v2478
    %v2518 = vunpack.c.l.b16 %v2479
    %v2519 = vunpack.c.h.b16 %v2479
    %v2520 = vunpack.c.l.b16 %v2480
    %v2521 = vunpack.c.h.b16 %v2480
    %v2522 = vunpack.c.l.b16 %v2481
    %v2523 = vunpack.c.h.b16 %v2481
    %v2524 = vunpack.c.l.b16 %v2482
    %v2525 = vunpack.c.h.b16 %v2482
    %v2526 = vpack.c.b16 %v2504, %v2502
    %v2527 = vpack.c.b16 %v2505, %v2503
    %v2528 = vpack.c.b16 %v2508, %v2506
    %v2529 = vpack.c.b16 %v2509, %v2507
    %v2530 = vpack.c.b16 %v2512, %v2510
    %v2531 = vpack.c.b16 %v2513, %v2511
    %v2532 = vpack.c.b16 %v2516, %v2514
    %v2533 = vpack.c.b16 %v2517, %v2515
    %v2534 = vpack.c.b16 %v2520, %v2518
    %v2535 = vpack.c.b16 %v2521, %v2519
    %v2536 = vpack.c.b16 %v2524, %v2522
    %v2537 = vpack.c.b16 %v2525, %v2523
    %v2551 = vsel %vm147, %v2489, 0
    %v2554 = vsel %vm147, %v2488, 0
    %2556 = vmatprep.subr.bf16.mxu0 %v2527
    %2557 = vmatpush1.bf16.msra.mxu0 %v2526
    %2558 = vmatprep.subr.bf16.mxu0 %v2529
    %2559 = vmatpush1.bf16.msra.mxu0 %v2528
    %2560 = vmatprep.subr.bf16.mxu0 %v2531
    %2561 = vmatpush1.bf16.msra.mxu0 %v2530
    %2562 = vmatprep.subr.bf16.mxu0 %v2533
    %2563 = vmatpush1.bf16.msra.mxu0 %v2532
    %2564 = vmatprep.subr.bf16.mxu0 %v2535
    %2565 = vmatpush1.bf16.msra.mxu0 %v2534
    %2566 = vmatprep.subr.bf16.mxu0 %v2537
    %2567 = vmatpush1.bf16.msra.mxu0 %v2536
    %2568 = vmatprep.subr.bf16.mxu0 0
    %2569 = vmatpush1.bf16.msra.mxu0 0
    %2570 = vmatprep.subr.bf16.mxu0 0
    %2571 = vmatpush1.bf16.msra.mxu0 0
    %2572 = vmatprep.subr.bf16.mxu0 0
    %2573 = vmatpush1.bf16.msra.mxu0 0
    %2574 = vmatprep.subr.bf16.mxu0 0
    %2575 = vmatpush1.bf16.msra.mxu0 0
    %2576 = vmatprep.subr.bf16.mxu0 0
    %2577 = vmatpush1.bf16.msra.mxu0 0
    %2578 = vmatprep.subr.bf16.mxu0 0
    %2579 = vmatpush1.bf16.msra.mxu0 0
    %2580 = vmatprep.subr.bf16.mxu0 0
    %2581 = vmatpush1.bf16.msra.mxu0 0
    %2582 = vmatprep.subr.bf16.mxu0 0
    %2583 = vmatpush1.bf16.msra.mxu0 0
    %2584 = vmatprep.subr.bf16.mxu0 0
    %2585 = vmatpush1.bf16.msra.mxu0 0
    %2586 = vmatprep.subr.bf16.mxu0 0
    %2587 = vmatpush1.bf16.msra.mxu0 0
    %2588 = vmatprep.mubr.bf16.mxu0 0
    %2589 = vmatmul.mubr.bf16.gmra.mrb[0].mxu0 %v2551
    %v2590 = vpop.f32.mrb[0].mxu0
    %v2591 = vadd.f32 0.0, %v2590
    %v2592 = vpop.f32.mrb[0].mxu0
    %v2593 = vadd.f32 0.0, %v2592
    %v2594 = vpop.f32.mrb[0].mxu0
    %v2595 = vadd.f32 0.0, %v2594
    %v2596 = vpop.f32.mrb[0].mxu0
    %v2597 = vadd.f32 0.0, %v2596
    %2598 = vmatprep.mubr.bf16.mxu0 0
    %2599 = vmatmul.mubr.bf16.gmra.mrb[0].mxu0 %v2554
    %v2600 = vpop.f32.mrb[0].mxu0
    %v2601 = vadd.f32 0.0, %v2600
    %v2602 = vpop.f32.mrb[0].mxu0
    %v2603 = vadd.f32 0.0, %v2602
    %v2604 = vpop.f32.mrb[0].mxu0
    %v2605 = vadd.f32 0.0, %v2604
    %v2606 = vpop.f32.mrb[0].mxu0
    %v2607 = vadd.f32 0.0, %v2606
    %2608 = vdwg.mxu0
    %v2609 = vadd.f32 %v2463, %v2591
    %v2610 = vadd.f32 %v2464, %v2593
    %v2611 = vadd.f32 %v2465, %v2595
    %v2612 = vadd.f32 %v2466, %v2597
    %v2613 = vadd.f32 %v2467, %v2601
    %v2614 = vadd.f32 %v2468, %v2603
    %v2615 = vadd.f32 %v2469, %v2605
    %v2616 = vadd.f32 %v2470, %v2607
    %v2617 = vld [vmem:[%s663] sm:$0xff]
    %v2618 = vld [vmem:[%s663 + $0x8] sm:$0xff]
    %v2619 = vld [vmem:[%s663 + $0x10] sm:$0xff]
    %v2620 = vld [vmem:[%s663 + $0x18] sm:$0xff]
    %v2621 = vld [vmem:[%s663 + $0x20] sm:$0xff]
    %v2622 = vld [vmem:[%s663 + $0x28] sm:$0xff]
    %v2623 = vld [vmem:[%s663 + $0x30] sm:$0xff]
    %v2624 = vld [vmem:[%s663 + $0x38] sm:$0xff]
    %v2625 = vld [vmem:[%s663 + $0x40] sm:$0xff]
    %v2626 = vld [vmem:[%s663 + $0x48] sm:$0xff]
    %v2627 = vld [vmem:[%s663 + $0x50] sm:$0xff]
    %v2628 = vld [vmem:[%s663 + $0x58] sm:$0xff]
    %v2629 = vrot.slane %v2034, 2
    %v2630 = vrot.slane %v2035, 2
    %v2631 = vsel %vm676, %v2629, %v2630
    %v2644 = vunpack.c.l.b16 %v2617
    %v2645 = vunpack.c.h.b16 %v2617
    %v2646 = vunpack.c.l.b16 %v2618
    %v2647 = vunpack.c.h.b16 %v2618
    %v2648 = vunpack.c.l.b16 %v2619
    %v2649 = vunpack.c.h.b16 %v2619
    %v2650 = vunpack.c.l.b16 %v2620
    %v2651 = vunpack.c.h.b16 %v2620
    %v2652 = vunpack.c.l.b16 %v2621
    %v2653 = vunpack.c.h.b16 %v2621
    %v2654 = vunpack.c.l.b16 %v2622
    %v2655 = vunpack.c.h.b16 %v2622
    %v2656 = vunpack.c.l.b16 %v2623
    %v2657 = vunpack.c.h.b16 %v2623
    %v2658 = vunpack.c.l.b16 %v2624
    %v2659 = vunpack.c.h.b16 %v2624
    %v2660 = vunpack.c.l.b16 %v2625
    %v2661 = vunpack.c.h.b16 %v2625
    %v2662 = vunpack.c.l.b16 %v2626
    %v2663 = vunpack.c.h.b16 %v2626
    %v2664 = vunpack.c.l.b16 %v2627
    %v2665 = vunpack.c.h.b16 %v2627
    %v2666 = vunpack.c.l.b16 %v2628
    %v2667 = vunpack.c.h.b16 %v2628
    %v2668 = vpack.c.b16 %v2646, %v2644
    %v2669 = vpack.c.b16 %v2647, %v2645
    %v2670 = vpack.c.b16 %v2650, %v2648
    %v2671 = vpack.c.b16 %v2651, %v2649
    %v2672 = vpack.c.b16 %v2654, %v2652
    %v2673 = vpack.c.b16 %v2655, %v2653
    %v2674 = vpack.c.b16 %v2658, %v2656
    %v2675 = vpack.c.b16 %v2659, %v2657
    %v2676 = vpack.c.b16 %v2662, %v2660
    %v2677 = vpack.c.b16 %v2663, %v2661
    %v2678 = vpack.c.b16 %v2666, %v2664
    %v2679 = vpack.c.b16 %v2667, %v2665
    %v2693 = vsel %vm147, %v2631, 0
    %v2696 = vsel %vm147, %v2630, 0
    %2698 = vmatprep.subr.bf16.mxu0 %v2669
    %2699 = vmatpush1.bf16.msra.mxu0 %v2668
    %2700 = vmatprep.subr.bf16.mxu0 %v2671
    %2701 = vmatpush1.bf16.msra.mxu0 %v2670
    %2702 = vmatprep.subr.bf16.mxu0 %v2673
    %2703 = vmatpush1.bf16.msra.mxu0 %v2672
    %2704 = vmatprep.subr.bf16.mxu0 %v2675
    %2705 = vmatpush1.bf16.msra.mxu0 %v2674
    %2706 = vmatprep.subr.bf16.mxu0 %v2677
    %2707 = vmatpush1.bf16.msra.mxu0 %v2676
    %2708 = vmatprep.subr.bf16.mxu0 %v2679
    %2709 = vmatpush1.bf16.msra.mxu0 %v2678
    %2710 = vmatprep.subr.bf16.mxu0 0
    %2711 = vmatpush1.bf16.msra.mxu0 0
    %2712 = vmatprep.subr.bf16.mxu0 0
    %2713 = vmatpush1.bf16.msra.mxu0 0
    %2714 = vmatprep.subr.bf16.mxu0 0
    %2715 = vmatpush1.bf16.msra.mxu0 0
    %2716 = vmatprep.subr.bf16.mxu0 0
    %2717 = vmatpush1.bf16.msra.mxu0 0
    %2718 = vmatprep.subr.bf16.mxu0 0
    %2719 = vmatpush1.bf16.msra.mxu0 0
    %2720 = vmatprep.subr.bf16.mxu0 0
    %2721 = vmatpush1.bf16.msra.mxu0 0
    %2722 = vmatprep.subr.bf16.mxu0 0
    %2723 = vmatpush1.bf16.msra.mxu0 0
    %2724 = vmatprep.subr.bf16.mxu0 0
    %2725 = vmatpush1.bf16.msra.mxu0 0
    %2726 = vmatprep.subr.bf16.mxu0 0
    %2727 = vmatpush1.bf16.msra.mxu0 0
    %2728 = vmatprep.subr.bf16.mxu0 0
    %2729 = vmatpush1.bf16.msra.mxu0 0
    %2730 = vmatprep.mubr.bf16.mxu0 0
    %2731 = vmatmul.mubr.bf16.gmra.mrb[0].mxu0 %v2693
    %v2732 = vpop.f32.mrb[0].mxu0
    %v2733 = vadd.f32 0.0, %v2732
    %v2734 = vpop.f32.mrb[0].mxu0
    %v2735 = vadd.f32 0.0, %v2734
    %v2736 = vpop.f32.mrb[0].mxu0
    %v2737 = vadd.f32 0.0, %v2736
    %v2738 = vpop.f32.mrb[0].mxu0
    %v2739 = vadd.f32 0.0, %v2738
    %2740 = vmatprep.mubr.bf16.mxu0 0
    %2741 = vmatmul.mubr.bf16.gmra.mrb[0].mxu0 %v2696
    %v2742 = vpop.f32.mrb[0].mxu0
    %v2743 = vadd.f32 0.0, %v2742
    %v2744 = vpop.f32.mrb[0].mxu0
    %v2745 = vadd.f32 0.0, %v2744
    %v2746 = vpop.f32.mrb[0].mxu0
    %v2747 = vadd.f32 0.0, %v2746
    %v2748 = vpop.f32.mrb[0].mxu0
    %v2749 = vadd.f32 0.0, %v2748
    %2750 = vdwg.mxu0
    %v2751 = vadd.f32 %v2609, %v2733
    %v2752 = vadd.f32 %v2610, %v2735
    %v2753 = vadd.f32 %v2611, %v2737
    %v2754 = vadd.f32 %v2612, %v2739
    %v2755 = vadd.f32 %v2613, %v2743
    %v2756 = vadd.f32 %v2614, %v2745
    %v2757 = vadd.f32 %v2615, %v2747
    %v2758 = vadd.f32 %v2616, %v2749
    %v2759 = vmax.f32 %v2751, 0.0
    %v2760 = vmax.f32 %v2752, 0.0
    %v2761 = vmax.f32 %v2753, 0.0
    %v2762 = vmax.f32 %v2754, 0.0
    %v2763 = vmax.f32 %v2755, 0.0
    %v2764 = vmax.f32 %v2756, 0.0
    %v2765 = vmax.f32 %v2757, 0.0
    %v2766 = vmax.f32 %v2758, 0.0
    %v2775 = vrot.slane %v2759, 1
    %v2776 = vrot.slane %v2761, 1
    %v2777 = vsel %vm823, %v2775, %v2776
    %v2778 = vrot.slane %v2760, 1
    %v2779 = vrot.slane %v2762, 1
    %v2780 = vsel %vm823, %v2778, %v2779
    %v2781 = vrot.slane %v2763, 1
    %v2782 = vsel %vm823, %v2776, %v2781
    %v2783 = vrot.slane %v2764, 1
    %v2784 = vsel %vm823, %v2779, %v2783
    %v2785 = vrot.slane %v2765, 1
    %v2786 = vsel %vm823, %v2781, %v2785
    %v2787 = vrot.slane %v2766, 1
    %v2788 = vsel %vm823, %v2783, %v2787
    %v2797 = vmax.f32 %v2759, %v2777
    %v2798 = vmax.f32 %v2760, %v2780
    %v2799 = vmax.f32 %v2761, %v2782
    %v2800 = vmax.f32 %v2762, %v2784
    %v2801 = vmax.f32 %v2763, %v2786
    %v2802 = vmax.f32 %v2764, %v2788
    %v2803 = vmax.f32 %v2765, %v2785
    %v2804 = vmax.f32 %v2766, %v2787
    %v2806 = vsel %vm861, %v2803, 0
    %v2809 = vsel %vm861, %v2804, 0
    %2811 = vmatprep.subr.mxu0 %v2798
    %2812 = vmatpush1.msra.mxu0 %v2797
    %2813 = vmatprep.subr.mxu0 %v2800
    %2814 = vmatpush1.msra.mxu0 %v2799
    %2815 = vmatprep.subr.mxu0 %v2802
    %2816 = vmatpush1.msra.mxu0 %v2801
    %2817 = vmatprep.subr.mxu0 %v2809
    %2818 = vmatpush1.msra.mxu0 %v2806
    %2819 = vmatprep.subr.mxu0 0.0
    %2820 = vmatpush1.msra.mxu0 0.0
    %2821 = vmatprep.subr.mxu0 0.0
    %2822 = vmatpush1.msra.mxu0 0.0
    %2823 = vmatprep.subr.mxu0 0.0
    %2824 = vmatpush1.msra.mxu0 0.0
    %2825 = vmatprep.subr.mxu0 0.0
    %2826 = vmatpush1.msra.mxu0 0.0
    %2827 = vmatprep.subr.mxu0 0.0
    %2828 = vmatpush1.msra.mxu0 0.0
    %2829 = vmatprep.subr.mxu0 0.0
    %2830 = vmatpush1.msra.mxu0 0.0
    %2831 = vmatprep.subr.mxu0 0.0
    %2832 = vmatpush1.msra.mxu0 0.0
    %2833 = vmatprep.subr.mxu0 0.0
    %2834 = vmatpush1.msra.mxu0 0.0
    %2835 = vmatprep.subr.mxu0 0.0
    %2836 = vmatpush1.msra.mxu0 0.0
    %2837 = vmatprep.subr.mxu0 0.0
    %2838 = vmatpush1.msra.mxu0 0.0
    %2839 = vmatprep.subr.mxu0 0.0
    %2840 = vmatpush1.msra.mxu0 0.0
    %2841 = vmatprep.subr.mxu0 0.0
    %2842 = vmatpush1.msra.mxu0 0.0
    %2843 = vmatprep.subr.mxu0 0.0
    %2844 = vmatpush1.msra.mxu0 0.0
    %2845 = vmatprep.subr.mxu0 0.0
    %2846 = vmatpush1.msra.mxu0 0.0
    %2847 = vmatprep.subr.mxu0 0.0
    %2848 = vmatpush1.msra.mxu0 0.0
    %2849 = vmatprep.subr.mxu0 0.0
    %2850 = vmatpush1.msra.mxu0 0.0
    %2851 = vmatprep.subr.mxu0 0.0
    %2852 = vmatpush1.msra.mxu0 0.0
    %2853 = vmatprep.subr.mxu0 0.0
    %2854 = vmatpush1.msra.mxu0 0.0
    %2855 = vmatprep.subr.mxu0 0.0
    %2856 = vmatpush1.msra.mxu0 0.0
    %2857 = vmatprep.subr.mxu0 0.0
    %2858 = vmatpush1.msra.mxu0 0.0
    %2859 = vmatprep.subr.mxu0 0.0
    %2860 = vmatpush1.msra.mxu0 0.0
    %2861 = vmatprep.subr.mxu0 0.0
    %2862 = vmatpush1.msra.mxu0 0.0
    %2863 = vmatprep.subr.mxu0 0.0
    %2864 = vmatpush1.msra.mxu0 0.0
    %2865 = vmatprep.subr.mxu0 0.0
    %2866 = vmatpush1.msra.mxu0 0.0
    %2867 = vmatprep.subr.mxu0 0.0
    %2868 = vmatpush1.msra.mxu0 0.0
    %2869 = vmatprep.subr.mxu0 0.0
    %2870 = vmatpush1.msra.mxu0 0.0
    %2871 = vmatprep.subr.mxu0 0.0
    %2872 = vmatpush1.msra.mxu0 0.0
    %2873 = vmatprep.subr.mxu0 0.0
    %2874 = vmatpush1.msra.mxu0 0.0
    %2875 = vmatprep.mubr.f32.mxu0 0.0
    %2876 = vmatmul.mubr.f32.gmra.mrb[0].mxu0 %v856
    %v2877 = vpop.f32.mrb[0].mxu0
    %v2878 = vadd.f32 0.0, %v2877
    %v2879 = vpop.f32.mrb[0].mxu0
    %v2880 = vadd.f32 0.0, %v2879
    %2881 = vmatprep.mubr.f32.mxu0 0.0
    %2882 = vmatmul.mubr.f32.gmra.mrb[0].mxu0 %v859
    %v2883 = vpop.f32.mrb[0].mxu0
    %v2884 = vadd.f32 0.0, %v2883
    %v2885 = vpop.f32.mrb[0].mxu0
    %v2886 = vadd.f32 0.0, %v2885
    %2887 = vdwg.mxu0
    %2892 = vrot.lane.b32.xlu0 %v2878, 122
    %v2893 = vpop.permute.xlu0 %2892
    %2894 = vrot.lane.b32.xlu0 %v2880, 122
    %v2895 = vpop.permute.xlu0 %2894
    %2896 = vrot.lane.b32.xlu0 %v2884, 122
    %v2897 = vpop.permute.xlu0 %2896
    %2898 = vrot.lane.b32.xlu0 %v2886, 122
    %v2899 = vpop.permute.xlu0 %2898
    %v2900 = vsel %vm957, %v2893, %v2895
    %v2901 = vsel %vm957, %v2897, %v2899
    %v2906 = vmax.f32 %v2878, %v2900
    %v2907 = vmax.f32 %v2880, %v2895
    %v2908 = vmax.f32 %v2884, %v2901
    %v2909 = vmax.f32 %v2886, %v2899
    %v2910 = vpack.c.bf16 %v2908, %v2906
    %v2911 = vpack.c.bf16 %v2909, %v2907
    %v2912 = vld [vmem:[%s4] sm:$0xff]
    %v2913 = vld [vmem:[%s4 + $0x8] sm:$0xff]
    %v2914 = vld [vmem:[%s4 + $0x10] sm:$0xff]
    %v2915 = vld [vmem:[%s4 + $0x18] sm:$0xff]
    %v2916 = vld [vmem:[%s4 + $0x20] sm:$0xff]
    %v2917 = vld [vmem:[%s4 + $0x28] sm:$0xff]
    %v2918 = vld [vmem:[%s4 + $0x30] sm:$0xff]
    %v2919 = vld [vmem:[%s4 + $0x38] sm:$0xff]
    %v2920 = vld [vmem:[%s4 + $0x40] sm:$0xff]
    %v2921 = vld [vmem:[%s4 + $0x48] sm:$0xff]
    %v2922 = vld [vmem:[%s4 + $0x50] sm:$0xff]
    %v2923 = vld [vmem:[%s4 + $0x58] sm:$0xff]
    %v2924 = vld [vmem:[%s4 + $0x60] sm:$0xff]
    %v2925 = vld [vmem:[%s4 + $0x68] sm:$0xff]
    %v2926 = vld [vmem:[%s4 + $0x70] sm:$0xff]
    %v2927 = vld [vmem:[%s4 + $0x78] sm:$0xff]
    %v2928 = vld [vmem:[%s4 + $0x80] sm:$0xff]
    %v2929 = vld [vmem:[%s4 + $0x88] sm:$0xff]
    %v2930 = vld [vmem:[%s4 + $0x90] sm:$0xff]
    %v2931 = vld [vmem:[%s4 + $0x98] sm:$0xff]
    %v2932 = vld [vmem:[%s4 + $0xa0] sm:$0x11]
    %v2954 = vunpack.c.l.b16 %v2912
    %v2955 = vunpack.c.h.b16 %v2912
    %v2956 = vunpack.c.l.b16 %v2913
    %v2957 = vunpack.c.h.b16 %v2913
    %v2958 = vunpack.c.l.b16 %v2914
    %v2959 = vunpack.c.h.b16 %v2914
    %v2960 = vunpack.c.l.b16 %v2915
    %v2961 = vunpack.c.h.b16 %v2915
    %v2962 = vunpack.c.l.b16 %v2916
    %v2963 = vunpack.c.h.b16 %v2916
    %v2964 = vunpack.c.l.b16 %v2917
    %v2965 = vunpack.c.h.b16 %v2917
    %v2966 = vunpack.c.l.b16 %v2918
    %v2967 = vunpack.c.h.b16 %v2918
    %v2968 = vunpack.c.l.b16 %v2919
    %v2969 = vunpack.c.h.b16 %v2919
    %v2970 = vunpack.c.l.b16 %v2920
    %v2971 = vunpack.c.h.b16 %v2920
    %v2972 = vunpack.c.l.b16 %v2921
    %v2973 = vunpack.c.h.b16 %v2921
    %v2974 = vunpack.c.l.b16 %v2922
    %v2975 = vunpack.c.h.b16 %v2922
    %v2976 = vunpack.c.l.b16 %v2923
    %v2977 = vunpack.c.h.b16 %v2923
    %v2978 = vunpack.c.l.b16 %v2924
    %v2979 = vunpack.c.h.b16 %v2924
    %v2980 = vunpack.c.l.b16 %v2925
    %v2981 = vunpack.c.h.b16 %v2925
    %v2982 = vunpack.c.l.b16 %v2926
    %v2983 = vunpack.c.h.b16 %v2926
    %v2984 = vunpack.c.l.b16 %v2927
    %v2985 = vunpack.c.h.b16 %v2927
    %v2986 = vunpack.c.l.b16 %v2928
    %v2987 = vunpack.c.h.b16 %v2928
    %v2988 = vunpack.c.l.b16 %v2929
    %v2989 = vunpack.c.h.b16 %v2929
    %v2990 = vunpack.c.l.b16 %v2930
    %v2991 = vunpack.c.h.b16 %v2930
    %v2992 = vunpack.c.l.b16 %v2931
    %v2993 = vunpack.c.h.b16 %v2931
    %v2994 = vunpack.c.l.b16 %v2932
    %v2995 = vunpack.c.h.b16 %v2932
    %v2996 = vpack.c.b16 %v2956, %v2954
    %v2997 = vpack.c.b16 %v2957, %v2955
    %v2998 = vpack.c.b16 %v2960, %v2958
    %v2999 = vpack.c.b16 %v2961, %v2959
    %v3000 = vpack.c.b16 %v2964, %v2962
    %v3001 = vpack.c.b16 %v2965, %v2963
    %v3002 = vpack.c.b16 %v2968, %v2966
    %v3003 = vpack.c.b16 %v2969, %v2967
    %v3004 = vpack.c.b16 %v2972, %v2970
    %v3005 = vpack.c.b16 %v2973, %v2971
    %v3006 = vpack.c.b16 %v2976, %v2974
    %v3007 = vpack.c.b16 %v2977, %v2975
    %v3008 = vpack.c.b16 %v2980, %v2978
    %v3009 = vpack.c.b16 %v2981, %v2979
    %v3010 = vpack.c.b16 %v2984, %v2982
    %v3011 = vpack.c.b16 %v2985, %v2983
    %v3012 = vpack.c.b16 %v2988, %v2986
    %v3013 = vpack.c.b16 %v2989, %v2987
    %v3014 = vpack.c.b16 %v2992, %v2990
    %v3015 = vpack.c.b16 %v2993, %v2991
    %v3016 = vpack.c.b16 %v2994, %v2994
    %v3017 = vpack.c.b16 %v2995, %v2995
    %v3039 = vsel %vm1096, %v2911, 0
    %v3042 = vsel %vm1100, %v3016, 0
    %v3045 = vsel %vm1100, %v3017, 0
    %3047 = vmatprep.subr.bf16.mxu0 %v2997
    %3048 = vmatpush1.bf16.msra.mxu0 %v2996
    %3049 = vmatprep.subr.bf16.mxu0 %v2999
    %3050 = vmatpush1.bf16.msra.mxu0 %v2998
    %3051 = vmatprep.subr.bf16.mxu0 %v3001
    %3052 = vmatpush1.bf16.msra.mxu0 %v3000
    %3053 = vmatprep.subr.bf16.mxu0 %v3003
    %3054 = vmatpush1.bf16.msra.mxu0 %v3002
    %3055 = vmatprep.subr.bf16.mxu0 %v3005
    %3056 = vmatpush1.bf16.msra.mxu0 %v3004
    %3057 = vmatprep.subr.bf16.mxu0 %v3007
    %3058 = vmatpush1.bf16.msra.mxu0 %v3006
    %3059 = vmatprep.subr.bf16.mxu0 %v3009
    %3060 = vmatpush1.bf16.msra.mxu0 %v3008
    %3061 = vmatprep.subr.bf16.mxu0 %v3011
    %3062 = vmatpush1.bf16.msra.mxu0 %v3010
    %3063 = vmatprep.subr.bf16.mxu0 %v3013
    %3064 = vmatpush1.bf16.msra.mxu0 %v3012
    %3065 = vmatprep.subr.bf16.mxu0 %v3015
    %3066 = vmatpush1.bf16.msra.mxu0 %v3014
    %3067 = vmatprep.subr.bf16.mxu0 %v3045
    %3068 = vmatpush1.bf16.msra.mxu0 %v3042
    %3069 = vmatprep.subr.bf16.mxu0 0
    %3070 = vmatpush1.bf16.msra.mxu0 0
    %3071 = vmatprep.subr.bf16.mxu0 0
    %3072 = vmatpush1.bf16.msra.mxu0 0
    %3073 = vmatprep.subr.bf16.mxu0 0
    %3074 = vmatpush1.bf16.msra.mxu0 0
    %3075 = vmatprep.subr.bf16.mxu0 0
    %3076 = vmatpush1.bf16.msra.mxu0 0
    %3077 = vmatprep.subr.bf16.mxu0 0
    %3078 = vmatpush1.bf16.msra.mxu0 0
    %3079 = vmatprep.mubr.bf16.mxu0 %v3039
    %3080 = vmatmul.mubr.bf16.gmra.mrb[0].mxu0 %v2910
    %v3081 = vpop.f32.mrb[0].mxu0
    %v3082 = vadd.f32 0.0, %v3081
    %v3083 = vpop.f32.mrb[0].mxu0
    %v3084 = vadd.f32 0.0, %v3083
    %v3085 = vpop.f32.mrb[0].mxu0
    %v3086 = vadd.f32 0.0, %v3085
    %v3087 = vpop.f32.mrb[0].mxu0
    %v3088 = vadd.f32 0.0, %v3087
    %3089 = vdwg.mxu0
    %v3090 = vadd.f32 %v60, %v3082
    %v3091 = vadd.f32 %v64, %v3084
    %v3092 = vadd.f32 %v60, %v3086
    %v3093 = vadd.f32 %v64, %v3088
    %v3094 = vld [vmem:[%s1154] sm:$0xff]
    %v3095 = vld [vmem:[%s1154 + $0x8] sm:$0xff]
    %v3096 = vld [vmem:[%s1154 + $0x10] sm:$0xff]
    %v3097 = vld [vmem:[%s1154 + $0x18] sm:$0xff]
    %v3098 = vld [vmem:[%s1154 + $0x20] sm:$0xff]
    %v3099 = vld [vmem:[%s1154 + $0x28] sm:$0xff]
    %v3100 = vld [vmem:[%s1154 + $0x30] sm:$0xff]
    %v3101 = vld [vmem:[%s1154 + $0x38] sm:$0xff]
    %v3102 = vld [vmem:[%s1154 + $0x40] sm:$0xff]
    %v3103 = vld [vmem:[%s1154 + $0x48] sm:$0xff]
    %v3104 = vld [vmem:[%s1154 + $0x50] sm:$0xff]
    %v3105 = vld [vmem:[%s1154 + $0x58] sm:$0xff]
    %v3106 = vld [vmem:[%s1154 + $0x60] sm:$0xff]
    %v3107 = vld [vmem:[%s1154 + $0x68] sm:$0xff]
    %v3108 = vld [vmem:[%s1154 + $0x70] sm:$0xff]
    %v3109 = vld [vmem:[%s1154 + $0x78] sm:$0xff]
    %v3110 = vld [vmem:[%s1154 + $0x80] sm:$0xff]
    %v3111 = vld [vmem:[%s1154 + $0x88] sm:$0xff]
    %v3112 = vld [vmem:[%s1154 + $0x90] sm:$0xff]
    %v3113 = vld [vmem:[%s1154 + $0x98] sm:$0xff]
    %v3114 = vld [vmem:[%s1154 + $0xa0] sm:$0x11]
    %v3116 = vshrl.u32 %v2910, 16
    %v3118 = vshll.u32 %v2910, 16
    %v3120 = vrot.slane %v3118, 1
    %v3121 = vor.u32 %v3116, %v3120
    %v3122 = vshrl.u32 %v2911, 16
    %v3124 = vshll.u32 %v2911, 16
    %v3126 = vrot.slane %v3124, 1
    %v3127 = vor.u32 %v3122, %v3126
    %v3150 = vunpack.c.l.b16 %v3094
    %v3151 = vunpack.c.h.b16 %v3094
    %v3152 = vunpack.c.l.b16 %v3095
    %v3153 = vunpack.c.h.b16 %v3095
    %v3154 = vunpack.c.l.b16 %v3096
    %v3155 = vunpack.c.h.b16 %v3096
    %v3156 = vunpack.c.l.b16 %v3097
    %v3157 = vunpack.c.h.b16 %v3097
    %v3158 = vunpack.c.l.b16 %v3098
    %v3159 = vunpack.c.h.b16 %v3098
    %v3160 = vunpack.c.l.b16 %v3099
    %v3161 = vunpack.c.h.b16 %v3099
    %v3162 = vunpack.c.l.b16 %v3100
    %v3163 = vunpack.c.h.b16 %v3100
    %v3164 = vunpack.c.l.b16 %v3101
    %v3165 = vunpack.c.h.b16 %v3101
    %v3166 = vunpack.c.l.b16 %v3102
    %v3167 = vunpack.c.h.b16 %v3102
    %v3168 = vunpack.c.l.b16 %v3103
    %v3169 = vunpack.c.h.b16 %v3103
    %v3170 = vunpack.c.l.b16 %v3104
    %v3171 = vunpack.c.h.b16 %v3104
    %v3172 = vunpack.c.l.b16 %v3105
    %v3173 = vunpack.c.h.b16 %v3105
    %v3174 = vunpack.c.l.b16 %v3106
    %v3175 = vunpack.c.h.b16 %v3106
    %v3176 = vunpack.c.l.b16 %v3107
    %v3177 = vunpack.c.h.b16 %v3107
    %v3178 = vunpack.c.l.b16 %v3108
    %v3179 = vunpack.c.h.b16 %v3108
    %v3180 = vunpack.c.l.b16 %v3109
    %v3181 = vunpack.c.h.b16 %v3109
    %v3182 = vunpack.c.l.b16 %v3110
    %v3183 = vunpack.c.h.b16 %v3110
    %v3184 = vunpack.c.l.b16 %v3111
    %v3185 = vunpack.c.h.b16 %v3111
    %v3186 = vunpack.c.l.b16 %v3112
    %v3187 = vunpack.c.h.b16 %v3112
    %v3188 = vunpack.c.l.b16 %v3113
    %v3189 = vunpack.c.h.b16 %v3113
    %v3190 = vunpack.c.l.b16 %v3114
    %v3191 = vunpack.c.h.b16 %v3114
    %v3192 = vpack.c.b16 %v3152, %v3150
    %v3193 = vpack.c.b16 %v3153, %v3151
    %v3194 = vpack.c.b16 %v3156, %v3154
    %v3195 = vpack.c.b16 %v3157, %v3155
    %v3196 = vpack.c.b16 %v3160, %v3158
    %v3197 = vpack.c.b16 %v3161, %v3159
    %v3198 = vpack.c.b16 %v3164, %v3162
    %v3199 = vpack.c.b16 %v3165, %v3163
    %v3200 = vpack.c.b16 %v3168, %v3166
    %v3201 = vpack.c.b16 %v3169, %v3167
    %v3202 = vpack.c.b16 %v3172, %v3170
    %v3203 = vpack.c.b16 %v3173, %v3171
    %v3204 = vpack.c.b16 %v3176, %v3174
    %v3205 = vpack.c.b16 %v3177, %v3175
    %v3206 = vpack.c.b16 %v3180, %v3178
    %v3207 = vpack.c.b16 %v3181, %v3179
    %v3208 = vpack.c.b16 %v3184, %v3182
    %v3209 = vpack.c.b16 %v3185, %v3183
    %v3210 = vpack.c.b16 %v3188, %v3186
    %v3211 = vpack.c.b16 %v3189, %v3187
    %v3212 = vpack.c.b16 %v3190, %v3190
    %v3213 = vpack.c.b16 %v3191, %v3191
    %v3235 = vsel %vm1096, %v3127, 0
    %v3238 = vsel %vm1100, %v3212, 0
    %v3241 = vsel %vm1100, %v3213, 0
    %3243 = vmatprep.subr.bf16.mxu0 %v3193
    %3244 = vmatpush1.bf16.msra.mxu0 %v3192
    %3245 = vmatprep.subr.bf16.mxu0 %v3195
    %3246 = vmatpush1.bf16.msra.mxu0 %v3194
    %3247 = vmatprep.subr.bf16.mxu0 %v3197
    %3248 = vmatpush1.bf16.msra.mxu0 %v3196
    %3249 = vmatprep.subr.bf16.mxu0 %v3199
    %3250 = vmatpush1.bf16.msra.mxu0 %v3198
    %3251 = vmatprep.subr.bf16.mxu0 %v3201
    %3252 = vmatpush1.bf16.msra.mxu0 %v3200
    %3253 = vmatprep.subr.bf16.mxu0 %v3203
    %3254 = vmatpush1.bf16.msra.mxu0 %v3202
    %3255 = vmatprep.subr.bf16.mxu0 %v3205
    %3256 = vmatpush1.bf16.msra.mxu0 %v3204
    %3257 = vmatprep.subr.bf16.mxu0 %v3207
    %3258 = vmatpush1.bf16.msra.mxu0 %v3206
    %3259 = vmatprep.subr.bf16.mxu0 %v3209
    %3260 = vmatpush1.bf16.msra.mxu0 %v3208
    %3261 = vmatprep.subr.bf16.mxu0 %v3211
    %3262 = vmatpush1.bf16.msra.mxu0 %v3210
    %3263 = vmatprep.subr.bf16.mxu0 %v3241
    %3264 = vmatpush1.bf16.msra.mxu0 %v3238
    %3265 = vmatprep.subr.bf16.mxu0 0
    %3266 = vmatpush1.bf16.msra.mxu0 0
    %3267 = vmatprep.subr.bf16.mxu0 0
    %3268 = vmatpush1.bf16.msra.mxu0 0
    %3269 = vmatprep.subr.bf16.mxu0 0
    %3270 = vmatpush1.bf16.msra.mxu0 0
    %3271 = vmatprep.subr.bf16.mxu0 0
    %3272 = vmatpush1.bf16.msra.mxu0 0
    %3273 = vmatprep.subr.bf16.mxu0 0
    %3274 = vmatpush1.bf16.msra.mxu0 0
    %3275 = vmatprep.mubr.bf16.mxu0 %v3235
    %3276 = vmatmul.mubr.bf16.gmra.mrb[0].mxu0 %v3121
    %v3277 = vpop.f32.mrb[0].mxu0
    %v3278 = vadd.f32 0.0, %v3277
    %v3279 = vpop.f32.mrb[0].mxu0
    %v3280 = vadd.f32 0.0, %v3279
    %v3281 = vpop.f32.mrb[0].mxu0
    %v3282 = vadd.f32 0.0, %v3281
    %v3283 = vpop.f32.mrb[0].mxu0
    %v3284 = vadd.f32 0.0, %v3283
    %3285 = vdwg.mxu0
    %v3286 = vadd.f32 %v3090, %v3278
    %v3287 = vadd.f32 %v3091, %v3280
    %v3288 = vadd.f32 %v3092, %v3282
    %v3289 = vadd.f32 %v3093, %v3284
    %v3290 = vld [vmem:[%s1351] sm:$0xff]
    %v3291 = vld [vmem:[%s1351 + $0x8] sm:$0xff]
    %v3292 = vld [vmem:[%s1351 + $0x10] sm:$0xff]
    %v3293 = vld [vmem:[%s1351 + $0x18] sm:$0xff]
    %v3294 = vld [vmem:[%s1351 + $0x20] sm:$0xff]
    %v3295 = vld [vmem:[%s1351 + $0x28] sm:$0xff]
    %v3296 = vld [vmem:[%s1351 + $0x30] sm:$0xff]
    %v3297 = vld [vmem:[%s1351 + $0x38] sm:$0xff]
    %v3298 = vld [vmem:[%s1351 + $0x40] sm:$0xff]
    %v3299 = vld [vmem:[%s1351 + $0x48] sm:$0xff]
    %v3300 = vld [vmem:[%s1351 + $0x50] sm:$0xff]
    %v3301 = vld [vmem:[%s1351 + $0x58] sm:$0xff]
    %v3302 = vld [vmem:[%s1351 + $0x60] sm:$0xff]
    %v3303 = vld [vmem:[%s1351 + $0x68] sm:$0xff]
    %v3304 = vld [vmem:[%s1351 + $0x70] sm:$0xff]
    %v3305 = vld [vmem:[%s1351 + $0x78] sm:$0xff]
    %v3306 = vld [vmem:[%s1351 + $0x80] sm:$0xff]
    %v3307 = vld [vmem:[%s1351 + $0x88] sm:$0xff]
    %v3308 = vld [vmem:[%s1351 + $0x90] sm:$0xff]
    %v3309 = vld [vmem:[%s1351 + $0x98] sm:$0xff]
    %v3310 = vld [vmem:[%s1351 + $0xa0] sm:$0x11]
    %v3313 = vrot.slane %v2910, 1
    %v3314 = vrot.slane %v2911, 1
    %v3337 = vunpack.c.l.b16 %v3290
    %v3338 = vunpack.c.h.b16 %v3290
    %v3339 = vunpack.c.l.b16 %v3291
    %v3340 = vunpack.c.h.b16 %v3291
    %v3341 = vunpack.c.l.b16 %v3292
    %v3342 = vunpack.c.h.b16 %v3292
    %v3343 = vunpack.c.l.b16 %v3293
    %v3344 = vunpack.c.h.b16 %v3293
    %v3345 = vunpack.c.l.b16 %v3294
    %v3346 = vunpack.c.h.b16 %v3294
    %v3347 = vunpack.c.l.b16 %v3295
    %v3348 = vunpack.c.h.b16 %v3295
    %v3349 = vunpack.c.l.b16 %v3296
    %v3350 = vunpack.c.h.b16 %v3296
    %v3351 = vunpack.c.l.b16 %v3297
    %v3352 = vunpack.c.h.b16 %v3297
    %v3353 = vunpack.c.l.b16 %v3298
    %v3354 = vunpack.c.h.b16 %v3298
    %v3355 = vunpack.c.l.b16 %v3299
    %v3356 = vunpack.c.h.b16 %v3299
    %v3357 = vunpack.c.l.b16 %v3300
    %v3358 = vunpack.c.h.b16 %v3300
    %v3359 = vunpack.c.l.b16 %v3301
    %v3360 = vunpack.c.h.b16 %v3301
    %v3361 = vunpack.c.l.b16 %v3302
    %v3362 = vunpack.c.h.b16 %v3302
    %v3363 = vunpack.c.l.b16 %v3303
    %v3364 = vunpack.c.h.b16 %v3303
    %v3365 = vunpack.c.l.b16 %v3304
    %v3366 = vunpack.c.h.b16 %v3304
    %v3367 = vunpack.c.l.b16 %v3305
    %v3368 = vunpack.c.h.b16 %v3305
    %v3369 = vunpack.c.l.b16 %v3306
    %v3370 = vunpack.c.h.b16 %v3306
    %v3371 = vunpack.c.l.b16 %v3307
    %v3372 = vunpack.c.h.b16 %v3307
    %v3373 = vunpack.c.l.b16 %v3308
    %v3374 = vunpack.c.h.b16 %v3308
    %v3375 = vunpack.c.l.b16 %v3309
    %v3376 = vunpack.c.h.b16 %v3309
    %v3377 = vunpack.c.l.b16 %v3310
    %v3378 = vunpack.c.h.b16 %v3310
    %v3379 = vpack.c.b16 %v3339, %v3337
    %v3380 = vpack.c.b16 %v3340, %v3338
    %v3381 = vpack.c.b16 %v3343, %v3341
    %v3382 = vpack.c.b16 %v3344, %v3342
    %v3383 = vpack.c.b16 %v3347, %v3345
    %v3384 = vpack.c.b16 %v3348, %v3346
    %v3385 = vpack.c.b16 %v3351, %v3349
    %v3386 = vpack.c.b16 %v3352, %v3350
    %v3387 = vpack.c.b16 %v3355, %v3353
    %v3388 = vpack.c.b16 %v3356, %v3354
    %v3389 = vpack.c.b16 %v3359, %v3357
    %v3390 = vpack.c.b16 %v3360, %v3358
    %v3391 = vpack.c.b16 %v3363, %v3361
    %v3392 = vpack.c.b16 %v3364, %v3362
    %v3393 = vpack.c.b16 %v3367, %v3365
    %v3394 = vpack.c.b16 %v3368, %v3366
    %v3395 = vpack.c.b16 %v3371, %v3369
    %v3396 = vpack.c.b16 %v3372, %v3370
    %v3397 = vpack.c.b16 %v3375, %v3373
    %v3398 = vpack.c.b16 %v3376, %v3374
    %v3399 = vpack.c.b16 %v3377, %v3377
    %v3400 = vpack.c.b16 %v3378, %v3378
    %v3422 = vsel %vm1096, %v3314, 0
    %v3425 = vsel %vm1100, %v3399, 0
    %v3428 = vsel %vm1100, %v3400, 0
    %3430 = vmatprep.subr.bf16.mxu0 %v3380
    %3431 = vmatpush1.bf16.msra.mxu0 %v3379
    %3432 = vmatprep.subr.bf16.mxu0 %v3382
    %3433 = vmatpush1.bf16.msra.mxu0 %v3381
    %3434 = vmatprep.subr.bf16.mxu0 %v3384
    %3435 = vmatpush1.bf16.msra.mxu0 %v3383
    %3436 = vmatprep.subr.bf16.mxu0 %v3386
    %3437 = vmatpush1.bf16.msra.mxu0 %v3385
    %3438 = vmatprep.subr.bf16.mxu0 %v3388
    %3439 = vmatpush1.bf16.msra.mxu0 %v3387
    %3440 = vmatprep.subr.bf16.mxu0 %v3390
    %3441 = vmatpush1.bf16.msra.mxu0 %v3389
    %3442 = vmatprep.subr.bf16.mxu0 %v3392
    %3443 = vmatpush1.bf16.msra.mxu0 %v3391
    %3444 = vmatprep.subr.bf16.mxu0 %v3394
    %3445 = vmatpush1.bf16.msra.mxu0 %v3393
    %3446 = vmatprep.subr.bf16.mxu0 %v3396
    %3447 = vmatpush1.bf16.msra.mxu0 %v3395
    %3448 = vmatprep.subr.bf16.mxu0 %v3398
    %3449 = vmatpush1.bf16.msra.mxu0 %v3397
    %3450 = vmatprep.subr.bf16.mxu0 %v3428
    %3451 = vmatpush1.bf16.msra.mxu0 %v3425
    %3452 = vmatprep.subr.bf16.mxu0 0
    %3453 = vmatpush1.bf16.msra.mxu0 0
    %3454 = vmatprep.subr.bf16.mxu0 0
    %3455 = vmatpush1.bf16.msra.mxu0 0
    %3456 = vmatprep.subr.bf16.mxu0 0
    %3457 = vmatpush1.bf16.msra.mxu0 0
    %3458 = vmatprep.subr.bf16.mxu0 0
    %3459 = vmatpush1.bf16.msra.mxu0 0
    %3460 = vmatprep.subr.bf16.mxu0 0
    %3461 = vmatpush1.bf16.msra.mxu0 0
    %3462 = vmatprep.mubr.bf16.mxu0 %v3422
    %3463 = vmatmul.mubr.bf16.gmra.mrb[0].mxu0 %v3313
    %v3464 = vpop.f32.mrb[0].mxu0
    %v3465 = vadd.f32 0.0, %v3464
    %v3466 = vpop.f32.mrb[0].mxu0
    %v3467 = vadd.f32 0.0, %v3466
    %v3468 = vpop.f32.mrb[0].mxu0
    %v3469 = vadd.f32 0.0, %v3468
    %v3470 = vpop.f32.mrb[0].mxu0
    %v3471 = vadd.f32 0.0, %v3470
    %3472 = vdwg.mxu0
    %v3473 = vadd.f32 %v3286, %v3465
    %v3474 = vadd.f32 %v3287, %v3467
    %v3475 = vadd.f32 %v3288, %v3469
    %v3476 = vadd.f32 %v3289, %v3471
    %v3477 = vld [vmem:[%s1539] sm:$0xff]
    %v3478 = vld [vmem:[%s1539 + $0x8] sm:$0xff]
    %v3479 = vld [vmem:[%s1539 + $0x10] sm:$0xff]
    %v3480 = vld [vmem:[%s1539 + $0x18] sm:$0xff]
    %v3481 = vld [vmem:[%s1539 + $0x20] sm:$0xff]
    %v3482 = vld [vmem:[%s1539 + $0x28] sm:$0xff]
    %v3483 = vld [vmem:[%s1539 + $0x30] sm:$0xff]
    %v3484 = vld [vmem:[%s1539 + $0x38] sm:$0xff]
    %v3485 = vld [vmem:[%s1539 + $0x40] sm:$0xff]
    %v3486 = vld [vmem:[%s1539 + $0x48] sm:$0xff]
    %v3487 = vld [vmem:[%s1539 + $0x50] sm:$0xff]
    %v3488 = vld [vmem:[%s1539 + $0x58] sm:$0xff]
    %v3489 = vld [vmem:[%s1539 + $0x60] sm:$0xff]
    %v3490 = vld [vmem:[%s1539 + $0x68] sm:$0xff]
    %v3491 = vld [vmem:[%s1539 + $0x70] sm:$0xff]
    %v3492 = vld [vmem:[%s1539 + $0x78] sm:$0xff]
    %v3493 = vld [vmem:[%s1539 + $0x80] sm:$0xff]
    %v3494 = vld [vmem:[%s1539 + $0x88] sm:$0xff]
    %v3495 = vld [vmem:[%s1539 + $0x90] sm:$0xff]
    %v3496 = vld [vmem:[%s1539 + $0x98] sm:$0xff]
    %v3497 = vld [vmem:[%s1539 + $0xa0] sm:$0x11]
    %v3498 = vrot.slane %v3116, 1
    %v3499 = vrot.slane %v3118, 2
    %v3500 = vor.u32 %v3498, %v3499
    %v3501 = vrot.slane %v3122, 1
    %v3502 = vrot.slane %v3124, 2
    %v3503 = vor.u32 %v3501, %v3502
    %v3526 = vunpack.c.l.b16 %v3477
    %v3527 = vunpack.c.h.b16 %v3477
    %v3528 = vunpack.c.l.b16 %v3478
    %v3529 = vunpack.c.h.b16 %v3478
    %v3530 = vunpack.c.l.b16 %v3479
    %v3531 = vunpack.c.h.b16 %v3479
    %v3532 = vunpack.c.l.b16 %v3480
    %v3533 = vunpack.c.h.b16 %v3480
    %v3534 = vunpack.c.l.b16 %v3481
    %v3535 = vunpack.c.h.b16 %v3481
    %v3536 = vunpack.c.l.b16 %v3482
    %v3537 = vunpack.c.h.b16 %v3482
    %v3538 = vunpack.c.l.b16 %v3483
    %v3539 = vunpack.c.h.b16 %v3483
    %v3540 = vunpack.c.l.b16 %v3484
    %v3541 = vunpack.c.h.b16 %v3484
    %v3542 = vunpack.c.l.b16 %v3485
    %v3543 = vunpack.c.h.b16 %v3485
    %v3544 = vunpack.c.l.b16 %v3486
    %v3545 = vunpack.c.h.b16 %v3486
    %v3546 = vunpack.c.l.b16 %v3487
    %v3547 = vunpack.c.h.b16 %v3487
    %v3548 = vunpack.c.l.b16 %v3488
    %v3549 = vunpack.c.h.b16 %v3488
    %v3550 = vunpack.c.l.b16 %v3489
    %v3551 = vunpack.c.h.b16 %v3489
    %v3552 = vunpack.c.l.b16 %v3490
    %v3553 = vunpack.c.h.b16 %v3490
    %v3554 = vunpack.c.l.b16 %v3491
    %v3555 = vunpack.c.h.b16 %v3491
    %v3556 = vunpack.c.l.b16 %v3492
    %v3557 = vunpack.c.h.b16 %v3492
    %v3558 = vunpack.c.l.b16 %v3493
    %v3559 = vunpack.c.h.b16 %v3493
    %v3560 = vunpack.c.l.b16 %v3494
    %v3561 = vunpack.c.h.b16 %v3494
    %v3562 = vunpack.c.l.b16 %v3495
    %v3563 = vunpack.c.h.b16 %v3495
    %v3564 = vunpack.c.l.b16 %v3496
    %v3565 = vunpack.c.h.b16 %v3496
    %v3566 = vunpack.c.l.b16 %v3497
    %v3567 = vunpack.c.h.b16 %v3497
    %v3568 = vpack.c.b16 %v3528, %v3526
    %v3569 = vpack.c.b16 %v3529, %v3527
    %v3570 = vpack.c.b16 %v3532, %v3530
    %v3571 = vpack.c.b16 %v3533, %v3531
    %v3572 = vpack.c.b16 %v3536, %v3534
    %v3573 = vpack.c.b16 %v3537, %v3535
    %v3574 = vpack.c.b16 %v3540, %v3538
    %v3575 = vpack.c.b16 %v3541, %v3539
    %v3576 = vpack.c.b16 %v3544, %v3542
    %v3577 = vpack.c.b16 %v3545, %v3543
    %v3578 = vpack.c.b16 %v3548, %v3546
    %v3579 = vpack.c.b16 %v3549, %v3547
    %v3580 = vpack.c.b16 %v3552, %v3550
    %v3581 = vpack.c.b16 %v3553, %v3551
    %v3582 = vpack.c.b16 %v3556, %v3554
    %v3583 = vpack.c.b16 %v3557, %v3555
    %v3584 = vpack.c.b16 %v3560, %v3558
    %v3585 = vpack.c.b16 %v3561, %v3559
    %v3586 = vpack.c.b16 %v3564, %v3562
    %v3587 = vpack.c.b16 %v3565, %v3563
    %v3588 = vpack.c.b16 %v3566, %v3566
    %v3589 = vpack.c.b16 %v3567, %v3567
    %v3611 = vsel %vm1096, %v3503, 0
    %v3614 = vsel %vm1100, %v3588, 0
    %v3617 = vsel %vm1100, %v3589, 0
    %3619 = vmatprep.subr.bf16.mxu0 %v3569
    %3620 = vmatpush1.bf16.msra.mxu0 %v3568
    %3621 = vmatprep.subr.bf16.mxu0 %v3571
    %3622 = vmatpush1.bf16.msra.mxu0 %v3570
    %3623 = vmatprep.subr.bf16.mxu0 %v3573
    %3624 = vmatpush1.bf16.msra.mxu0 %v3572
    %3625 = vmatprep.subr.bf16.mxu0 %v3575
    %3626 = vmatpush1.bf16.msra.mxu0 %v3574
    %3627 = vmatprep.subr.bf16.mxu0 %v3577
    %3628 = vmatpush1.bf16.msra.mxu0 %v3576
    %3629 = vmatprep.subr.bf16.mxu0 %v3579
    %3630 = vmatpush1.bf16.msra.mxu0 %v3578
    %3631 = vmatprep.subr.bf16.mxu0 %v3581
    %3632 = vmatpush1.bf16.msra.mxu0 %v3580
    %3633 = vmatprep.subr.bf16.mxu0 %v3583
    %3634 = vmatpush1.bf16.msra.mxu0 %v3582
    %3635 = vmatprep.subr.bf16.mxu0 %v3585
    %3636 = vmatpush1.bf16.msra.mxu0 %v3584
    %3637 = vmatprep.subr.bf16.mxu0 %v3587
    %3638 = vmatpush1.bf16.msra.mxu0 %v3586
    %3639 = vmatprep.subr.bf16.mxu0 %v3617
    %3640 = vmatpush1.bf16.msra.mxu0 %v3614
    %3641 = vmatprep.subr.bf16.mxu0 0
    %3642 = vmatpush1.bf16.msra.mxu0 0
    %3643 = vmatprep.subr.bf16.mxu0 0
    %3644 = vmatpush1.bf16.msra.mxu0 0
    %3645 = vmatprep.subr.bf16.mxu0 0
    %3646 = vmatpush1.bf16.msra.mxu0 0
    %3647 = vmatprep.subr.bf16.mxu0 0
    %3648 = vmatpush1.bf16.msra.mxu0 0
    %3649 = vmatprep.subr.bf16.mxu0 0
    %3650 = vmatpush1.bf16.msra.mxu0 0
    %3651 = vmatprep.mubr.bf16.mxu0 %v3611
    %3652 = vmatmul.mubr.bf16.gmra.mrb[0].mxu0 %v3500
    %v3653 = vpop.f32.mrb[0].mxu0
    %v3654 = vadd.f32 0.0, %v3653
    %v3655 = vpop.f32.mrb[0].mxu0
    %v3656 = vadd.f32 0.0, %v3655
    %v3657 = vpop.f32.mrb[0].mxu0
    %v3658 = vadd.f32 0.0, %v3657
    %v3659 = vpop.f32.mrb[0].mxu0
    %v3660 = vadd.f32 0.0, %v3659
    %3661 = vdwg.mxu0
    %v3662 = vadd.f32 %v3473, %v3654
    %v3663 = vadd.f32 %v3474, %v3656
    %v3664 = vadd.f32 %v3475, %v3658
    %v3665 = vadd.f32 %v3476, %v3660
    %v3666 = vld [vmem:[%s1729] sm:$0xff]
    %v3667 = vld [vmem:[%s1729 + $0x8] sm:$0xff]
    %v3668 = vld [vmem:[%s1729 + $0x10] sm:$0xff]
    %v3669 = vld [vmem:[%s1729 + $0x18] sm:$0xff]
    %v3670 = vld [vmem:[%s1729 + $0x20] sm:$0xff]
    %v3671 = vld [vmem:[%s1729 + $0x28] sm:$0xff]
    %v3672 = vld [vmem:[%s1729 + $0x30] sm:$0xff]
    %v3673 = vld [vmem:[%s1729 + $0x38] sm:$0xff]
    %v3674 = vld [vmem:[%s1729 + $0x40] sm:$0xff]
    %v3675 = vld [vmem:[%s1729 + $0x48] sm:$0xff]
    %v3676 = vld [vmem:[%s1729 + $0x50] sm:$0xff]
    %v3677 = vld [vmem:[%s1729 + $0x58] sm:$0xff]
    %v3678 = vld [vmem:[%s1729 + $0x60] sm:$0xff]
    %v3679 = vld [vmem:[%s1729 + $0x68] sm:$0xff]
    %v3680 = vld [vmem:[%s1729 + $0x70] sm:$0xff]
    %v3681 = vld [vmem:[%s1729 + $0x78] sm:$0xff]
    %v3682 = vld [vmem:[%s1729 + $0x80] sm:$0xff]
    %v3683 = vld [vmem:[%s1729 + $0x88] sm:$0xff]
    %v3684 = vld [vmem:[%s1729 + $0x90] sm:$0xff]
    %v3685 = vld [vmem:[%s1729 + $0x98] sm:$0xff]
    %v3686 = vld [vmem:[%s1729 + $0xa0] sm:$0x11]
    %v3687 = vrot.slane %v2910, 2
    %v3688 = vrot.slane %v2911, 2
    %v3711 = vunpack.c.l.b16 %v3666
    %v3712 = vunpack.c.h.b16 %v3666
    %v3713 = vunpack.c.l.b16 %v3667
    %v3714 = vunpack.c.h.b16 %v3667
    %v3715 = vunpack.c.l.b16 %v3668
    %v3716 = vunpack.c.h.b16 %v3668
    %v3717 = vunpack.c.l.b16 %v3669
    %v3718 = vunpack.c.h.b16 %v3669
    %v3719 = vunpack.c.l.b16 %v3670
    %v3720 = vunpack.c.h.b16 %v3670
    %v3721 = vunpack.c.l.b16 %v3671
    %v3722 = vunpack.c.h.b16 %v3671
    %v3723 = vunpack.c.l.b16 %v3672
    %v3724 = vunpack.c.h.b16 %v3672
    %v3725 = vunpack.c.l.b16 %v3673
    %v3726 = vunpack.c.h.b16 %v3673
    %v3727 = vunpack.c.l.b16 %v3674
    %v3728 = vunpack.c.h.b16 %v3674
    %v3729 = vunpack.c.l.b16 %v3675
    %v3730 = vunpack.c.h.b16 %v3675
    %v3731 = vunpack.c.l.b16 %v3676
    %v3732 = vunpack.c.h.b16 %v3676
    %v3733 = vunpack.c.l.b16 %v3677
    %v3734 = vunpack.c.h.b16 %v3677
    %v3735 = vunpack.c.l.b16 %v3678
    %v3736 = vunpack.c.h.b16 %v3678
    %v3737 = vunpack.c.l.b16 %v3679
    %v3738 = vunpack.c.h.b16 %v3679
    %v3739 = vunpack.c.l.b16 %v3680
    %v3740 = vunpack.c.h.b16 %v3680
    %v3741 = vunpack.c.l.b16 %v3681
    %v3742 = vunpack.c.h.b16 %v3681
    %v3743 = vunpack.c.l.b16 %v3682
    %v3744 = vunpack.c.h.b16 %v3682
    %v3745 = vunpack.c.l.b16 %v3683
    %v3746 = vunpack.c.h.b16 %v3683
    %v3747 = vunpack.c.l.b16 %v3684
    %v3748 = vunpack.c.h.b16 %v3684
    %v3749 = vunpack.c.l.b16 %v3685
    %v3750 = vunpack.c.h.b16 %v3685
    %v3751 = vunpack.c.l.b16 %v3686
    %v3752 = vunpack.c.h.b16 %v3686
    %v3753 = vpack.c.b16 %v3713, %v3711
    %v3754 = vpack.c.b16 %v3714, %v3712
    %v3755 = vpack.c.b16 %v3717, %v3715
    %v3756 = vpack.c.b16 %v3718, %v3716
    %v3757 = vpack.c.b16 %v3721, %v3719
    %v3758 = vpack.c.b16 %v3722, %v3720
    %v3759 = vpack.c.b16 %v3725, %v3723
    %v3760 = vpack.c.b16 %v3726, %v3724
    %v3761 = vpack.c.b16 %v3729, %v3727
    %v3762 = vpack.c.b16 %v3730, %v3728
    %v3763 = vpack.c.b16 %v3733, %v3731
    %v3764 = vpack.c.b16 %v3734, %v3732
    %v3765 = vpack.c.b16 %v3737, %v3735
    %v3766 = vpack.c.b16 %v3738, %v3736
    %v3767 = vpack.c.b16 %v3741, %v3739
    %v3768 = vpack.c.b16 %v3742, %v3740
    %v3769 = vpack.c.b16 %v3745, %v3743
    %v3770 = vpack.c.b16 %v3746, %v3744
    %v3771 = vpack.c.b16 %v3749, %v3747
    %v3772 = vpack.c.b16 %v3750, %v3748
    %v3773 = vpack.c.b16 %v3751, %v3751
    %v3774 = vpack.c.b16 %v3752, %v3752
    %v3796 = vsel %vm1096, %v3688, 0
    %v3799 = vsel %vm1100, %v3773, 0
    %v3802 = vsel %vm1100, %v3774, 0
    %3804 = vmatprep.subr.bf16.mxu0 %v3754
    %3805 = vmatpush1.bf16.msra.mxu0 %v3753
    %3806 = vmatprep.subr.bf16.mxu0 %v3756
    %3807 = vmatpush1.bf16.msra.mxu0 %v3755
    %3808 = vmatprep.subr.bf16.mxu0 %v3758
    %3809 = vmatpush1.bf16.msra.mxu0 %v3757
    %3810 = vmatprep.subr.bf16.mxu0 %v3760
    %3811 = vmatpush1.bf16.msra.mxu0 %v3759
    %3812 = vmatprep.subr.bf16.mxu0 %v3762
    %3813 = vmatpush1.bf16.msra.mxu0 %v3761
    %3814 = vmatprep.subr.bf16.mxu0 %v3764
    %3815 = vmatpush1.bf16.msra.mxu0 %v3763
    %3816 = vmatprep.subr.bf16.mxu0 %v3766
    %3817 = vmatpush1.bf16.msra.mxu0 %v3765
    %3818 = vmatprep.subr.bf16.mxu0 %v3768
    %3819 = vmatpush1.bf16.msra.mxu0 %v3767
    %3820 = vmatprep.subr.bf16.mxu0 %v3770
    %3821 = vmatpush1.bf16.msra.mxu0 %v3769
    %3822 = vmatprep.subr.bf16.mxu0 %v3772
    %3823 = vmatpush1.bf16.msra.mxu0 %v3771
    %3824 = vmatprep.subr.bf16.mxu0 %v3802
    %3825 = vmatpush1.bf16.msra.mxu0 %v3799
    %3826 = vmatprep.subr.bf16.mxu0 0
    %3827 = vmatpush1.bf16.msra.mxu0 0
    %3828 = vmatprep.subr.bf16.mxu0 0
    %3829 = vmatpush1.bf16.msra.mxu0 0
    %3830 = vmatprep.subr.bf16.mxu0 0
    %3831 = vmatpush1.bf16.msra.mxu0 0
    %3832 = vmatprep.subr.bf16.mxu0 0
    %3833 = vmatpush1.bf16.msra.mxu0 0
    %3834 = vmatprep.subr.bf16.mxu0 0
    %3835 = vmatpush1.bf16.msra.mxu0 0
    %3836 = vmatprep.mubr.bf16.mxu0 %v3796
    %3837 = vmatmul.mubr.bf16.gmra.mrb[0].mxu0 %v3687
    %v3838 = vpop.f32.mrb[0].mxu0
    %v3839 = vadd.f32 0.0, %v3838
    %v3840 = vpop.f32.mrb[0].mxu0
    %v3841 = vadd.f32 0.0, %v3840
    %v3842 = vpop.f32.mrb[0].mxu0
    %v3843 = vadd.f32 0.0, %v3842
    %v3844 = vpop.f32.mrb[0].mxu0
    %v3845 = vadd.f32 0.0, %v3844
    %3846 = vdwg.mxu0
    %v3847 = vadd.f32 %v3662, %v3839
    %v3848 = vadd.f32 %v3663, %v3841
    %v3849 = vadd.f32 %v3664, %v3843
    %v3850 = vadd.f32 %v3665, %v3845
    %v3851 = vmax.f32 %v3847, 0.0
    %v3852 = vmax.f32 %v3848, 0.0
    %v3853 = vmax.f32 %v3849, 0.0
    %v3854 = vmax.f32 %v3850, 0.0
    %v3859 = vrot.slane %v3851, 1
    %v3860 = vrot.slane %v3853, 1
    %v3861 = vsel %vm823, %v3859, %v3860
    %v3862 = vrot.slane %v3852, 1
    %v3863 = vrot.slane %v3854, 1
    %v3864 = vsel %vm823, %v3862, %v3863
    %v3869 = vmax.f32 %v3851, %v3861
    %v3870 = vmax.f32 %v3852, %v3864
    %v3871 = vmax.f32 %v3853, %v3860
    %v3872 = vmax.f32 %v3854, %v3863
    %3877 = vrot.lane.b32.xlu0 %v3869, 112
    %v3878 = vpop.permute.xlu0 %3877
    %3879 = vrot.lane.b32.xlu0 %v3870, 112
    %v3880 = vpop.permute.xlu0 %3879
    %3881 = vrot.lane.b32.xlu0 %v3871, 112
    %v3882 = vpop.permute.xlu0 %3881
    %3883 = vrot.lane.b32.xlu0 %v3872, 112
    %v3884 = vpop.permute.xlu0 %3883
    %v3885 = vsel %vm1949, %v3878, %v3880
    %v3886 = vsel %vm1949, %v3882, %v3884
    %v3891 = vmax.f32 %v3869, %v3885
    %v3892 = vmax.f32 %v3870, %v3880
    %v3893 = vmax.f32 %v3871, %v3886
    %v3894 = vmax.f32 %v3872, %v3884
    %v3897 = vcombine.low %v3891, %v3892
    %v3899 = vunpack.c.l.s4 1966171168
    %v3900 = vunpack.c.0.s8 %v3899
    %v3901 = vlaneseq
    %v3902 = vshrl.u32 %v3901, 7
    %v3903 = vsub.s32 %v3900, %v3902
    %v3904 = vrot.slane %v3897, %v3903
    %v3906 = vunpack.c.l.s4 1966171168
    %v3907 = vunpack.c.0.s8 %v3906
    %v3908 = vlaneseq
    %v3909 = vshrl.u32 %v3908, 7
    %v3910 = vsub.s32 %v3907, %v3909
    %v3911 = vrot.slane %v3904, %v3910
    %s3913 = scalar_lea.vmem [#allocation2], 1
    %3914 = vst.msk [vmem:[%s3913] ss:$2 sm:$0x3] %vm1981, %v3911
    %v3915 = vcombine.high %v3911, %v3911
    %s3917 = scalar_lea.vmem %s1985, 1 [#allocation2]
    %3918 = vst.msk [vmem:[%s3917] ss:$2 sm:$0x3] %vm1981, %v3915
    %v3919 = vcombine.high %v3891, %v3892
    %v3921 = vunpack.c.l.s4 1966171168
    %v3922 = vunpack.c.0.s8 %v3921
    %v3923 = vlaneseq
    %v3924 = vshrl.u32 %v3923, 7
    %v3925 = vsub.s32 %v3922, %v3924
    %v3926 = vrot.slane %v3919, %v3925
    %v3928 = vunpack.c.l.s4 1966171168
    %v3929 = vunpack.c.0.s8 %v3928
    %v3930 = vlaneseq
    %v3931 = vshrl.u32 %v3930, 7
    %v3932 = vsub.s32 %v3929, %v3931
    %v3933 = vrot.slane %v3926, %v3932
    %s3935 = scalar_lea.vmem %s2003, 1 [#allocation2]
    %3936 = vst.msk [vmem:[%s3935] ss:$2 sm:$0x3] %vm1981, %v3933
    %v3937 = vcombine.high %v3933, %v3933
    %s3939 = scalar_lea.vmem %s2007, 1 [#allocation2]
    %3940 = vst.msk [vmem:[%s3939] ss:$2 sm:$0x3] %vm1981, %v3937
    %v3943 = vcombine.low %v3893, %v3894
    %v3945 = vunpack.c.l.s4 1966171168
    %v3946 = vunpack.c.0.s8 %v3945
    %v3947 = vlaneseq
    %v3948 = vshrl.u32 %v3947, 7
    %v3949 = vsub.s32 %v3946, %v3948
    %v3950 = vrot.slane %v3943, %v3949
    %v3952 = vunpack.c.l.s4 1966171168
    %v3953 = vunpack.c.0.s8 %v3952
    %v3954 = vlaneseq
    %v3955 = vshrl.u32 %v3954, 7
    %v3956 = vsub.s32 %v3953, %v3955
    %v3957 = vrot.slane %v3950, %v3956
    %s3959 = scalar_lea.vmem %s2027, 1 [#allocation2]
    %3960 = vst.msk [vmem:[%s3959] ss:$2 sm:$0x3] %vm1981, %v3957
    %v3961 = vld [vmem:[%s7] sm:$0x1]
    %v3963 = vlaneseq
    %v3964 = vshrl.u32 %v3963, 7
    %v3965 = vsub.s32 0, %v3964
    %v3966 = vrot.slane %v3961, %v3965
    %v3968 = vld [vmem:[#allocation2] sm:$0xf]
    %v3971 = vunpack.c.l.s4 1983009808
    %v3972 = vunpack.c.0.s8 %v3971
    %v3973 = vlaneseq
    %v3974 = vshrl.u32 %v3973, 7
    %v3975 = vsub.s32 %v3972, %v3974
    %v3976 = vrot.slane %v3968, %v3975
    %v3977 = vcombine.high %v3976, %v3976
    %v3980 = vpack.c.bf16 %v3976, %v3976
    %v3981 = vpack.c.bf16 %v3977, %v3977
    %v3982 = vld [vmem:[%s6] sm:$0xf]
    %v3983 = vld [vmem:[%s6 + $0x4] sm:$0xf]
    %v3984 = vld [vmem:[%s6 + $0x8] sm:$0xf]
    %v3985 = vld [vmem:[%s6 + $0xc] sm:$0xf]
    %v3986 = vld [vmem:[%s6 + $0x10] sm:$0xf]
    %v3987 = vld [vmem:[%s6 + $0x14] sm:$0xf]
    %v3988 = vld [vmem:[%s6 + $0x18] sm:$0xf]
    %v3989 = vld [vmem:[%s6 + $0x1c] sm:$0xf]
    %v3990 = vld [vmem:[%s6 + $0x20] sm:$0xf]
    %v3991 = vld [vmem:[%s6 + $0x24] sm:$0xf]
    %v3992 = vld [vmem:[%s6 + $0x28] sm:$0xf]
    %v3993 = vld [vmem:[%s6 + $0x2c] sm:$0xf]
    %v3994 = vld [vmem:[%s6 + $0x30] sm:$0xf]
    %v3995 = vld [vmem:[%s6 + $0x34] sm:$0xf]
    %v3996 = vld [vmem:[%s6 + $0x38] sm:$0xf]
    %v3997 = vld [vmem:[%s6 + $0x3c] sm:$0xf]
    %v3998 = vld [vmem:[%s6 + $0x40] sm:$0xf]
    %v3999 = vld [vmem:[%s6 + $0x44] sm:$0xf]
    %v4018 = vunpack.c.l.b16 %v3982
    %v4019 = vunpack.c.l.b16 %v3983
    %v4020 = vunpack.c.l.b16 %v3984
    %v4021 = vunpack.c.l.b16 %v3985
    %v4022 = vunpack.c.l.b16 %v3986
    %v4023 = vunpack.c.l.b16 %v3987
    %v4024 = vunpack.c.l.b16 %v3988
    %v4025 = vunpack.c.l.b16 %v3989
    %v4026 = vunpack.c.l.b16 %v3990
    %v4027 = vunpack.c.l.b16 %v3991
    %v4028 = vunpack.c.l.b16 %v3992
    %v4029 = vunpack.c.l.b16 %v3993
    %v4030 = vunpack.c.l.b16 %v3994
    %v4031 = vunpack.c.l.b16 %v3995
    %v4032 = vunpack.c.l.b16 %v3996
    %v4033 = vunpack.c.l.b16 %v3997
    %v4034 = vunpack.c.l.b16 %v3998
    %v4035 = vunpack.c.l.b16 %v3999
    %v4036 = vpack.c.b16 %v4019, %v4018
    %v4037 = vpack.c.b16 %v4021, %v4020
    %v4038 = vpack.c.b16 %v4023, %v4022
    %v4039 = vpack.c.b16 %v4025, %v4024
    %v4040 = vpack.c.b16 %v4027, %v4026
    %v4041 = vpack.c.b16 %v4029, %v4028
    %v4042 = vpack.c.b16 %v4031, %v4030
    %v4043 = vpack.c.b16 %v4033, %v4032
    %v4044 = vpack.c.b16 %v4035, %v4034
    %vm4054 = vcmask 130048
    %v4056 = vsel %vm4054, %v3981, 0
    %4058 = vmatprep.subr.bf16.mxu0 0
    %4059 = vmatpush1.bf16.msra.mxu0 %v4036
    %4060 = vmatprep.subr.bf16.mxu0 0
    %4061 = vmatpush1.bf16.msra.mxu0 %v4037
    %4062 = vmatprep.subr.bf16.mxu0 0
    %4063 = vmatpush1.bf16.msra.mxu0 %v4038
    %4064 = vmatprep.subr.bf16.mxu0 0
    %4065 = vmatpush1.bf16.msra.mxu0 %v4039
    %4066 = vmatprep.subr.bf16.mxu0 0
    %4067 = vmatpush1.bf16.msra.mxu0 %v4040
    %4068 = vmatprep.subr.bf16.mxu0 0
    %4069 = vmatpush1.bf16.msra.mxu0 %v4041
    %4070 = vmatprep.subr.bf16.mxu0 0
    %4071 = vmatpush1.bf16.msra.mxu0 %v4042
    %4072 = vmatprep.subr.bf16.mxu0 0
    %4073 = vmatpush1.bf16.msra.mxu0 %v4043
    %4074 = vmatprep.subr.bf16.mxu0 0
    %4075 = vmatpush1.bf16.msra.mxu0 %v4044
    %4076 = vmatprep.subr.bf16.mxu0 0
    %4077 = vmatpush1.bf16.msra.mxu0 0
    %4078 = vmatprep.subr.bf16.mxu0 0
    %4079 = vmatpush1.bf16.msra.mxu0 0
    %4080 = vmatprep.subr.bf16.mxu0 0
    %4081 = vmatpush1.bf16.msra.mxu0 0
    %4082 = vmatprep.subr.bf16.mxu0 0
    %4083 = vmatpush1.bf16.msra.mxu0 0
    %4084 = vmatprep.subr.bf16.mxu0 0
    %4085 = vmatpush1.bf16.msra.mxu0 0
    %4086 = vmatprep.subr.bf16.mxu0 0
    %4087 = vmatpush1.bf16.msra.mxu0 0
    %4088 = vmatprep.subr.bf16.mxu0 0
    %4089 = vmatpush1.bf16.msra.mxu0 0
    %4090 = vmatprep.mubr.bf16.mxu0 %v4056
    %4091 = vmatmul.mubr.bf16.gmra.mrb[0].mxu0 %v3980
    %v4092 = vpop.f32.mrb[0].mxu0
    %v4093 = vadd.f32 0.0, %v4092
    %v4094 = vpop.f32.mrb[0].mxu0
    %v4095 = vpop.f32.mrb[0].mxu0
    %v4096 = vpop.f32.mrb[0].mxu0
    %4097 = vdwg.mxu0
    %v4098 = vadd.f32 %v3966, %v4093
    %v4099 = vld [vmem:[%s1985] sm:$0xf]
    %v4102 = vunpack.c.l.s4 1983009808
    %v4103 = vunpack.c.0.s8 %v4102
    %v4104 = vlaneseq
    %v4105 = vshrl.u32 %v4104, 7
    %v4106 = vsub.s32 %v4103, %v4105
    %v4107 = vrot.slane %v4099, %v4106
    %v4108 = vcombine.high %v4107, %v4107
    %v4111 = vpack.c.bf16 %v4107, %v4107
    %v4112 = vpack.c.bf16 %v4108, %v4108
    %s4113 = scalar_lea.vmem %s6, 72
    %v4114 = vld [vmem:[%s4113] sm:$0xf]
    %v4115 = vld [vmem:[%s4113 + $0x4] sm:$0xf]
    %v4116 = vld [vmem:[%s4113 + $0x8] sm:$0xf]
    %v4117 = vld [vmem:[%s4113 + $0xc] sm:$0xf]
    %v4118 = vld [vmem:[%s4113 + $0x10] sm:$0xf]
    %v4119 = vld [vmem:[%s4113 + $0x14] sm:$0xf]
    %v4120 = vld [vmem:[%s4113 + $0x18] sm:$0xf]
    %v4121 = vld [vmem:[%s4113 + $0x1c] sm:$0xf]
    %v4122 = vld [vmem:[%s4113 + $0x20] sm:$0xf]
    %v4123 = vld [vmem:[%s4113 + $0x24] sm:$0xf]
    %v4124 = vld [vmem:[%s4113 + $0x28] sm:$0xf]
    %v4125 = vld [vmem:[%s4113 + $0x2c] sm:$0xf]
    %v4126 = vld [vmem:[%s4113 + $0x30] sm:$0xf]
    %v4127 = vld [vmem:[%s4113 + $0x34] sm:$0xf]
    %v4128 = vld [vmem:[%s4113 + $0x38] sm:$0xf]
    %v4129 = vld [vmem:[%s4113 + $0x3c] sm:$0xf]
    %v4130 = vld [vmem:[%s4113 + $0x40] sm:$0xf]
    %v4131 = vld [vmem:[%s4113 + $0x44] sm:$0xf]
    %v4150 = vunpack.c.l.b16 %v4114
    %v4151 = vunpack.c.l.b16 %v4115
    %v4152 = vunpack.c.l.b16 %v4116
    %v4153 = vunpack.c.l.b16 %v4117
    %v4154 = vunpack.c.l.b16 %v4118
    %v4155 = vunpack.c.l.b16 %v4119
    %v4156 = vunpack.c.l.b16 %v4120
    %v4157 = vunpack.c.l.b16 %v4121
    %v4158 = vunpack.c.l.b16 %v4122
    %v4159 = vunpack.c.l.b16 %v4123
    %v4160 = vunpack.c.l.b16 %v4124
    %v4161 = vunpack.c.l.b16 %v4125
    %v4162 = vunpack.c.l.b16 %v4126
    %v4163 = vunpack.c.l.b16 %v4127
    %v4164 = vunpack.c.l.b16 %v4128
    %v4165 = vunpack.c.l.b16 %v4129
    %v4166 = vunpack.c.l.b16 %v4130
    %v4167 = vunpack.c.l.b16 %v4131
    %v4168 = vpack.c.b16 %v4151, %v4150
    %v4169 = vpack.c.b16 %v4153, %v4152
    %v4170 = vpack.c.b16 %v4155, %v4154
    %v4171 = vpack.c.b16 %v4157, %v4156
    %v4172 = vpack.c.b16 %v4159, %v4158
    %v4173 = vpack.c.b16 %v4161, %v4160
    %v4174 = vpack.c.b16 %v4163, %v4162
    %v4175 = vpack.c.b16 %v4165, %v4164
    %v4176 = vpack.c.b16 %v4167, %v4166
    %v4187 = vsel %vm4054, %v4112, 0
    %4189 = vmatprep.subr.bf16.mxu0 0
    %4190 = vmatpush1.bf16.msra.mxu0 %v4168
    %4191 = vmatprep.subr.bf16.mxu0 0
    %4192 = vmatpush1.bf16.msra.mxu0 %v4169
    %4193 = vmatprep.subr.bf16.mxu0 0
    %4194 = vmatpush1.bf16.msra.mxu0 %v4170
    %4195 = vmatprep.subr.bf16.mxu0 0
    %4196 = vmatpush1.bf16.msra.mxu0 %v4171
    %4197 = vmatprep.subr.bf16.mxu0 0
    %4198 = vmatpush1.bf16.msra.mxu0 %v4172
    %4199 = vmatprep.subr.bf16.mxu0 0
    %4200 = vmatpush1.bf16.msra.mxu0 %v4173
    %4201 = vmatprep.subr.bf16.mxu0 0
    %4202 = vmatpush1.bf16.msra.mxu0 %v4174
    %4203 = vmatprep.subr.bf16.mxu0 0
    %4204 = vmatpush1.bf16.msra.mxu0 %v4175
    %4205 = vmatprep.subr.bf16.mxu0 0
    %4206 = vmatpush1.bf16.msra.mxu0 %v4176
    %4207 = vmatprep.subr.bf16.mxu0 0
    %4208 = vmatpush1.bf16.msra.mxu0 0
    %4209 = vmatprep.subr.bf16.mxu0 0
    %4210 = vmatpush1.bf16.msra.mxu0 0
    %4211 = vmatprep.subr.bf16.mxu0 0
    %4212 = vmatpush1.bf16.msra.mxu0 0
    %4213 = vmatprep.subr.bf16.mxu0 0
    %4214 = vmatpush1.bf16.msra.mxu0 0
    %4215 = vmatprep.subr.bf16.mxu0 0
    %4216 = vmatpush1.bf16.msra.mxu0 0
    %4217 = vmatprep.subr.bf16.mxu0 0
    %4218 = vmatpush1.bf16.msra.mxu0 0
    %4219 = vmatprep.subr.bf16.mxu0 0
    %4220 = vmatpush1.bf16.msra.mxu0 0
    %4221 = vmatprep.mubr.bf16.mxu0 %v4187
    %4222 = vmatmul.mubr.bf16.gmra.mrb[0].mxu0 %v4111
    %v4223 = vpop.f32.mrb[0].mxu0
    %v4224 = vadd.f32 0.0, %v4223
    %v4225 = vpop.f32.mrb[0].mxu0
    %v4226 = vpop.f32.mrb[0].mxu0
    %v4227 = vpop.f32.mrb[0].mxu0
    %4228 = vdwg.mxu0
    %v4229 = vadd.f32 %v4098, %v4224
    %v4230 = vld [vmem:[%s2003] sm:$0xf]
    %v4233 = vunpack.c.l.s4 1983009808
    %v4234 = vunpack.c.0.s8 %v4233
    %v4235 = vlaneseq
    %v4236 = vshrl.u32 %v4235, 7
    %v4237 = vsub.s32 %v4234, %v4236
    %v4238 = vrot.slane %v4230, %v4237
    %v4239 = vcombine.high %v4238, %v4238
    %v4242 = vpack.c.bf16 %v4238, %v4238
    %v4243 = vpack.c.bf16 %v4239, %v4239
    %s4244 = scalar_lea.vmem %s6, 144
    %v4245 = vld [vmem:[%s4244] sm:$0xf]
    %v4246 = vld [vmem:[%s4244 + $0x4] sm:$0xf]
    %v4247 = vld [vmem:[%s4244 + $0x8] sm:$0xf]
    %v4248 = vld [vmem:[%s4244 + $0xc] sm:$0xf]
    %v4249 = vld [vmem:[%s4244 + $0x10] sm:$0xf]
    %v4250 = vld [vmem:[%s4244 + $0x14] sm:$0xf]
    %v4251 = vld [vmem:[%s4244 + $0x18] sm:$0xf]
    %v4252 = vld [vmem:[%s4244 + $0x1c] sm:$0xf]
    %v4253 = vld [vmem:[%s4244 + $0x20] sm:$0xf]
    %v4254 = vld [vmem:[%s4244 + $0x24] sm:$0xf]
    %v4255 = vld [vmem:[%s4244 + $0x28] sm:$0xf]
    %v4256 = vld [vmem:[%s4244 + $0x2c] sm:$0xf]
    %v4257 = vld [vmem:[%s4244 + $0x30] sm:$0xf]
    %v4258 = vld [vmem:[%s4244 + $0x34] sm:$0xf]
    %v4259 = vld [vmem:[%s4244 + $0x38] sm:$0xf]
    %v4260 = vld [vmem:[%s4244 + $0x3c] sm:$0xf]
    %v4261 = vld [vmem:[%s4244 + $0x40] sm:$0xf]
    %v4262 = vld [vmem:[%s4244 + $0x44] sm:$0xf]
    %v4281 = vunpack.c.l.b16 %v4245
    %v4282 = vunpack.c.l.b16 %v4246
    %v4283 = vunpack.c.l.b16 %v4247
    %v4284 = vunpack.c.l.b16 %v4248
    %v4285 = vunpack.c.l.b16 %v4249
    %v4286 = vunpack.c.l.b16 %v4250
    %v4287 = vunpack.c.l.b16 %v4251
    %v4288 = vunpack.c.l.b16 %v4252
    %v4289 = vunpack.c.l.b16 %v4253
    %v4290 = vunpack.c.l.b16 %v4254
    %v4291 = vunpack.c.l.b16 %v4255
    %v4292 = vunpack.c.l.b16 %v4256
    %v4293 = vunpack.c.l.b16 %v4257
    %v4294 = vunpack.c.l.b16 %v4258
    %v4295 = vunpack.c.l.b16 %v4259
    %v4296 = vunpack.c.l.b16 %v4260
    %v4297 = vunpack.c.l.b16 %v4261
    %v4298 = vunpack.c.l.b16 %v4262
    %v4299 = vpack.c.b16 %v4282, %v4281
    %v4300 = vpack.c.b16 %v4284, %v4283
    %v4301 = vpack.c.b16 %v4286, %v4285
    %v4302 = vpack.c.b16 %v4288, %v4287
    %v4303 = vpack.c.b16 %v4290, %v4289
    %v4304 = vpack.c.b16 %v4292, %v4291
    %v4305 = vpack.c.b16 %v4294, %v4293
    %v4306 = vpack.c.b16 %v4296, %v4295
    %v4307 = vpack.c.b16 %v4298, %v4297
    %v4318 = vsel %vm4054, %v4243, 0
    %4320 = vmatprep.subr.bf16.mxu0 0
    %4321 = vmatpush1.bf16.msra.mxu0 %v4299
    %4322 = vmatprep.subr.bf16.mxu0 0
    %4323 = vmatpush1.bf16.msra.mxu0 %v4300
    %4324 = vmatprep.subr.bf16.mxu0 0
    %4325 = vmatpush1.bf16.msra.mxu0 %v4301
    %4326 = vmatprep.subr.bf16.mxu0 0
    %4327 = vmatpush1.bf16.msra.mxu0 %v4302
    %4328 = vmatprep.subr.bf16.mxu0 0
    %4329 = vmatpush1.bf16.msra.mxu0 %v4303
    %4330 = vmatprep.subr.bf16.mxu0 0
    %4331 = vmatpush1.bf16.msra.mxu0 %v4304
    %4332 = vmatprep.subr.bf16.mxu0 0
    %4333 = vmatpush1.bf16.msra.mxu0 %v4305
    %4334 = vmatprep.subr.bf16.mxu0 0
    %4335 = vmatpush1.bf16.msra.mxu0 %v4306
    %4336 = vmatprep.subr.bf16.mxu0 0
    %4337 = vmatpush1.bf16.msra.mxu0 %v4307
    %4338 = vmatprep.subr.bf16.mxu0 0
    %4339 = vmatpush1.bf16.msra.mxu0 0
    %4340 = vmatprep.subr.bf16.mxu0 0
    %4341 = vmatpush1.bf16.msra.mxu0 0
    %4342 = vmatprep.subr.bf16.mxu0 0
    %4343 = vmatpush1.bf16.msra.mxu0 0
    %4344 = vmatprep.subr.bf16.mxu0 0
    %4345 = vmatpush1.bf16.msra.mxu0 0
    %4346 = vmatprep.subr.bf16.mxu0 0
    %4347 = vmatpush1.bf16.msra.mxu0 0
    %4348 = vmatprep.subr.bf16.mxu0 0
    %4349 = vmatpush1.bf16.msra.mxu0 0
    %4350 = vmatprep.subr.bf16.mxu0 0
    %4351 = vmatpush1.bf16.msra.mxu0 0
    %4352 = vmatprep.mubr.bf16.mxu0 %v4318
    %4353 = vmatmul.mubr.bf16.gmra.mrb[0].mxu0 %v4242
    %v4354 = vpop.f32.mrb[0].mxu0
    %v4355 = vadd.f32 0.0, %v4354
    %v4356 = vpop.f32.mrb[0].mxu0
    %v4357 = vpop.f32.mrb[0].mxu0
    %v4358 = vpop.f32.mrb[0].mxu0
    %4359 = vdwg.mxu0
    %v4360 = vadd.f32 %v4229, %v4355
    %v4361 = vld [vmem:[%s2007] sm:$0xf]
    %v4364 = vunpack.c.l.s4 1983009808
    %v4365 = vunpack.c.0.s8 %v4364
    %v4366 = vlaneseq
    %v4367 = vshrl.u32 %v4366, 7
    %v4368 = vsub.s32 %v4365, %v4367
    %v4369 = vrot.slane %v4361, %v4368
    %v4370 = vcombine.high %v4369, %v4369
    %v4373 = vpack.c.bf16 %v4369, %v4369
    %v4374 = vpack.c.bf16 %v4370, %v4370
    %s4375 = scalar_lea.vmem %s6, 216
    %v4376 = vld [vmem:[%s4375] sm:$0xf]
    %v4377 = vld [vmem:[%s4375 + $0x4] sm:$0xf]
    %v4378 = vld [vmem:[%s4375 + $0x8] sm:$0xf]
    %v4379 = vld [vmem:[%s4375 + $0xc] sm:$0xf]
    %v4380 = vld [vmem:[%s4375 + $0x10] sm:$0xf]
    %v4381 = vld [vmem:[%s4375 + $0x14] sm:$0xf]
    %v4382 = vld [vmem:[%s4375 + $0x18] sm:$0xf]
    %v4383 = vld [vmem:[%s4375 + $0x1c] sm:$0xf]
    %v4384 = vld [vmem:[%s4375 + $0x20] sm:$0xf]
    %v4385 = vld [vmem:[%s4375 + $0x24] sm:$0xf]
    %v4386 = vld [vmem:[%s4375 + $0x28] sm:$0xf]
    %v4387 = vld [vmem:[%s4375 + $0x2c] sm:$0xf]
    %v4388 = vld [vmem:[%s4375 + $0x30] sm:$0xf]
    %v4389 = vld [vmem:[%s4375 + $0x34] sm:$0xf]
    %v4390 = vld [vmem:[%s4375 + $0x38] sm:$0xf]
    %v4391 = vld [vmem:[%s4375 + $0x3c] sm:$0xf]
    %v4392 = vld [vmem:[%s4375 + $0x40] sm:$0xf]
    %v4393 = vld [vmem:[%s4375 + $0x44] sm:$0xf]
    %v4412 = vunpack.c.l.b16 %v4376
    %v4413 = vunpack.c.l.b16 %v4377
    %v4414 = vunpack.c.l.b16 %v4378
    %v4415 = vunpack.c.l.b16 %v4379
    %v4416 = vunpack.c.l.b16 %v4380
    %v4417 = vunpack.c.l.b16 %v4381
    %v4418 = vunpack.c.l.b16 %v4382
    %v4419 = vunpack.c.l.b16 %v4383
    %v4420 = vunpack.c.l.b16 %v4384
    %v4421 = vunpack.c.l.b16 %v4385
    %v4422 = vunpack.c.l.b16 %v4386
    %v4423 = vunpack.c.l.b16 %v4387
    %v4424 = vunpack.c.l.b16 %v4388
    %v4425 = vunpack.c.l.b16 %v4389
    %v4426 = vunpack.c.l.b16 %v4390
    %v4427 = vunpack.c.l.b16 %v4391
    %v4428 = vunpack.c.l.b16 %v4392
    %v4429 = vunpack.c.l.b16 %v4393
    %v4430 = vpack.c.b16 %v4413, %v4412
    %v4431 = vpack.c.b16 %v4415, %v4414
    %v4432 = vpack.c.b16 %v4417, %v4416
    %v4433 = vpack.c.b16 %v4419, %v4418
    %v4434 = vpack.c.b16 %v4421, %v4420
    %v4435 = vpack.c.b16 %v4423, %v4422
    %v4436 = vpack.c.b16 %v4425, %v4424
    %v4437 = vpack.c.b16 %v4427, %v4426
    %v4438 = vpack.c.b16 %v4429, %v4428
    %v4449 = vsel %vm4054, %v4374, 0
    %4451 = vmatprep.subr.bf16.mxu0 0
    %4452 = vmatpush1.bf16.msra.mxu0 %v4430
    %4453 = vmatprep.subr.bf16.mxu0 0
    %4454 = vmatpush1.bf16.msra.mxu0 %v4431
    %4455 = vmatprep.subr.bf16.mxu0 0
    %4456 = vmatpush1.bf16.msra.mxu0 %v4432
    %4457 = vmatprep.subr.bf16.mxu0 0
    %4458 = vmatpush1.bf16.msra.mxu0 %v4433
    %4459 = vmatprep.subr.bf16.mxu0 0
    %4460 = vmatpush1.bf16.msra.mxu0 %v4434
    %4461 = vmatprep.subr.bf16.mxu0 0
    %4462 = vmatpush1.bf16.msra.mxu0 %v4435
    %4463 = vmatprep.subr.bf16.mxu0 0
    %4464 = vmatpush1.bf16.msra.mxu0 %v4436
    %4465 = vmatprep.subr.bf16.mxu0 0
    %4466 = vmatpush1.bf16.msra.mxu0 %v4437
    %4467 = vmatprep.subr.bf16.mxu0 0
    %4468 = vmatpush1.bf16.msra.mxu0 %v4438
    %4469 = vmatprep.subr.bf16.mxu0 0
    %4470 = vmatpush1.bf16.msra.mxu0 0
    %4471 = vmatprep.subr.bf16.mxu0 0
    %4472 = vmatpush1.bf16.msra.mxu0 0
    %4473 = vmatprep.subr.bf16.mxu0 0
    %4474 = vmatpush1.bf16.msra.mxu0 0
    %4475 = vmatprep.subr.bf16.mxu0 0
    %4476 = vmatpush1.bf16.msra.mxu0 0
    %4477 = vmatprep.subr.bf16.mxu0 0
    %4478 = vmatpush1.bf16.msra.mxu0 0
    %4479 = vmatprep.subr.bf16.mxu0 0
    %4480 = vmatpush1.bf16.msra.mxu0 0
    %4481 = vmatprep.subr.bf16.mxu0 0
    %4482 = vmatpush1.bf16.msra.mxu0 0
    %4483 = vmatprep.mubr.bf16.mxu0 %v4449
    %4484 = vmatmul.mubr.bf16.gmra.mrb[0].mxu0 %v4373
    %v4485 = vpop.f32.mrb[0].mxu0
    %v4486 = vadd.f32 0.0, %v4485
    %v4487 = vpop.f32.mrb[0].mxu0
    %v4488 = vpop.f32.mrb[0].mxu0
    %v4489 = vpop.f32.mrb[0].mxu0
    %4490 = vdwg.mxu0
    %v4491 = vadd.f32 %v4360, %v4486
    %v4492 = vld [vmem:[%s2027] sm:$0xf]
    %v4495 = vunpack.c.l.s4 1983009808
    %v4496 = vunpack.c.0.s8 %v4495
    %v4497 = vlaneseq
    %v4498 = vshrl.u32 %v4497, 7
    %v4499 = vsub.s32 %v4496, %v4498
    %v4500 = vrot.slane %v4492, %v4499
    %v4501 = vcombine.high %v4500, %v4500
    %v4504 = vpack.c.bf16 %v4500, %v4500
    %v4505 = vpack.c.bf16 %v4501, %v4501
    %s4506 = scalar_lea.vmem %s6, 288
    %v4507 = vld [vmem:[%s4506] sm:$0xf]
    %v4508 = vld [vmem:[%s4506 + $0x4] sm:$0xf]
    %v4509 = vld [vmem:[%s4506 + $0x8] sm:$0xf]
    %v4510 = vld [vmem:[%s4506 + $0xc] sm:$0xf]
    %v4511 = vld [vmem:[%s4506 + $0x10] sm:$0xf]
    %v4512 = vld [vmem:[%s4506 + $0x14] sm:$0xf]
    %v4513 = vld [vmem:[%s4506 + $0x18] sm:$0xf]
    %v4514 = vld [vmem:[%s4506 + $0x1c] sm:$0xf]
    %v4515 = vld [vmem:[%s4506 + $0x20] sm:$0xf]
    %v4516 = vld [vmem:[%s4506 + $0x24] sm:$0xf]
    %v4517 = vld [vmem:[%s4506 + $0x28] sm:$0xf]
    %v4518 = vld [vmem:[%s4506 + $0x2c] sm:$0xf]
    %v4519 = vld [vmem:[%s4506 + $0x30] sm:$0xf]
    %v4520 = vld [vmem:[%s4506 + $0x34] sm:$0xf]
    %v4521 = vld [vmem:[%s4506 + $0x38] sm:$0xf]
    %v4522 = vld [vmem:[%s4506 + $0x3c] sm:$0xf]
    %v4523 = vld [vmem:[%s4506 + $0x40] sm:$0xf]
    %v4524 = vld [vmem:[%s4506 + $0x44] sm:$0xf]
    %v4543 = vunpack.c.l.b16 %v4507
    %v4544 = vunpack.c.l.b16 %v4508
    %v4545 = vunpack.c.l.b16 %v4509
    %v4546 = vunpack.c.l.b16 %v4510
    %v4547 = vunpack.c.l.b16 %v4511
    %v4548 = vunpack.c.l.b16 %v4512
    %v4549 = vunpack.c.l.b16 %v4513
    %v4550 = vunpack.c.l.b16 %v4514
    %v4551 = vunpack.c.l.b16 %v4515
    %v4552 = vunpack.c.l.b16 %v4516
    %v4553 = vunpack.c.l.b16 %v4517
    %v4554 = vunpack.c.l.b16 %v4518
    %v4555 = vunpack.c.l.b16 %v4519
    %v4556 = vunpack.c.l.b16 %v4520
    %v4557 = vunpack.c.l.b16 %v4521
    %v4558 = vunpack.c.l.b16 %v4522
    %v4559 = vunpack.c.l.b16 %v4523
    %v4560 = vunpack.c.l.b16 %v4524
    %v4561 = vpack.c.b16 %v4544, %v4543
    %v4562 = vpack.c.b16 %v4546, %v4545
    %v4563 = vpack.c.b16 %v4548, %v4547
    %v4564 = vpack.c.b16 %v4550, %v4549
    %v4565 = vpack.c.b16 %v4552, %v4551
    %v4566 = vpack.c.b16 %v4554, %v4553
    %v4567 = vpack.c.b16 %v4556, %v4555
    %v4568 = vpack.c.b16 %v4558, %v4557
    %v4569 = vpack.c.b16 %v4560, %v4559
    %v4580 = vsel %vm4054, %v4505, 0
    %4582 = vmatprep.subr.bf16.mxu0 0
    %4583 = vmatpush1.bf16.msra.mxu0 %v4561
    %4584 = vmatprep.subr.bf16.mxu0 0
    %4585 = vmatpush1.bf16.msra.mxu0 %v4562
    %4586 = vmatprep.subr.bf16.mxu0 0
    %4587 = vmatpush1.bf16.msra.mxu0 %v4563
    %4588 = vmatprep.subr.bf16.mxu0 0
    %4589 = vmatpush1.bf16.msra.mxu0 %v4564
    %4590 = vmatprep.subr.bf16.mxu0 0
    %4591 = vmatpush1.bf16.msra.mxu0 %v4565
    %4592 = vmatprep.subr.bf16.mxu0 0
    %4593 = vmatpush1.bf16.msra.mxu0 %v4566
    %4594 = vmatprep.subr.bf16.mxu0 0
    %4595 = vmatpush1.bf16.msra.mxu0 %v4567
    %4596 = vmatprep.subr.bf16.mxu0 0
    %4597 = vmatpush1.bf16.msra.mxu0 %v4568
    %4598 = vmatprep.subr.bf16.mxu0 0
    %4599 = vmatpush1.bf16.msra.mxu0 %v4569
    %4600 = vmatprep.subr.bf16.mxu0 0
    %4601 = vmatpush1.bf16.msra.mxu0 0
    %4602 = vmatprep.subr.bf16.mxu0 0
    %4603 = vmatpush1.bf16.msra.mxu0 0
    %4604 = vmatprep.subr.bf16.mxu0 0
    %4605 = vmatpush1.bf16.msra.mxu0 0
    %4606 = vmatprep.subr.bf16.mxu0 0
    %4607 = vmatpush1.bf16.msra.mxu0 0
    %4608 = vmatprep.subr.bf16.mxu0 0
    %4609 = vmatpush1.bf16.msra.mxu0 0
    %4610 = vmatprep.subr.bf16.mxu0 0
    %4611 = vmatpush1.bf16.msra.mxu0 0
    %4612 = vmatprep.subr.bf16.mxu0 0
    %4613 = vmatpush1.bf16.msra.mxu0 0
    %4614 = vmatprep.mubr.bf16.mxu0 %v4580
    %4615 = vmatmul.mubr.bf16.gmra.mrb[0].mxu0 %v4504
    %v4616 = vpop.f32.mrb[0].mxu0
    %v4617 = vadd.f32 0.0, %v4616
    %v4618 = vpop.f32.mrb[0].mxu0
    %v4619 = vpop.f32.mrb[0].mxu0
    %v4620 = vpop.f32.mrb[0].mxu0
    %4621 = vdwg.mxu0
    %v4622 = vadd.f32 %v4491, %v4617
    %v4623 = vmax.f32 %v4622, 0.0
    %v4624 = vpack.c.bf16 %v4623, %v4623
    %v4625 = vld [vmem:[%s8] sm:$0xf]
    %v4626 = vld [vmem:[%s8 + $0x4] sm:$0xf]
    %v4627 = vld [vmem:[%s8 + $0x8] sm:$0xf]
    %v4628 = vld [vmem:[%s8 + $0xc] sm:$0xf]
    %v4629 = vld [vmem:[%s8 + $0x10] sm:$0xf]
    %v4630 = vld [vmem:[%s8 + $0x14] sm:$0xf]
    %v4631 = vld [vmem:[%s8 + $0x18] sm:$0xf]
    %v4632 = vld [vmem:[%s8 + $0x1c] sm:$0xf]
    %v4633 = vld [vmem:[%s8 + $0x20] sm:$0xf]
    %v4634 = vld [vmem:[%s8 + $0x24] sm:$0xf]
    %v4635 = vld [vmem:[%s8 + $0x28] sm:$0xf]
    %v4636 = vld [vmem:[%s8 + $0x2c] sm:$0xf]
    %v4637 = vld [vmem:[%s8 + $0x30] sm:$0xf]
    %v4638 = vld [vmem:[%s8 + $0x34] sm:$0xf]
    %v4639 = vld [vmem:[%s8 + $0x38] sm:$0xf]
    %v4640 = vld [vmem:[%s9] sm:$0x1]
    %v4642 = vlaneseq
    %v4643 = vshrl.u32 %v4642, 7
    %v4644 = vsub.s32 0, %v4643
    %v4645 = vrot.slane %v4640, %v4644
    %v4662 = vunpack.c.l.b16 %v4625
    %v4663 = vunpack.c.l.b16 %v4626
    %v4664 = vunpack.c.l.b16 %v4627
    %v4665 = vunpack.c.l.b16 %v4628
    %v4666 = vunpack.c.l.b16 %v4629
    %v4667 = vunpack.c.l.b16 %v4630
    %v4668 = vunpack.c.l.b16 %v4631
    %v4669 = vunpack.c.l.b16 %v4632
    %v4670 = vunpack.c.l.b16 %v4633
    %v4671 = vunpack.c.l.b16 %v4634
    %v4672 = vunpack.c.l.b16 %v4635
    %v4673 = vunpack.c.l.b16 %v4636
    %v4674 = vunpack.c.l.b16 %v4637
    %v4675 = vunpack.c.l.b16 %v4638
    %v4676 = vunpack.c.l.b16 %v4639
    %v4677 = vpack.c.b16 %v4663, %v4662
    %v4678 = vpack.c.b16 %v4665, %v4664
    %v4679 = vpack.c.b16 %v4667, %v4666
    %v4680 = vpack.c.b16 %v4669, %v4668
    %v4681 = vpack.c.b16 %v4671, %v4670
    %v4682 = vpack.c.b16 %v4673, %v4672
    %v4683 = vpack.c.b16 %v4675, %v4674
    %v4684 = vpack.c.b16 %v4676, %v4676
    %vm4692 = vcmask 982016
    %v4694 = vsel %vm4692, %v4624, 0
    %vm4696 = vcmask 1043456
    %v4698 = vsel %vm4696, %v4684, 0
    %4700 = vmatprep.subr.bf16.mxu0 0
    %4701 = vmatpush1.bf16.msra.mxu0 %v4677
    %4702 = vmatprep.subr.bf16.mxu0 0
    %4703 = vmatpush1.bf16.msra.mxu0 %v4678
    %4704 = vmatprep.subr.bf16.mxu0 0
    %4705 = vmatpush1.bf16.msra.mxu0 %v4679
    %4706 = vmatprep.subr.bf16.mxu0 0
    %4707 = vmatpush1.bf16.msra.mxu0 %v4680
    %4708 = vmatprep.subr.bf16.mxu0 0
    %4709 = vmatpush1.bf16.msra.mxu0 %v4681
    %4710 = vmatprep.subr.bf16.mxu0 0
    %4711 = vmatpush1.bf16.msra.mxu0 %v4682
    %4712 = vmatprep.subr.bf16.mxu0 0
    %4713 = vmatpush1.bf16.msra.mxu0 %v4683
    %4714 = vmatprep.subr.bf16.mxu0 0
    %4715 = vmatpush1.bf16.msra.mxu0 %v4698
    %4716 = vmatprep.subr.bf16.mxu0 0
    %4717 = vmatpush1.bf16.msra.mxu0 0
    %4718 = vmatprep.subr.bf16.mxu0 0
    %4719 = vmatpush1.bf16.msra.mxu0 0
    %4720 = vmatprep.subr.bf16.mxu0 0
    %4721 = vmatpush1.bf16.msra.mxu0 0
    %4722 = vmatprep.subr.bf16.mxu0 0
    %4723 = vmatpush1.bf16.msra.mxu0 0
    %4724 = vmatprep.subr.bf16.mxu0 0
    %4725 = vmatpush1.bf16.msra.mxu0 0
    %4726 = vmatprep.subr.bf16.mxu0 0
    %4727 = vmatpush1.bf16.msra.mxu0 0
    %4728 = vmatprep.subr.bf16.mxu0 0
    %4729 = vmatpush1.bf16.msra.mxu0 0
    %4730 = vmatprep.subr.bf16.mxu0 0
    %4731 = vmatpush1.bf16.msra.mxu0 0
    %4732 = vmatprep.mubr.bf16.mxu0 0
    %4733 = vmatmul.mubr.bf16.gmra.mrb[0].mxu0 %v4694
    %v4734 = vpop.f32.mrb[0].mxu0
    %v4735 = vadd.f32 %v4645, %v4734
    %v4736 = vpop.f32.mrb[0].mxu0
    %v4737 = vpop.f32.mrb[0].mxu0
    %v4738 = vpop.f32.mrb[0].mxu0
    %4739 = vdwg.mxu0
    %v4740 = vmax.f32 %v4735, 0.0
    %v4741 = vpack.c.bf16 %v4740, %v4740
    %v4742 = vld [vmem:[%s10] sm:$0xf]
    %v4743 = vld [vmem:[%s10 + $0x4] sm:$0xf]
    %v4744 = vld [vmem:[%s10 + $0x8] sm:$0xf]
    %v4745 = vld [vmem:[%s10 + $0xc] sm:$0xf]
    %v4746 = vld [vmem:[%s10 + $0x10] sm:$0xf]
    %v4747 = vld [vmem:[%s10 + $0x14] sm:$0xf]
    %v4748 = vld [vmem:[%s10 + $0x18] sm:$0xf]
    %v4749 = vld [vmem:[%s10 + $0x1c] sm:$0xf]
    %v4750 = vld [vmem:[%s10 + $0x20] sm:$0xf]
    %v4751 = vld [vmem:[%s10 + $0x24] sm:$0xf]
    %v4752 = vld [vmem:[%s10 + $0x28] sm:$0x3]
    %v4753 = vld [vmem:[%s11] sm:$0x1]
    %v4755 = vlaneseq
    %v4756 = vshrl.u32 %v4755, 7
    %v4757 = vsub.s32 0, %v4756
    %v4758 = vrot.slane %v4753, %v4757
    %v4771 = vunpack.c.l.b16 %v4742
    %v4772 = vunpack.c.l.b16 %v4743
    %v4773 = vunpack.c.l.b16 %v4744
    %v4774 = vunpack.c.l.b16 %v4745
    %v4775 = vunpack.c.l.b16 %v4746
    %v4776 = vunpack.c.l.b16 %v4747
    %v4777 = vunpack.c.l.b16 %v4748
    %v4778 = vunpack.c.l.b16 %v4749
    %v4779 = vunpack.c.l.b16 %v4750
    %v4780 = vunpack.c.l.b16 %v4751
    %v4781 = vunpack.c.l.b16 %v4752
    %v4782 = vpack.c.b16 %v4772, %v4771
    %v4783 = vpack.c.b16 %v4774, %v4773
    %v4784 = vpack.c.b16 %v4776, %v4775
    %v4785 = vpack.c.b16 %v4778, %v4777
    %v4786 = vpack.c.b16 %v4780, %v4779
    %v4787 = vpack.c.b16 %v4781, %v4781
    %vm4793 = vcmask 687104
    %v4795 = vsel %vm4793, %v4741, 0
    %vm4797 = vcmask 1041408
    %v4799 = vsel %vm4797, %v4787, 0
    %4801 = vmatprep.subr.bf16.mxu0 0
    %4802 = vmatpush1.bf16.msra.mxu0 %v4782
    %4803 = vmatprep.subr.bf16.mxu0 0
    %4804 = vmatpush1.bf16.msra.mxu0 %v4783
    %4805 = vmatprep.subr.bf16.mxu0 0
    %4806 = vmatpush1.bf16.msra.mxu0 %v4784
    %4807 = vmatprep.subr.bf16.mxu0 0
    %4808 = vmatpush1.bf16.msra.mxu0 %v4785
    %4809 = vmatprep.subr.bf16.mxu0 0
    %4810 = vmatpush1.bf16.msra.mxu0 %v4786
    %4811 = vmatprep.subr.bf16.mxu0 0
    %4812 = vmatpush1.bf16.msra.mxu0 %v4799
    %4813 = vmatprep.subr.bf16.mxu0 0
    %4814 = vmatpush1.bf16.msra.mxu0 0
    %4815 = vmatprep.subr.bf16.mxu0 0
    %4816 = vmatpush1.bf16.msra.mxu0 0
    %4817 = vmatprep.subr.bf16.mxu0 0
    %4818 = vmatpush1.bf16.msra.mxu0 0
    %4819 = vmatprep.subr.bf16.mxu0 0
    %4820 = vmatpush1.bf16.msra.mxu0 0
    %4821 = vmatprep.subr.bf16.mxu0 0
    %4822 = vmatpush1.bf16.msra.mxu0 0
    %4823 = vmatprep.subr.bf16.mxu0 0
    %4824 = vmatpush1.bf16.msra.mxu0 0
    %4825 = vmatprep.subr.bf16.mxu0 0
    %4826 = vmatpush1.bf16.msra.mxu0 0
    %4827 = vmatprep.subr.bf16.mxu0 0
    %4828 = vmatpush1.bf16.msra.mxu0 0
    %4829 = vmatprep.subr.bf16.mxu0 0
    %4830 = vmatpush1.bf16.msra.mxu0 0
    %4831 = vmatprep.subr.bf16.mxu0 0
    %4832 = vmatpush1.bf16.msra.mxu0 0
    %4833 = vmatprep.mubr.bf16.mxu0 0
    %4834 = vmatmul.mubr.bf16.gmra.mrb[0].mxu0 %v4795
    %v4835 = vpop.f32.mrb[0].mxu0
    %v4836 = vadd.f32 %v4758, %v4835
    %v4837 = vpop.f32.mrb[0].mxu0
    %v4838 = vpop.f32.mrb[0].mxu0
    %v4839 = vpop.f32.mrb[0].mxu0
    %4840 = vdwg.mxu0
    %4841 = vst [vmem:[#allocation3] sm:$0x3] %v4836
    // Predicated region
    $region50: #{lenet_forward.1} parent=1 // pred_check
      _
    $region51: #{lenet_forward.1} parent=1 // pred_check_branch
      %4843 = sbr.rel (0) target = $region53
    $region52: #{lenet_forward.1} parent=1 // pred_region
      %s4845 = ssub.s32 32, 32
      %4846 = vsyncadd [#allocation4], %s4845
      %s4848 = sshll.u32 [#allocation3], 4
      %s4849 = int_to_ptr.vmem [resolvable:$true] %s4848
      %4851 = dma.vmem_to_hbm [thread:$0]  %s4849, 32, %s12, [#allocation4]
    $region53: #{lenet_forward.1} parent=1 // pred_fallthru
      _
    // Predicated region
    $region54: #{lenet_forward.1} parent=1 // pred_check
      _
    $region55: #{lenet_forward.1} parent=1 // pred_check_branch
      %4853 = sbr.rel (0) target = $region57
    $region56: #{lenet_forward.1} parent=1 // pred_region
      %4854 = dma.done [#allocation4], 32
    $region57: #{lenet_forward.1} parent=1 // pred_fallthru
      _
    %4855 = vsyncpa [#allocation4], 1

</llo_original>
